<compile_context>
chip_gen: v6e
topology: v6e:2x2x1
jax: 0.10.0
libtpu: 0.0.40
codegen_flags: <defaults>
</compile_context>

<pallas_src>
import jax
import jax.numpy as jnp
from jax.experimental import pallas as pl
from jax.experimental.pallas import tpu as pltpu

TEIM_CONFIG = dict(dim_hidden=32, dim_emb_cdr3=64, dim_emb_epi=64, dropout_rate=0.2)
BN_EPS = 1e-5

_FOLDED_ORDER = (
    "w_cdr3", "b_cdr3", "w_epi", "b_epi",
    "w_d1", "s_d1", "t_d1",
    "w_d2", "s_d2", "t_d2",
    "w_br", "s_br", "t_br",
    "w_u1", "s_u1", "t_u1",
    "w_u2", "s_u2", "t_u2",
    "w_f", "s_f", "t_f",
    "w_out", "b_out",
)


# ------------------------------ fused kernel --------------------------------

def _teim_fused_kernel(
    cdr3_ref, epi_ref, kmask_ref,
    w_cdr3_ref, b_cdr3_ref, w_epi_ref, b_epi_ref,
    w_d1_ref, s_d1_ref, t_d1_ref,
    w_d2_ref, s_d2_ref, t_d2_ref,
    w_br_ref, s_br_ref, t_br_ref,
    w_u1_ref, s_u1_ref, t_u1_ref,
    w_u2_ref, s_u2_ref, t_u2_ref,
    w_f_ref, s_f_ref, t_f_ref,
    w_out_ref, b_out_ref,
    o_ref,
):
    f32, bf16 = jnp.float32, jnp.bfloat16
    H = w_cdr3_ref.shape[1]
    TB = cdr3_ref.shape[0]

    def mm(x_bf, w_ref):
        # MXU matmul, bf16 inputs, f32 accumulation.
        return jnp.dot(x_bf, w_ref[...], preferred_element_type=f32)

    def bn_relu(y, s_ref, t_ref):
        # Folded BatchNorm (scale/shift, tiled over packed tap groups) + ReLU.
        return jnp.maximum(y * s_ref[...] + t_ref[...], 0.0)

    # --- sequence-level linears ----------------------------------------------
    cdr3_feat = mm(cdr3_ref[...], w_cdr3_ref) + b_cdr3_ref[...]       # [TB, H] f32
    epi_feat = mm(epi_ref[...], w_epi_ref) + b_epi_ref[...]           # [BK, H] f32
    cdr3_bf = cdr3_feat.astype(bf16)
    epi_bf = epi_feat.astype(bf16)

    # --- cross-sample attention (keys = all samples; padded keys masked) ------
    scores = jax.lax.dot_general(cdr3_bf, epi_bf, (((1,), (1,)), ((), ())),
                                 preferred_element_type=f32)          # [TB, BK]
    scores = scores + kmask_ref[...]
    scores = scores - jnp.max(scores, axis=-1, keepdims=True)
    probs = jnp.exp(scores)
    probs = probs * pl.reciprocal(jnp.sum(probs, axis=-1, keepdims=True),
                                  approx=True)
    attended = jnp.dot(probs.astype(bf16), epi_bf,
                       preferred_element_type=f32)                    # [TB, H]

    # --- down1: 3x3 conv (pad=1) on the 2x1 map + BN + ReLU + MaxPool ----------
    # One matmul with both spatial output rows packed along N; the ceil-clipped
    # 2x2 MaxPool over the 2x1 map is a max over the two 2H-lane halves.
    x01 = jnp.concatenate([cdr3_bf, attended.astype(bf16)], axis=-1)  # [TB, 2H]
    d1_2 = bn_relu(mm(x01, w_d1_ref), s_d1_ref, t_d1_ref)             # [TB, 4H]
    d1 = jnp.maximum(d1_2[:, :2 * H], d1_2[:, 2 * H:]).astype(bf16)   # [TB, 2H]

    # --- down2 / bridge: 1x1 maps -> only the centre 3x3 tap survives ---------
    d2 = bn_relu(mm(d1, w_d2_ref), s_d2_ref, t_d2_ref).astype(bf16)   # [TB, 4H]
    br = bn_relu(mm(d2, w_br_ref), s_br_ref, t_br_ref).astype(bf16)   # [TB, 8H]

    # --- up1: all 4 ConvTranspose(k=2,s=2) taps packed along lanes ------------
    u1 = bn_relu(mm(br, w_u1_ref), s_u1_ref, t_u1_ref).astype(bf16)   # [TB, 16H]
    # Move the 4 up1 taps from lanes to rows (128-lane-aligned slices).
    u1_rows = jnp.concatenate(
        [u1[:, t * 4 * H:(t + 1) * 4 * H] for t in range(4)], axis=0)  # [4TB, 4H]

    # --- up2: all 4 taps packed along lanes -> 16 pixels as (row grp, lane grp)
    u2 = bn_relu(mm(u1_rows, w_u2_ref), s_u2_ref, t_u2_ref).astype(bf16)  # [4TB, 8H]

    # --- final 1x1 conv on all 16 pixels at once (block-diagonal weight) ------
    fmap = bn_relu(mm(u2, w_f_ref), s_f_ref, t_f_ref)                 # [4TB, 4H]

    # --- AdaptiveMaxPool2d(1): max over the 16 (up1-tap, up2-tap) pixels ------
    m = jnp.maximum(jnp.maximum(fmap[0:TB], fmap[TB:2 * TB]),
                    jnp.maximum(fmap[2 * TB:3 * TB], fmap[3 * TB:]))  # [TB, 4H]
    pooled = jnp.maximum(jnp.maximum(m[:, :H], m[:, H:2 * H]),
                         jnp.maximum(m[:, 2 * H:3 * H], m[:, 3 * H:]))  # [TB, H]

    # --- head: Flatten + Dropout(identity) + Linear(H,1) + Sigmoid ------------
    # Emitted lane-dense as a [1, TB] row (single full-lane MXU push, unmasked
    # store) instead of a masked [TB, 1] column.
    logit = jax.lax.dot_general(w_out_ref[...], pooled,
                                (((1,), (1,)), ((), ())),
                                preferred_element_type=f32)           # [1, TB]
    o_ref[...] = jax.nn.sigmoid(logit + b_out_ref[...])


def teim_forward(folded, cdr3_emb, epi_emb, *, tile_b=128):
    """Query-tiled fused forward.  Returns {'seqlevel_out': [B, 1] f32}."""
    B, dc = cdr3_emb.shape
    de = epi_emb.shape[1]
    grid_b = pl.cdiv(B, tile_b)
    b_pad = grid_b * tile_b

    cdr3_p = jnp.pad(cdr3_emb.astype(jnp.bfloat16), ((0, b_pad - B), (0, 0)))
    epi_p = jnp.pad(epi_emb.astype(jnp.bfloat16), ((0, b_pad - B), (0, 0)))
    # Additive mask for padded key columns of the cross-sample softmax.
    kmask = jnp.where(jnp.arange(b_pad) < B, 0.0, -1e30).astype(jnp.float32)[None, :]

    def full(shape):
        return pl.BlockSpec(shape, lambda i: (0, 0))

    weights = tuple(folded[k] for k in _FOLDED_ORDER)
    out = pl.pallas_call(
        _teim_fused_kernel,
        out_shape=jax.ShapeDtypeStruct((1, b_pad), jnp.float32),
        grid=(grid_b,),
        in_specs=[
            pl.BlockSpec((tile_b, dc), lambda i: (i, 0)),   # cdr3 query tile
            full((b_pad, de)),                              # epi (full resident)
            full((1, b_pad)),                               # key mask
        ] + [full(w.shape) for w in weights],
        out_specs=pl.BlockSpec((1, tile_b), lambda i: (0, i)),
        compiler_params=pltpu.CompilerParams(
            dimension_semantics=("parallel",),   # v7x megacore splits the grid
            vmem_limit_bytes=32 * 1024 * 1024),  # raises v5e's 16 MiB default
    )(cdr3_p, epi_p, kmask, *weights)
    return {"seqlevel_out": out[0, :B, None]}


# ------------------------------ parameters ----------------------------------

def init_params(key):
    """Random parameters in PyTorch layouts (stand-ins for trained weights)."""
    H = TEIM_CONFIG["dim_hidden"]
    dc, de = TEIM_CONFIG["dim_emb_cdr3"], TEIM_CONFIG["dim_emb_epi"]
    ks = iter(jax.random.split(key, 64))

    def lin(din, dout):
        return dict(w=0.05 * jax.random.normal(next(ks), (dout, din), jnp.float32),
                    b=0.05 * jax.random.normal(next(ks), (dout,), jnp.float32))

    def bn(c):
        return dict(gamma=1.0 + 0.1 * jax.random.normal(next(ks), (c,), jnp.float32),
                    beta=0.1 * jax.random.normal(next(ks), (c,), jnp.float32),
                    mean=0.1 * jax.random.normal(next(ks), (c,), jnp.float32),
                    var=jnp.abs(1.0 + 0.1 * jax.random.normal(next(ks), (c,), jnp.float32)))

    def conv(cin, cout, k):
        return dict(w=0.05 * jax.random.normal(next(ks), (cout, cin, k, k), jnp.float32),
                    b=0.05 * jax.random.normal(next(ks), (cout,), jnp.float32),
                    bn=bn(cout))

    def convT(cin, cout):
        return dict(w=0.05 * jax.random.normal(next(ks), (cin, cout, 2, 2), jnp.float32),
                    b=0.05 * jax.random.normal(next(ks), (cout,), jnp.float32),
                    bn=bn(cout))

    return dict(
        seq_cdr3=lin(dc, H), seq_epi=lin(de, H),
        down1=conv(H, 2 * H, 3), down2=conv(2 * H, 4 * H, 3),
        bridge=conv(4 * H, 8 * H, 3),
        up1=convT(8 * H, 4 * H), up2=convT(4 * H, 2 * H),
        final=conv(2 * H, H, 1),
        out=lin(H, 1),
    )


def fold_params(p):
    """One-time prep: BN fold, spatial-tap fold, lane-packing of taps, bf16."""
    bf16 = jnp.bfloat16
    H = TEIM_CONFIG["dim_hidden"]

    def bn_fold(layer, reps=1):
        bnp = layer["bn"]
        scale = bnp["gamma"] * jax.lax.rsqrt(bnp["var"] + BN_EPS)
        shift = bnp["beta"] + (layer["b"] - bnp["mean"]) * scale
        return jnp.tile(scale, reps)[None, :], jnp.tile(shift, reps)[None, :]

    out = dict(
        w_cdr3=p["seq_cdr3"]["w"].T.astype(bf16), b_cdr3=p["seq_cdr3"]["b"][None, :],
        w_epi=p["seq_epi"]["w"].T.astype(bf16), b_epi=p["seq_epi"]["b"][None, :],
    )

    # down1: the 2x1 input map (pad=1) only sees the kw=1 column of the 3x3
    # kernel; the combined.view(B, H, 2, 1) de-interleave (channel c at spatial
    # row h is combined[:, 2c+h]) is folded into the weights and both spatial
    # output rows are packed along N -> one [2H, 2*2H] matrix.
    wd1 = p["down1"]["w"]                                    # [2H, H, 3, 3]
    taps = [wd1[:, :, kh, 1].T for kh in range(3)]           # each [H, 2H]
    a_h0 = jnp.stack([taps[1], taps[2]], axis=1).reshape(2 * H, 2 * H)
    a_h1 = jnp.stack([taps[0], taps[1]], axis=1).reshape(2 * H, 2 * H)
    out["w_d1"] = jnp.concatenate([a_h0, a_h1], axis=1).astype(bf16)   # [2H, 4H]
    out["s_d1"], out["t_d1"] = bn_fold(p["down1"], reps=2)

    # down2 / bridge: 1x1 input map with pad=1 -> only the centre tap survives.
    out["w_d2"] = p["down2"]["w"][:, :, 1, 1].T.astype(bf16)           # [2H, 4H]
    out["s_d2"], out["t_d2"] = bn_fold(p["down2"])
    out["w_br"] = p["bridge"]["w"][:, :, 1, 1].T.astype(bf16)          # [4H, 8H]
    out["s_br"], out["t_br"] = bn_fold(p["bridge"])

    # ConvTranspose2d(k=2, s=2): pack the 4 per-tap [Cin, Cout] matrices along
    # the output (lane) axis -> single lane-dense matmuls in the kernel.
    out["w_u1"] = jnp.transpose(p["up1"]["w"], (0, 2, 3, 1)).reshape(
        8 * H, 4 * 4 * H).astype(bf16)                                 # [8H, 16H]
    out["s_u1"], out["t_u1"] = bn_fold(p["up1"], reps=4)
    out["w_u2"] = jnp.transpose(p["up2"]["w"], (0, 2, 3, 1)).reshape(
        4 * H, 4 * 2 * H).astype(bf16)                                 # [4H, 8H]
    out["s_u2"], out["t_u2"] = bn_fold(p["up2"], reps=4)

    # final 1x1 conv applied to all 4 packed up2 tap groups at once via a
    # block-diagonal weight (zero blocks are negligible flops, keeps lanes
    # dense and avoids sub-128-lane regrouping in the kernel).
    wf = p["final"]["w"][:, :, 0, 0].T                                 # [2H, H]
    out["w_f"] = jax.scipy.linalg.block_diag(wf, wf, wf, wf).astype(bf16)  # [8H, 4H]
    out["s_f"], out["t_f"] = bn_fold(p["final"], reps=4)

    # head linear, kept f32, stored as a [1, H] row for a lane-dense result.
    out["w_out"] = p["out"]["w"].astype(jnp.float32)                   # [1, H]
    out["b_out"] = p["out"]["b"][None, :].astype(jnp.float32)          # [1, 1]
    return out


# ------------------------------ pure-JAX reference ---------------------------

def teim_reference(params, cdr3_emb, epi_emb):
    """f32 reference with the same inference-mode semantics (BN running stats,
    dropout identity, ceil-clipped MaxPool) implemented with real conv ops."""
    H = TEIM_CONFIG["dim_hidden"]
    B = cdr3_emb.shape[0]

    def lin(x, p):
        return x @ p["w"].T + p["b"]

    def bn_relu(x, p):                      # x: [B, C, h, w]
        b = p["bn"]
        s = (b["gamma"] / jnp.sqrt(b["var"] + BN_EPS))[None, :, None, None]
        y = (x - b["mean"][None, :, None, None]) * s + b["beta"][None, :, None, None]
        return jnp.maximum(y, 0.0)

    def conv(x, p, pad):
        y = jax.lax.conv_general_dilated(
            x, p["w"], (1, 1), ((pad, pad), (pad, pad)),
            dimension_numbers=("NCHW", "OIHW", "NCHW"))
        return y + p["b"][None, :, None, None]

    def convT(x, p):                        # ConvTranspose2d(k=2, s=2, p=0)
        bs, _, h, w = x.shape
        cout = p["w"].shape[1]
        y = jnp.einsum("bchw,cdij->bdhiwj", x, p["w"]).reshape(bs, cout, 2 * h, 2 * w)
        return y + p["b"][None, :, None, None]

    def pool_to_1x1(x):
        # MaxPool2d(2) ceil-clipped on the 2x1 / 1x1 maps produced here.
        return jnp.max(x, axis=(2, 3), keepdims=True)

    cdr3_feat = lin(cdr3_emb, params["seq_cdr3"])
    epi_feat = lin(epi_emb, params["seq_epi"])
    att = jax.nn.softmax(cdr3_feat @ epi_feat.T, axis=-1)
    attended = att @ epi_feat
    combined = jnp.concatenate([cdr3_feat, attended], axis=1)
    x = combined.reshape(B, H, 2, 1)

    d1 = pool_to_1x1(bn_relu(conv(x, params["down1"], 1), params["down1"]))
    d2 = pool_to_1x1(bn_relu(conv(d1, params["down2"], 1), params["down2"]))
    br = bn_relu(conv(d2, params["bridge"], 1), params["bridge"])
    u1 = bn_relu(convT(br, params["up1"]), params["up1"])
    u2 = bn_relu(convT(u1, params["up2"]), params["up2"])
    fm = bn_relu(conv(u2, params["final"], 0), params["final"])
    pooled = jnp.max(fm, axis=(2, 3))                             # AdaptiveMaxPool(1)+Flatten
    logit = pooled @ params["out"]["w"].T + params["out"]["b"]    # Dropout = identity
    return jax.nn.sigmoid(logit)


# ---------------------------------- main -------------------------------------

if __name__ == "__main__":
    key = jax.random.PRNGKey(0)
    kp, kc, ke = jax.random.split(key, 3)
    params = init_params(kp)
    folded = fold_params(params)        # one-time prep, outside the hot path

    B = 4
    cdr3_emb = jax.random.normal(kc, (B, TEIM_CONFIG["dim_emb_cdr3"]), jnp.float32)
    epi_emb = jax.random.normal(ke, (B, TEIM_CONFIG["dim_emb_epi"]), jnp.float32)

    fwd = jax.jit(teim_forward)
    out = fwd(folded, cdr3_emb, epi_emb)
    jax.block_until_ready(out)

    seq = out["seqlevel_out"]
    assert seq.shape == (B, 1)
    assert bool(jnp.all(jnp.isfinite(seq)))
    assert bool(jnp.all((seq >= 0.0) & (seq <= 1.0)))

    ref = teim_reference(params, cdr3_emb, epi_emb)
    max_err = float(jnp.max(jnp.abs(seq - ref)))
    assert max_err < 2e-2, f"kernel vs reference max abs err {max_err}"

    print("KERNEL_OK")
</pallas_src>

<mosaic_0001>
module attributes {stable_mosaic.version = 11 : i64} {
  func.func @_teim_fused_kernel(%arg0: i32, %arg1: memref<128x64xbf16, #tpu.memory_space<vmem>>, %arg2: memref<128x64xbf16, #tpu.memory_space<vmem>>, %arg3: memref<1x128xf32, #tpu.memory_space<vmem>>, %arg4: memref<64x32xbf16, #tpu.memory_space<vmem>>, %arg5: memref<1x32xf32, #tpu.memory_space<vmem>>, %arg6: memref<64x32xbf16, #tpu.memory_space<vmem>>, %arg7: memref<1x32xf32, #tpu.memory_space<vmem>>, %arg8: memref<64x128xbf16, #tpu.memory_space<vmem>>, %arg9: memref<1x128xf32, #tpu.memory_space<vmem>>, %arg10: memref<1x128xf32, #tpu.memory_space<vmem>>, %arg11: memref<64x128xbf16, #tpu.memory_space<vmem>>, %arg12: memref<1x128xf32, #tpu.memory_space<vmem>>, %arg13: memref<1x128xf32, #tpu.memory_space<vmem>>, %arg14: memref<128x256xbf16, #tpu.memory_space<vmem>>, %arg15: memref<1x256xf32, #tpu.memory_space<vmem>>, %arg16: memref<1x256xf32, #tpu.memory_space<vmem>>, %arg17: memref<256x512xbf16, #tpu.memory_space<vmem>>, %arg18: memref<1x512xf32, #tpu.memory_space<vmem>>, %arg19: memref<1x512xf32, #tpu.memory_space<vmem>>, %arg20: memref<128x256xbf16, #tpu.memory_space<vmem>>, %arg21: memref<1x256xf32, #tpu.memory_space<vmem>>, %arg22: memref<1x256xf32, #tpu.memory_space<vmem>>, %arg23: memref<256x128xbf16, #tpu.memory_space<vmem>>, %arg24: memref<1x128xf32, #tpu.memory_space<vmem>>, %arg25: memref<1x128xf32, #tpu.memory_space<vmem>>, %arg26: memref<1x32xf32, #tpu.memory_space<vmem>>, %arg27: memref<1x1xf32, #tpu.memory_space<vmem>>, %arg28: memref<1x128xf32, #tpu.memory_space<vmem>>) attributes {dimension_semantics = [#tpu.dimension_semantics<parallel>], iteration_bounds = array<i64: 1>, scalar_prefetch = 0 : i64, scratch_operands = 0 : i64, tpu.core_type = #tpu.core_type<tc>, window_params = [{transform_indices = @transform_0, window_bounds = array<i64: 128, 64>}, {pipeline_mode = #tpu.pipeline_mode<synchronous>, transform_indices = @transform_1, window_bounds = array<i64: 128, 64>}, {pipeline_mode = #tpu.pipeline_mode<synchronous>, transform_indices = @transform_2, window_bounds = array<i64: 1, 128>}, {pipeline_mode = #tpu.pipeline_mode<synchronous>, transform_indices = @transform_3, window_bounds = array<i64: 64, 32>}, {pipeline_mode = #tpu.pipeline_mode<synchronous>, transform_indices = @transform_4, window_bounds = array<i64: 1, 32>}, {pipeline_mode = #tpu.pipeline_mode<synchronous>, transform_indices = @transform_5, window_bounds = array<i64: 64, 32>}, {pipeline_mode = #tpu.pipeline_mode<synchronous>, transform_indices = @transform_6, window_bounds = array<i64: 1, 32>}, {pipeline_mode = #tpu.pipeline_mode<synchronous>, transform_indices = @transform_7, window_bounds = array<i64: 64, 128>}, {pipeline_mode = #tpu.pipeline_mode<synchronous>, transform_indices = @transform_8, window_bounds = array<i64: 1, 128>}, {pipeline_mode = #tpu.pipeline_mode<synchronous>, transform_indices = @transform_9, window_bounds = array<i64: 1, 128>}, {pipeline_mode = #tpu.pipeline_mode<synchronous>, transform_indices = @transform_10, window_bounds = array<i64: 64, 128>}, {pipeline_mode = #tpu.pipeline_mode<synchronous>, transform_indices = @transform_11, window_bounds = array<i64: 1, 128>}, {pipeline_mode = #tpu.pipeline_mode<synchronous>, transform_indices = @transform_12, window_bounds = array<i64: 1, 128>}, {pipeline_mode = #tpu.pipeline_mode<synchronous>, transform_indices = @transform_13, window_bounds = array<i64: 128, 256>}, {pipeline_mode = #tpu.pipeline_mode<synchronous>, transform_indices = @transform_14, window_bounds = array<i64: 1, 256>}, {pipeline_mode = #tpu.pipeline_mode<synchronous>, transform_indices = @transform_15, window_bounds = array<i64: 1, 256>}, {pipeline_mode = #tpu.pipeline_mode<synchronous>, transform_indices = @transform_16, window_bounds = array<i64: 256, 512>}, {pipeline_mode = #tpu.pipeline_mode<synchronous>, transform_indices = @transform_17, window_bounds = array<i64: 1, 512>}, {pipeline_mode = #tpu.pipeline_mode<synchronous>, transform_indices = @transform_18, window_bounds = array<i64: 1, 512>}, {pipeline_mode = #tpu.pipeline_mode<synchronous>, transform_indices = @transform_19, window_bounds = array<i64: 128, 256>}, {pipeline_mode = #tpu.pipeline_mode<synchronous>, transform_indices = @transform_20, window_bounds = array<i64: 1, 256>}, {pipeline_mode = #tpu.pipeline_mode<synchronous>, transform_indices = @transform_21, window_bounds = array<i64: 1, 256>}, {pipeline_mode = #tpu.pipeline_mode<synchronous>, transform_indices = @transform_22, window_bounds = array<i64: 256, 128>}, {pipeline_mode = #tpu.pipeline_mode<synchronous>, transform_indices = @transform_23, window_bounds = array<i64: 1, 128>}, {pipeline_mode = #tpu.pipeline_mode<synchronous>, transform_indices = @transform_24, window_bounds = array<i64: 1, 128>}, {pipeline_mode = #tpu.pipeline_mode<synchronous>, transform_indices = @transform_25, window_bounds = array<i64: 1, 32>}, {pipeline_mode = #tpu.pipeline_mode<synchronous>, transform_indices = @transform_26, window_bounds = array<i64: 1, 1>}, {transform_indices = @transform_27, window_bounds = array<i64: 1, 128>}]} {
    %c0 = arith.constant 0 : index
    %c0_0 = arith.constant 0 : index
    %0 = vector.load %arg1[%c0, %c0_0] : memref<128x64xbf16, #tpu.memory_space<vmem>>, vector<128x64xbf16>
    %c0_1 = arith.constant 0 : index
    %c0_2 = arith.constant 0 : index
    %1 = vector.load %arg4[%c0_1, %c0_2] : memref<64x32xbf16, #tpu.memory_space<vmem>>, vector<64x32xbf16>
    %cst = arith.constant dense<0.000000e+00> : vector<128x32xf32>
    %2 = tpu.matmul %0, %1, %cst {dimension_numbers = #tpu.dot_dimension_numbers<[1], [0], [0], [1], [0, 0, 1, 1], [], []>} : vector<128x64xbf16>, vector<64x32xbf16>, vector<128x32xf32> -> vector<128x32xf32>
    %c0_3 = arith.constant 0 : index
    %c0_4 = arith.constant 0 : index
    %3 = vector.load %arg5[%c0_3, %c0_4] : memref<1x32xf32, #tpu.memory_space<vmem>>, vector<1x32xf32>
    %4 = vector.broadcast %3 : vector<1x32xf32> to vector<128x32xf32>
    %5 = arith.addf %2, %4 : vector<128x32xf32>
    %c0_5 = arith.constant 0 : index
    %c0_6 = arith.constant 0 : index
    %6 = vector.load %arg2[%c0_5, %c0_6] : memref<128x64xbf16, #tpu.memory_space<vmem>>, vector<128x64xbf16>
    %c0_7 = arith.constant 0 : index
    %c0_8 = arith.constant 0 : index
    %7 = vector.load %arg6[%c0_7, %c0_8] : memref<64x32xbf16, #tpu.memory_space<vmem>>, vector<64x32xbf16>
    %cst_9 = arith.constant dense<0.000000e+00> : vector<128x32xf32>
    %8 = tpu.matmul %6, %7, %cst_9 {dimension_numbers = #tpu.dot_dimension_numbers<[1], [0], [0], [1], [0, 0, 1, 1], [], []>} : vector<128x64xbf16>, vector<64x32xbf16>, vector<128x32xf32> -> vector<128x32xf32>
    %c0_10 = arith.constant 0 : index
    %c0_11 = arith.constant 0 : index
    %9 = vector.load %arg7[%c0_10, %c0_11] : memref<1x32xf32, #tpu.memory_space<vmem>>, vector<1x32xf32>
    %10 = vector.broadcast %9 : vector<1x32xf32> to vector<128x32xf32>
    %11 = arith.addf %8, %10 : vector<128x32xf32>
    %12 = arith.truncf %5 : vector<128x32xf32> to vector<128x32xbf16>
    %13 = arith.truncf %11 : vector<128x32xf32> to vector<128x32xbf16>
    %cst_12 = arith.constant dense<0.000000e+00> : vector<128x128xf32>
    %14 = tpu.matmul %12, %13, %cst_12 {dimension_numbers = #tpu.dot_dimension_numbers<[1], [1], [0], [0], [0, 0, 1, 0], [], []>} : vector<128x32xbf16>, vector<128x32xbf16>, vector<128x128xf32> -> vector<128x128xf32>
    %c0_13 = arith.constant 0 : index
    %c0_14 = arith.constant 0 : index
    %15 = vector.load %arg3[%c0_13, %c0_14] : memref<1x128xf32, #tpu.memory_space<vmem>>, vector<1x128xf32>
    %16 = vector.broadcast %15 : vector<1x128xf32> to vector<128x128xf32>
    %17 = arith.addf %14, %16 : vector<128x128xf32>
    %cst_15 = arith.constant dense<0xFF800000> : vector<128xf32>
    %18 = vector.multi_reduction <maximumf>, %17, %cst_15 [1] : vector<128x128xf32> to vector<128xf32>
    %19 = vector.shape_cast %18 : vector<128xf32> to vector<128x1xf32>
    %20 = vector.broadcast %19 : vector<128x1xf32> to vector<128x128xf32>
    %21 = arith.subf %17, %20 : vector<128x128xf32>
    %22 = math.exp %21 : vector<128x128xf32>
    %cst_16 = arith.constant dense<0.000000e+00> : vector<128xf32>
    %23 = vector.multi_reduction <add>, %22, %cst_16 [1] : vector<128x128xf32> to vector<128xf32>
    %24 = vector.shape_cast %23 : vector<128xf32> to vector<128x1xf32>
    %25 = tpu.reciprocal %24 {approx = true} : vector<128x1xf32> -> vector<128x1xf32>
    %26 = vector.broadcast %25 : vector<128x1xf32> to vector<128x128xf32>
    %27 = arith.mulf %22, %26 : vector<128x128xf32>
    %28 = arith.truncf %27 : vector<128x128xf32> to vector<128x128xbf16>
    %cst_17 = arith.constant dense<0.000000e+00> : vector<128x32xf32>
    %29 = tpu.matmul %28, %13, %cst_17 {dimension_numbers = #tpu.dot_dimension_numbers<[1], [0], [0], [1], [0, 0, 1, 1], [], []>} : vector<128x128xbf16>, vector<128x32xbf16>, vector<128x32xf32> -> vector<128x32xf32>
    %30 = arith.truncf %29 : vector<128x32xf32> to vector<128x32xbf16>
    %31 = tpu.concatenate %12, %30 in 1 : vector<128x32xbf16>, vector<128x32xbf16> -> vector<128x64xbf16>
    %c0_18 = arith.constant 0 : index
    %c0_19 = arith.constant 0 : index
    %32 = vector.load %arg8[%c0_18, %c0_19] : memref<64x128xbf16, #tpu.memory_space<vmem>>, vector<64x128xbf16>
    %cst_20 = arith.constant dense<0.000000e+00> : vector<128x128xf32>
    %33 = tpu.matmul %31, %32, %cst_20 {dimension_numbers = #tpu.dot_dimension_numbers<[1], [0], [0], [1], [0, 0, 1, 1], [], []>} : vector<128x64xbf16>, vector<64x128xbf16>, vector<128x128xf32> -> vector<128x128xf32>
    %c0_21 = arith.constant 0 : index
    %c0_22 = arith.constant 0 : index
    %34 = vector.load %arg9[%c0_21, %c0_22] : memref<1x128xf32, #tpu.memory_space<vmem>>, vector<1x128xf32>
    %35 = vector.broadcast %34 : vector<1x128xf32> to vector<128x128xf32>
    %36 = arith.mulf %33, %35 : vector<128x128xf32>
    %c0_23 = arith.constant 0 : index
    %c0_24 = arith.constant 0 : index
    %37 = vector.load %arg10[%c0_23, %c0_24] : memref<1x128xf32, #tpu.memory_space<vmem>>, vector<1x128xf32>
    %38 = vector.broadcast %37 : vector<1x128xf32> to vector<128x128xf32>
    %39 = arith.addf %36, %38 : vector<128x128xf32>
    %cst_25 = arith.constant 0.000000e+00 : f32
    %40 = vector.broadcast %cst_25 : f32 to vector<128x128xf32>
    %41 = arith.maximumf %39, %40 : vector<128x128xf32>
    %42 = vector.extract_strided_slice %41 {offsets = [0, 0], sizes = [128, 64], strides = [1, 1]} : vector<128x128xf32> to vector<128x64xf32>
    %43 = vector.extract_strided_slice %41 {offsets = [0, 64], sizes = [128, 64], strides = [1, 1]} : vector<128x128xf32> to vector<128x64xf32>
    %44 = arith.maximumf %42, %43 : vector<128x64xf32>
    %45 = arith.truncf %44 : vector<128x64xf32> to vector<128x64xbf16>
    %c0_26 = arith.constant 0 : index
    %c0_27 = arith.constant 0 : index
    %46 = vector.load %arg11[%c0_26, %c0_27] : memref<64x128xbf16, #tpu.memory_space<vmem>>, vector<64x128xbf16>
    %cst_28 = arith.constant dense<0.000000e+00> : vector<128x128xf32>
    %47 = tpu.matmul %45, %46, %cst_28 {dimension_numbers = #tpu.dot_dimension_numbers<[1], [0], [0], [1], [0, 0, 1, 1], [], []>} : vector<128x64xbf16>, vector<64x128xbf16>, vector<128x128xf32> -> vector<128x128xf32>
    %c0_29 = arith.constant 0 : index
    %c0_30 = arith.constant 0 : index
    %48 = vector.load %arg12[%c0_29, %c0_30] : memref<1x128xf32, #tpu.memory_space<vmem>>, vector<1x128xf32>
    %49 = vector.broadcast %48 : vector<1x128xf32> to vector<128x128xf32>
    %50 = arith.mulf %47, %49 : vector<128x128xf32>
    %c0_31 = arith.constant 0 : index
    %c0_32 = arith.constant 0 : index
    %51 = vector.load %arg13[%c0_31, %c0_32] : memref<1x128xf32, #tpu.memory_space<vmem>>, vector<1x128xf32>
    %52 = vector.broadcast %51 : vector<1x128xf32> to vector<128x128xf32>
    %53 = arith.addf %50, %52 : vector<128x128xf32>
    %cst_33 = arith.constant 0.000000e+00 : f32
    %54 = vector.broadcast %cst_33 : f32 to vector<128x128xf32>
    %55 = arith.maximumf %53, %54 : vector<128x128xf32>
    %56 = arith.truncf %55 : vector<128x128xf32> to vector<128x128xbf16>
    %c0_34 = arith.constant 0 : index
    %c0_35 = arith.constant 0 : index
    %57 = vector.load %arg14[%c0_34, %c0_35] : memref<128x256xbf16, #tpu.memory_space<vmem>>, vector<128x256xbf16>
    %cst_36 = arith.constant dense<0.000000e+00> : vector<128x256xf32>
    %58 = tpu.matmul %56, %57, %cst_36 {dimension_numbers = #tpu.dot_dimension_numbers<[1], [0], [0], [1], [0, 0, 1, 1], [], []>} : vector<128x128xbf16>, vector<128x256xbf16>, vector<128x256xf32> -> vector<128x256xf32>
    %c0_37 = arith.constant 0 : index
    %c0_38 = arith.constant 0 : index
    %59 = vector.load %arg15[%c0_37, %c0_38] : memref<1x256xf32, #tpu.memory_space<vmem>>, vector<1x256xf32>
    %60 = vector.broadcast %59 : vector<1x256xf32> to vector<128x256xf32>
    %61 = arith.mulf %58, %60 : vector<128x256xf32>
    %c0_39 = arith.constant 0 : index
    %c0_40 = arith.constant 0 : index
    %62 = vector.load %arg16[%c0_39, %c0_40] : memref<1x256xf32, #tpu.memory_space<vmem>>, vector<1x256xf32>
    %63 = vector.broadcast %62 : vector<1x256xf32> to vector<128x256xf32>
    %64 = arith.addf %61, %63 : vector<128x256xf32>
    %cst_41 = arith.constant 0.000000e+00 : f32
    %65 = vector.broadcast %cst_41 : f32 to vector<128x256xf32>
    %66 = arith.maximumf %64, %65 : vector<128x256xf32>
    %67 = arith.truncf %66 : vector<128x256xf32> to vector<128x256xbf16>
    %c0_42 = arith.constant 0 : index
    %c0_43 = arith.constant 0 : index
    %68 = vector.load %arg17[%c0_42, %c0_43] : memref<256x512xbf16, #tpu.memory_space<vmem>>, vector<256x512xbf16>
    %cst_44 = arith.constant dense<0.000000e+00> : vector<128x512xf32>
    %69 = tpu.matmul %67, %68, %cst_44 {dimension_numbers = #tpu.dot_dimension_numbers<[1], [0], [0], [1], [0, 0, 1, 1], [], []>} : vector<128x256xbf16>, vector<256x512xbf16>, vector<128x512xf32> -> vector<128x512xf32>
    %c0_45 = arith.constant 0 : index
    %c0_46 = arith.constant 0 : index
    %70 = vector.load %arg18[%c0_45, %c0_46] : memref<1x512xf32, #tpu.memory_space<vmem>>, vector<1x512xf32>
    %71 = vector.broadcast %70 : vector<1x512xf32> to vector<128x512xf32>
    %72 = arith.mulf %69, %71 : vector<128x512xf32>
    %c0_47 = arith.constant 0 : index
    %c0_48 = arith.constant 0 : index
    %73 = vector.load %arg19[%c0_47, %c0_48] : memref<1x512xf32, #tpu.memory_space<vmem>>, vector<1x512xf32>
    %74 = vector.broadcast %73 : vector<1x512xf32> to vector<128x512xf32>
    %75 = arith.addf %72, %74 : vector<128x512xf32>
    %cst_49 = arith.constant 0.000000e+00 : f32
    %76 = vector.broadcast %cst_49 : f32 to vector<128x512xf32>
    %77 = arith.maximumf %75, %76 : vector<128x512xf32>
    %78 = arith.truncf %77 : vector<128x512xf32> to vector<128x512xbf16>
    %79 = vector.extract_strided_slice %78 {offsets = [0, 0], sizes = [128, 128], strides = [1, 1]} : vector<128x512xbf16> to vector<128x128xbf16>
    %80 = vector.extract_strided_slice %78 {offsets = [0, 128], sizes = [128, 128], strides = [1, 1]} : vector<128x512xbf16> to vector<128x128xbf16>
    %81 = vector.extract_strided_slice %78 {offsets = [0, 256], sizes = [128, 128], strides = [1, 1]} : vector<128x512xbf16> to vector<128x128xbf16>
    %82 = vector.extract_strided_slice %78 {offsets = [0, 384], sizes = [128, 128], strides = [1, 1]} : vector<128x512xbf16> to vector<128x128xbf16>
    %83 = tpu.concatenate %79, %80, %81, %82 in 0 : vector<128x128xbf16>, vector<128x128xbf16>, vector<128x128xbf16>, vector<128x128xbf16> -> vector<512x128xbf16>
    %c0_50 = arith.constant 0 : index
    %c0_51 = arith.constant 0 : index
    %84 = vector.load %arg20[%c0_50, %c0_51] : memref<128x256xbf16, #tpu.memory_space<vmem>>, vector<128x256xbf16>
    %cst_52 = arith.constant dense<0.000000e+00> : vector<512x256xf32>
    %85 = tpu.matmul %83, %84, %cst_52 {dimension_numbers = #tpu.dot_dimension_numbers<[1], [0], [0], [1], [0, 0, 1, 1], [], []>} : vector<512x128xbf16>, vector<128x256xbf16>, vector<512x256xf32> -> vector<512x256xf32>
    %c0_53 = arith.constant 0 : index
    %c0_54 = arith.constant 0 : index
    %86 = vector.load %arg21[%c0_53, %c0_54] : memref<1x256xf32, #tpu.memory_space<vmem>>, vector<1x256xf32>
    %87 = vector.broadcast %86 : vector<1x256xf32> to vector<512x256xf32>
    %88 = arith.mulf %85, %87 : vector<512x256xf32>
    %c0_55 = arith.constant 0 : index
    %c0_56 = arith.constant 0 : index
    %89 = vector.load %arg22[%c0_55, %c0_56] : memref<1x256xf32, #tpu.memory_space<vmem>>, vector<1x256xf32>
    %90 = vector.broadcast %89 : vector<1x256xf32> to vector<512x256xf32>
    %91 = arith.addf %88, %90 : vector<512x256xf32>
    %cst_57 = arith.constant 0.000000e+00 : f32
    %92 = vector.broadcast %cst_57 : f32 to vector<512x256xf32>
    %93 = arith.maximumf %91, %92 : vector<512x256xf32>
    %94 = arith.truncf %93 : vector<512x256xf32> to vector<512x256xbf16>
    %c0_58 = arith.constant 0 : index
    %c0_59 = arith.constant 0 : index
    %95 = vector.load %arg23[%c0_58, %c0_59] : memref<256x128xbf16, #tpu.memory_space<vmem>>, vector<256x128xbf16>
    %cst_60 = arith.constant dense<0.000000e+00> : vector<512x128xf32>
    %96 = tpu.matmul %94, %95, %cst_60 {dimension_numbers = #tpu.dot_dimension_numbers<[1], [0], [0], [1], [0, 0, 1, 1], [], []>} : vector<512x256xbf16>, vector<256x128xbf16>, vector<512x128xf32> -> vector<512x128xf32>
    %c0_61 = arith.constant 0 : index
    %c0_62 = arith.constant 0 : index
    %97 = vector.load %arg24[%c0_61, %c0_62] : memref<1x128xf32, #tpu.memory_space<vmem>>, vector<1x128xf32>
    %98 = vector.broadcast %97 : vector<1x128xf32> to vector<512x128xf32>
    %99 = arith.mulf %96, %98 : vector<512x128xf32>
    %c0_63 = arith.constant 0 : index
    %c0_64 = arith.constant 0 : index
    %100 = vector.load %arg25[%c0_63, %c0_64] : memref<1x128xf32, #tpu.memory_space<vmem>>, vector<1x128xf32>
    %101 = vector.broadcast %100 : vector<1x128xf32> to vector<512x128xf32>
    %102 = arith.addf %99, %101 : vector<512x128xf32>
    %cst_65 = arith.constant 0.000000e+00 : f32
    %103 = vector.broadcast %cst_65 : f32 to vector<512x128xf32>
    %104 = arith.maximumf %102, %103 : vector<512x128xf32>
    %105 = vector.extract_strided_slice %104 {offsets = [0, 0], sizes = [128, 128], strides = [1, 1]} : vector<512x128xf32> to vector<128x128xf32>
    %106 = vector.extract_strided_slice %104 {offsets = [128, 0], sizes = [128, 128], strides = [1, 1]} : vector<512x128xf32> to vector<128x128xf32>
    %107 = arith.maximumf %105, %106 : vector<128x128xf32>
    %108 = vector.extract_strided_slice %104 {offsets = [256, 0], sizes = [128, 128], strides = [1, 1]} : vector<512x128xf32> to vector<128x128xf32>
    %109 = vector.extract_strided_slice %104 {offsets = [384, 0], sizes = [128, 128], strides = [1, 1]} : vector<512x128xf32> to vector<128x128xf32>
    %110 = arith.maximumf %108, %109 : vector<128x128xf32>
    %111 = arith.maximumf %107, %110 : vector<128x128xf32>
    %112 = vector.extract_strided_slice %111 {offsets = [0, 0], sizes = [128, 32], strides = [1, 1]} : vector<128x128xf32> to vector<128x32xf32>
    %113 = vector.extract_strided_slice %111 {offsets = [0, 32], sizes = [128, 32], strides = [1, 1]} : vector<128x128xf32> to vector<128x32xf32>
    %114 = arith.maximumf %112, %113 : vector<128x32xf32>
    %115 = vector.extract_strided_slice %111 {offsets = [0, 64], sizes = [128, 32], strides = [1, 1]} : vector<128x128xf32> to vector<128x32xf32>
    %116 = vector.extract_strided_slice %111 {offsets = [0, 96], sizes = [128, 32], strides = [1, 1]} : vector<128x128xf32> to vector<128x32xf32>
    %117 = arith.maximumf %115, %116 : vector<128x32xf32>
    %118 = arith.maximumf %114, %117 : vector<128x32xf32>
    %c0_66 = arith.constant 0 : index
    %c0_67 = arith.constant 0 : index
    %119 = vector.load %arg26[%c0_66, %c0_67] : memref<1x32xf32, #tpu.memory_space<vmem>>, vector<1x32xf32>
    %cst_68 = arith.constant dense<0.000000e+00> : vector<1x128xf32>
    %120 = tpu.matmul %119, %118, %cst_68 {dimension_numbers = #tpu.dot_dimension_numbers<[1], [1], [0], [0], [0, 0, 1, 0], [], []>} : vector<1x32xf32>, vector<128x32xf32>, vector<1x128xf32> -> vector<1x128xf32>
    %c0_69 = arith.constant 0 : index
    %c0_70 = arith.constant 0 : index
    %121 = vector.load %arg27[%c0_69, %c0_70] : memref<1x1xf32, #tpu.memory_space<vmem>>, vector<1x1xf32>
    %122 = vector.broadcast %121 : vector<1x1xf32> to vector<1x128xf32>
    %123 = arith.addf %120, %122 : vector<1x128xf32>
    %124 = arith.negf %123 : vector<1x128xf32>
    %125 = math.exp %124 : vector<1x128xf32>
    %cst_71 = arith.constant 1.000000e+00 : f32
    %126 = vector.broadcast %cst_71 : f32 to vector<1x128xf32>
    %127 = arith.addf %126, %125 : vector<1x128xf32>
    %128 = arith.divf %126, %127 : vector<1x128xf32>
    %c0_72 = arith.constant 0 : index
    %c0_73 = arith.constant 0 : index
    %129 = vector.load %arg28[%c0_72, %c0_73] : memref<1x128xf32, #tpu.memory_space<vmem>>, vector<1x128xf32>
    tpu.vector_store %arg28[%c0_72, %c0_73], %128 {strides = array<i32>} : memref<1x128xf32, #tpu.memory_space<vmem>>, vector<1x128xf32>,
    return
  }
  func.func @transform_0(%arg0: i32) -> (i32, i32) {
    %c0_i32 = arith.constant 0 : i32
    %c0_i32_0 = arith.constant 0 : i32
    return %arg0, %c0_i32 : i32, i32
  }
  func.func @transform_1(%arg0: i32) -> (i32, i32) {
    %c0_i32 = arith.constant 0 : i32
    %c0_i32_0 = arith.constant 0 : i32
    %c0_i32_1 = arith.constant 0 : i32
    return %c0_i32, %c0_i32_0 : i32, i32
  }
  func.func @transform_2(%arg0: i32) -> (i32, i32) {
    %c0_i32 = arith.constant 0 : i32
    %c0_i32_0 = arith.constant 0 : i32
    %c0_i32_1 = arith.constant 0 : i32
    return %c0_i32, %c0_i32_0 : i32, i32
  }
  func.func @transform_3(%arg0: i32) -> (i32, i32) {
    %c0_i32 = arith.constant 0 : i32
    %c0_i32_0 = arith.constant 0 : i32
    %c0_i32_1 = arith.constant 0 : i32
    return %c0_i32, %c0_i32_0 : i32, i32
  }
  func.func @transform_4(%arg0: i32) -> (i32, i32) {
    %c0_i32 = arith.constant 0 : i32
    %c0_i32_0 = arith.constant 0 : i32
    %c0_i32_1 = arith.constant 0 : i32
    return %c0_i32, %c0_i32_0 : i32, i32
  }
  func.func @transform_5(%arg0: i32) -> (i32, i32) {
    %c0_i32 = arith.constant 0 : i32
    %c0_i32_0 = arith.constant 0 : i32
    %c0_i32_1 = arith.constant 0 : i32
    return %c0_i32, %c0_i32_0 : i32, i32
  }
  func.func @transform_6(%arg0: i32) -> (i32, i32) {
    %c0_i32 = arith.constant 0 : i32
    %c0_i32_0 = arith.constant 0 : i32
    %c0_i32_1 = arith.constant 0 : i32
    return %c0_i32, %c0_i32_0 : i32, i32
  }
  func.func @transform_7(%arg0: i32) -> (i32, i32) {
    %c0_i32 = arith.constant 0 : i32
    %c0_i32_0 = arith.constant 0 : i32
    %c0_i32_1 = arith.constant 0 : i32
    return %c0_i32, %c0_i32_0 : i32, i32
  }
  func.func @transform_8(%arg0: i32) -> (i32, i32) {
    %c0_i32 = arith.constant 0 : i32
    %c0_i32_0 = arith.constant 0 : i32
    %c0_i32_1 = arith.constant 0 : i32
    return %c0_i32, %c0_i32_0 : i32, i32
  }
  func.func @transform_9(%arg0: i32) -> (i32, i32) {
    %c0_i32 = arith.constant 0 : i32
    %c0_i32_0 = arith.constant 0 : i32
    %c0_i32_1 = arith.constant 0 : i32
    return %c0_i32, %c0_i32_0 : i32, i32
  }
  func.func @transform_10(%arg0: i32) -> (i32, i32) {
    %c0_i32 = arith.constant 0 : i32
    %c0_i32_0 = arith.constant 0 : i32
    %c0_i32_1 = arith.constant 0 : i32
    return %c0_i32, %c0_i32_0 : i32, i32
  }
  func.func @transform_11(%arg0: i32) -> (i32, i32) {
    %c0_i32 = arith.constant 0 : i32
    %c0_i32_0 = arith.constant 0 : i32
    %c0_i32_1 = arith.constant 0 : i32
    return %c0_i32, %c0_i32_0 : i32, i32
  }
  func.func @transform_12(%arg0: i32) -> (i32, i32) {
    %c0_i32 = arith.constant 0 : i32
    %c0_i32_0 = arith.constant 0 : i32
    %c0_i32_1 = arith.constant 0 : i32
    return %c0_i32, %c0_i32_0 : i32, i32
  }
  func.func @transform_13(%arg0: i32) -> (i32, i32) {
    %c0_i32 = arith.constant 0 : i32
    %c0_i32_0 = arith.constant 0 : i32
    %c0_i32_1 = arith.constant 0 : i32
    return %c0_i32, %c0_i32_0 : i32, i32
  }
  func.func @transform_14(%arg0: i32) -> (i32, i32) {
    %c0_i32 = arith.constant 0 : i32
    %c0_i32_0 = arith.constant 0 : i32
    %c0_i32_1 = arith.constant 0 : i32
    return %c0_i32, %c0_i32_0 : i32, i32
  }
  func.func @transform_15(%arg0: i32) -> (i32, i32) {
    %c0_i32 = arith.constant 0 : i32
    %c0_i32_0 = arith.constant 0 : i32
    %c0_i32_1 = arith.constant 0 : i32
    return %c0_i32, %c0_i32_0 : i32, i32
  }
  func.func @transform_16(%arg0: i32) -> (i32, i32) {
    %c0_i32 = arith.constant 0 : i32
    %c0_i32_0 = arith.constant 0 : i32
    %c0_i32_1 = arith.constant 0 : i32
    return %c0_i32, %c0_i32_0 : i32, i32
  }
  func.func @transform_17(%arg0: i32) -> (i32, i32) {
    %c0_i32 = arith.constant 0 : i32
    %c0_i32_0 = arith.constant 0 : i32
    %c0_i32_1 = arith.constant 0 : i32
    return %c0_i32, %c0_i32_0 : i32, i32
  }
  func.func @transform_18(%arg0: i32) -> (i32, i32) {
    %c0_i32 = arith.constant 0 : i32
    %c0_i32_0 = arith.constant 0 : i32
    %c0_i32_1 = arith.constant 0 : i32
    return %c0_i32, %c0_i32_0 : i32, i32
  }
  func.func @transform_19(%arg0: i32) -> (i32, i32) {
    %c0_i32 = arith.constant 0 : i32
    %c0_i32_0 = arith.constant 0 : i32
    %c0_i32_1 = arith.constant 0 : i32
    return %c0_i32, %c0_i32_0 : i32, i32
  }
  func.func @transform_20(%arg0: i32) -> (i32, i32) {
    %c0_i32 = arith.constant 0 : i32
    %c0_i32_0 = arith.constant 0 : i32
    %c0_i32_1 = arith.constant 0 : i32
    return %c0_i32, %c0_i32_0 : i32, i32
  }
  func.func @transform_21(%arg0: i32) -> (i32, i32) {
    %c0_i32 = arith.constant 0 : i32
    %c0_i32_0 = arith.constant 0 : i32
    %c0_i32_1 = arith.constant 0 : i32
    return %c0_i32, %c0_i32_0 : i32, i32
  }
  func.func @transform_22(%arg0: i32) -> (i32, i32) {
    %c0_i32 = arith.constant 0 : i32
    %c0_i32_0 = arith.constant 0 : i32
    %c0_i32_1 = arith.constant 0 : i32
    return %c0_i32, %c0_i32_0 : i32, i32
  }
  func.func @transform_23(%arg0: i32) -> (i32, i32) {
    %c0_i32 = arith.constant 0 : i32
    %c0_i32_0 = arith.constant 0 : i32
    %c0_i32_1 = arith.constant 0 : i32
    return %c0_i32, %c0_i32_0 : i32, i32
  }
  func.func @transform_24(%arg0: i32) -> (i32, i32) {
    %c0_i32 = arith.constant 0 : i32
    %c0_i32_0 = arith.constant 0 : i32
    %c0_i32_1 = arith.constant 0 : i32
    return %c0_i32, %c0_i32_0 : i32, i32
  }
  func.func @transform_25(%arg0: i32) -> (i32, i32) {
    %c0_i32 = arith.constant 0 : i32
    %c0_i32_0 = arith.constant 0 : i32
    %c0_i32_1 = arith.constant 0 : i32
    return %c0_i32, %c0_i32_0 : i32, i32
  }
  func.func @transform_26(%arg0: i32) -> (i32, i32) {
    %c0_i32 = arith.constant 0 : i32
    %c0_i32_0 = arith.constant 0 : i32
    %c0_i32_1 = arith.constant 0 : i32
    return %c0_i32, %c0_i32_0 : i32, i32
  }
  func.func @transform_27(%arg0: i32) -> (i32, i32) {
    %c0_i32 = arith.constant 0 : i32
    %c0_i32_0 = arith.constant 0 : i32
    return %c0_i32, %arg0 : i32, i32
  }
}

</mosaic_0001>

<llo_original>
// kernel: teim_forward.1
$region0: #{teim_forward.1}
  #allocation0 [shape = 'u32[]', space=smem, size = 0x4, offset = 0x4, fixed_abs, tag = 'smem constant byte address 0x4 - core index']
  #allocation1 [shape = 'u32[144,128]{1,0:T(1,128)}', space=vmem, size = 0x12000, scoped, tag = 'internal scratch']
  #allocation2 [shape = 'f32[1,1]{1,0:T(1,128)S(1)}', space=vmem, size = 0x200, scoped, tag = 'scoped memory for teim_forward.1']
  %s0 = inlined_call_operand.vmem [shape: bf16[128,64], index: 0, kind: input, shape index: {}]
  %s1 = inlined_call_operand.vmem [shape: bf16[128,64], index: 1, kind: input, shape index: {}]
  %s2 = inlined_call_operand.vmem [shape: f32[1,128], index: 2, kind: input, shape index: {}]
  %s3 = inlined_call_operand.vmem [shape: bf16[64,32], index: 3, kind: input, shape index: {}]
  %s4 = inlined_call_operand.vmem [shape: f32[1,32], index: 4, kind: input, shape index: {}]
  %s5 = inlined_call_operand.vmem [shape: bf16[64,32], index: 5, kind: input, shape index: {}]
  %s6 = inlined_call_operand.hbm [shape: f32[1,32], index: 6, kind: input, shape index: {}]
  %s7 = inlined_call_operand.hbm [shape: bf16[64,128], index: 7, kind: input, shape index: {}]
  %s8 = inlined_call_operand.hbm [shape: f32[1,128], index: 8, kind: input, shape index: {}]
  %s9 = inlined_call_operand.hbm [shape: f32[1,128], index: 9, kind: input, shape index: {}]
  %s10 = inlined_call_operand.hbm [shape: bf16[64,128], index: 10, kind: input, shape index: {}]
  %s11 = inlined_call_operand.hbm [shape: f32[1,128], index: 11, kind: input, shape index: {}]
  %s12 = inlined_call_operand.hbm [shape: f32[1,128], index: 12, kind: input, shape index: {}]
  %s13 = inlined_call_operand.vmem [shape: bf16[128,256], index: 13, kind: input, shape index: {}]
  %s14 = inlined_call_operand.hbm [shape: f32[1,256], index: 14, kind: input, shape index: {}]
  %s15 = inlined_call_operand.hbm [shape: f32[1,256], index: 15, kind: input, shape index: {}]
  %s16 = inlined_call_operand.hbm [shape: bf16[256,512], index: 16, kind: input, shape index: {}]
  %s17 = inlined_call_operand.hbm [shape: f32[1,512], index: 17, kind: input, shape index: {}]
  %s18 = inlined_call_operand.hbm [shape: f32[1,512], index: 18, kind: input, shape index: {}]
  %s19 = inlined_call_operand.vmem [shape: bf16[128,256], index: 19, kind: input, shape index: {}]
  %s20 = inlined_call_operand.hbm [shape: f32[1,256], index: 20, kind: input, shape index: {}]
  %s21 = inlined_call_operand.hbm [shape: f32[1,256], index: 21, kind: input, shape index: {}]
  %s22 = inlined_call_operand.hbm [shape: bf16[256,128], index: 22, kind: input, shape index: {}]
  %s23 = inlined_call_operand.hbm [shape: f32[1,128], index: 23, kind: input, shape index: {}]
  %s24 = inlined_call_operand.hbm [shape: f32[1,128], index: 24, kind: input, shape index: {}]
  %s25 = inlined_call_operand.hbm [shape: f32[1,32], index: 25, kind: input, shape index: {}]
  %s26 = inlined_call_operand.<no memory space> [shape: f32[1,1], index: 26, kind: input, shape index: {}]
  %s27 = inlined_call_operand.vmem [shape: f32[1,128], index: 27, kind: output, shape index: {}]
  %s28 = sld [smem:[#allocation0]]
  $region190: #{teim_forward.1} parent=0
    _
  %s30 = ssub.s32 1, %s28
  %s31 = scalar_select 0, %s30, %s28
  %v32 = vstv %s26
  %33 = vst [vmem:[#allocation2] sm:$0x1] %v32
  $region1: #{teim_forward.1} parent=0
    #allocation3 [shape = 'u8[512]{0}', space=vmem, size = 0x400, scoped, tag = 'input window, operand 6, single buffered']
    #allocation4 [shape = 's32[1]{0}', space=sflag, size = 0x4, scoped, tag = 'scoped memory for teim_forward.1']
    #allocation5 [shape = 'u8[16384]{0}', space=vmem, size = 0x4000, scoped, tag = 'input window, operand 7, single buffered']
    #allocation6 [shape = 's32[1]{0}', space=sflag, size = 0x4, scoped, tag = 'scoped memory for teim_forward.1']
    #allocation7 [shape = 'u8[512]{0}', space=vmem, size = 0x400, scoped, tag = 'input window, operand 8, single buffered']
    #allocation8 [shape = 'u8[512]{0}', space=vmem, size = 0x400, scoped, tag = 'input window, operand 9, single buffered']
    #allocation9 [shape = 's32[1]{0}', space=sflag, size = 0x4, scoped, tag = 'scoped memory for teim_forward.1']
    #allocation10 [shape = 'u8[16384]{0}', space=vmem, size = 0x4000, scoped, tag = 'input window, operand 10, single buffered']
    #allocation11 [shape = 'u8[512]{0}', space=vmem, size = 0x400, scoped, tag = 'input window, operand 11, single buffered']
    #allocation12 [shape = 's32[1]{0}', space=sflag, size = 0x4, scoped, tag = 'scoped memory for teim_forward.1']
    #allocation13 [shape = 'u8[512]{0}', space=vmem, size = 0x400, scoped, tag = 'input window, operand 12, single buffered']
    #allocation14 [shape = 'u8[1024]{0}', space=vmem, size = 0x400, scoped, tag = 'input window, operand 14, single buffered']
    #allocation15 [shape = 's32[1]{0}', space=sflag, size = 0x4, scoped, tag = 'scoped memory for teim_forward.1']
    #allocation16 [shape = 'u8[1024]{0}', space=vmem, size = 0x400, scoped, tag = 'input window, operand 15, single buffered']
    #allocation17 [shape = 'u8[262144]{0}', space=vmem, size = 0x40000, scoped, tag = 'input window, operand 16, single buffered']
    #allocation18 [shape = 's32[1]{0}', space=sflag, size = 0x4, scoped, tag = 'scoped memory for teim_forward.1']
    #allocation19 [shape = 'u8[2048]{0}', space=vmem, size = 0x800, scoped, tag = 'input window, operand 17, single buffered']
    #allocation20 [shape = 'u8[2048]{0}', space=vmem, size = 0x800, scoped, tag = 'input window, operand 18, single buffered']
    #allocation21 [shape = 's32[1]{0}', space=sflag, size = 0x4, scoped, tag = 'scoped memory for teim_forward.1']
    #allocation22 [shape = 'u8[1024]{0}', space=vmem, size = 0x400, scoped, tag = 'input window, operand 20, single buffered']
    #allocation23 [shape = 'u8[1024]{0}', space=vmem, size = 0x400, scoped, tag = 'input window, operand 21, single buffered']
    #allocation24 [shape = 's32[1]{0}', space=sflag, size = 0x4, scoped, tag = 'scoped memory for teim_forward.1']
    #allocation25 [shape = 'u8[65536]{0}', space=vmem, size = 0x10000, scoped, tag = 'input window, operand 22, single buffered']
    #allocation26 [shape = 'u8[512]{0}', space=vmem, size = 0x400, scoped, tag = 'input window, operand 23, single buffered']
    #allocation27 [shape = 's32[1]{0}', space=sflag, size = 0x4, scoped, tag = 'scoped memory for teim_forward.1']
    #allocation28 [shape = 'u8[512]{0}', space=vmem, size = 0x400, scoped, tag = 'input window, operand 24, single buffered']
    #allocation29 [shape = 'u8[512]{0}', space=vmem, size = 0x400, scoped, tag = 'input window, operand 25, single buffered']
    #allocation30 [shape = 's32[1]{0}', space=sflag, size = 0x4, scoped, tag = 'scoped memory for teim_forward.1']
    %34 = vsyncpa [#allocation4], 0
    %35 = vsyncpa [#allocation6], 0
    %36 = vsyncpa [#allocation9], 0
    %37 = vsyncpa [#allocation12], 0
    %38 = vsyncpa [#allocation15], 0
    %39 = vsyncpa [#allocation18], 0
    %40 = vsyncpa [#allocation21], 0
    %41 = vsyncpa [#allocation24], 0
    %42 = vsyncpa [#allocation27], 0
    %43 = vsyncpa [#allocation30], 0
    // Predicated region
    $region2: #{teim_forward.1} parent=1 // pred_check
      _
    $region3: #{teim_forward.1} parent=1 // pred_check_branch
      %45 = sbr.rel (0) target = $region5
    $region4: #{teim_forward.1} parent=1 // pred_region
      _
    $region5: #{teim_forward.1} parent=1 // pred_fallthru
      _
    // Predicated region
    $region6: #{teim_forward.1} parent=1 // pred_check
      _
    $region7: #{teim_forward.1} parent=1 // pred_check_branch
      %47 = sbr.rel (0) target = $region9
    $region8: #{teim_forward.1} parent=1 // pred_region
      _
    $region9: #{teim_forward.1} parent=1 // pred_fallthru
      _
    // Predicated region
    $region10: #{teim_forward.1} parent=1 // pred_check
      _
    $region11: #{teim_forward.1} parent=1 // pred_check_branch
      %49 = sbr.rel (0) target = $region13
    $region12: #{teim_forward.1} parent=1 // pred_region
      _
    $region13: #{teim_forward.1} parent=1 // pred_fallthru
      _
    // Predicated region
    $region14: #{teim_forward.1} parent=1 // pred_check
      _
    $region15: #{teim_forward.1} parent=1 // pred_check_branch
      %51 = sbr.rel (0) target = $region17
    $region16: #{teim_forward.1} parent=1 // pred_region
      _
    $region17: #{teim_forward.1} parent=1 // pred_fallthru
      _
    // Predicated region
    $region18: #{teim_forward.1} parent=1 // pred_check
      _
    $region19: #{teim_forward.1} parent=1 // pred_check_branch
      %53 = sbr.rel (0) target = $region21
    $region20: #{teim_forward.1} parent=1 // pred_region
      _
    $region21: #{teim_forward.1} parent=1 // pred_fallthru
      _
    // Predicated region
    $region22: #{teim_forward.1} parent=1 // pred_check
      _
    $region23: #{teim_forward.1} parent=1 // pred_check_branch
      %55 = sbr.rel (0) target = $region25
    $region24: #{teim_forward.1} parent=1 // pred_region
      _
    $region25: #{teim_forward.1} parent=1 // pred_fallthru
      _
    // Predicated region
    $region26: #{teim_forward.1} parent=1 // pred_check
      _
    $region27: #{teim_forward.1} parent=1 // pred_check_branch
      %57 = sbr.rel (0) target = $region29
    $region28: #{teim_forward.1} parent=1 // pred_region
      %s59 = ssub.s32 16, 16
      %60 = vsyncadd [#allocation4], %s59
      %s62 = sshll.u32 [#allocation3], 4
      %s63 = int_to_ptr.vmem [resolvable:$true] %s62
      %65 = dma.hbm_to_vmem [thread:$0]  %s6, 16, %s63, [#allocation4]
    $region29: #{teim_forward.1} parent=1 // pred_fallthru
      _
    // Predicated region
    $region30: #{teim_forward.1} parent=1 // pred_check
      _
    $region31: #{teim_forward.1} parent=1 // pred_check_branch
      %67 = sbr.rel (0) target = $region33
    $region32: #{teim_forward.1} parent=1 // pred_region
      %s69 = ssub.s32 512, 512
      %70 = vsyncadd [#allocation6], %s69
      %s71 = sshll.u32 [#allocation5], 4
      %s72 = int_to_ptr.vmem [resolvable:$true] %s71
      %77 = dma.hbm_to_vmem [thread:$0]  %s7, 512, %s72, [#allocation6], 64, 64, 4
    $region33: #{teim_forward.1} parent=1 // pred_fallthru
      _
    // Predicated region
    $region34: #{teim_forward.1} parent=1 // pred_check
      _
    $region35: #{teim_forward.1} parent=1 // pred_check_branch
      %79 = sbr.rel (0) target = $region37
    $region36: #{teim_forward.1} parent=1 // pred_region
      %s81 = ssub.s32 16, 16
      %82 = vsyncadd [#allocation6], %s81
      %s84 = sshll.u32 [#allocation7], 4
      %s85 = int_to_ptr.vmem [resolvable:$true] %s84
      %87 = dma.hbm_to_vmem [thread:$0]  %s8, 16, %s85, [#allocation6]
    $region37: #{teim_forward.1} parent=1 // pred_fallthru
      _
    // Predicated region
    $region38: #{teim_forward.1} parent=1 // pred_check
      _
    $region39: #{teim_forward.1} parent=1 // pred_check_branch
      %89 = sbr.rel (0) target = $region41
    $region40: #{teim_forward.1} parent=1 // pred_region
      %s91 = ssub.s32 16, 16
      %92 = vsyncadd [#allocation9], %s91
      %s94 = sshll.u32 [#allocation8], 4
      %s95 = int_to_ptr.vmem [resolvable:$true] %s94
      %97 = dma.hbm_to_vmem [thread:$0]  %s9, 16, %s95, [#allocation9]
    $region41: #{teim_forward.1} parent=1 // pred_fallthru
      _
    // Predicated region
    $region42: #{teim_forward.1} parent=1 // pred_check
      _
    $region43: #{teim_forward.1} parent=1 // pred_check_branch
      %99 = sbr.rel (0) target = $region45
    $region44: #{teim_forward.1} parent=1 // pred_region
      %s101 = ssub.s32 512, 512
      %102 = vsyncadd [#allocation9], %s101
      %s103 = sshll.u32 [#allocation10], 4
      %s104 = int_to_ptr.vmem [resolvable:$true] %s103
      %109 = dma.hbm_to_vmem [thread:$0]  %s10, 512, %s104, [#allocation9], 64, 64, 4
    $region45: #{teim_forward.1} parent=1 // pred_fallthru
      _
    // Predicated region
    $region46: #{teim_forward.1} parent=1 // pred_check
      _
    $region47: #{teim_forward.1} parent=1 // pred_check_branch
      %111 = sbr.rel (0) target = $region49
    $region48: #{teim_forward.1} parent=1 // pred_region
      %s113 = ssub.s32 16, 16
      %114 = vsyncadd [#allocation12], %s113
      %s116 = sshll.u32 [#allocation11], 4
      %s117 = int_to_ptr.vmem [resolvable:$true] %s116
      %119 = dma.hbm_to_vmem [thread:$0]  %s11, 16, %s117, [#allocation12]
    $region49: #{teim_forward.1} parent=1 // pred_fallthru
      _
    // Predicated region
    $region50: #{teim_forward.1} parent=1 // pred_check
      _
    $region51: #{teim_forward.1} parent=1 // pred_check_branch
      %121 = sbr.rel (0) target = $region53
    $region52: #{teim_forward.1} parent=1 // pred_region
      %s123 = ssub.s32 16, 16
      %124 = vsyncadd [#allocation12], %s123
      %s126 = sshll.u32 [#allocation13], 4
      %s127 = int_to_ptr.vmem [resolvable:$true] %s126
      %129 = dma.hbm_to_vmem [thread:$0]  %s12, 16, %s127, [#allocation12]
    $region53: #{teim_forward.1} parent=1 // pred_fallthru
      _
    // Predicated region
    $region54: #{teim_forward.1} parent=1 // pred_check
      _
    $region55: #{teim_forward.1} parent=1 // pred_check_branch
      %131 = sbr.rel (0) target = $region57
    $region56: #{teim_forward.1} parent=1 // pred_region
      _
    $region57: #{teim_forward.1} parent=1 // pred_fallthru
      _
    // Predicated region
    $region58: #{teim_forward.1} parent=1 // pred_check
      _
    $region59: #{teim_forward.1} parent=1 // pred_check_branch
      %133 = sbr.rel (0) target = $region61
    $region60: #{teim_forward.1} parent=1 // pred_region
      %s135 = ssub.s32 32, 32
      %136 = vsyncadd [#allocation15], %s135
      %s138 = sshll.u32 [#allocation14], 4
      %s139 = int_to_ptr.vmem [resolvable:$true] %s138
      %141 = dma.hbm_to_vmem [thread:$0]  %s14, 32, %s139, [#allocation15]
    $region61: #{teim_forward.1} parent=1 // pred_fallthru
      _
    // Predicated region
    $region62: #{teim_forward.1} parent=1 // pred_check
      _
    $region63: #{teim_forward.1} parent=1 // pred_check_branch
      %143 = sbr.rel (0) target = $region65
    $region64: #{teim_forward.1} parent=1 // pred_region
      %s145 = ssub.s32 32, 32
      %146 = vsyncadd [#allocation15], %s145
      %s148 = sshll.u32 [#allocation16], 4
      %s149 = int_to_ptr.vmem [resolvable:$true] %s148
      %151 = dma.hbm_to_vmem [thread:$0]  %s15, 32, %s149, [#allocation15]
    $region65: #{teim_forward.1} parent=1 // pred_fallthru
      _
    // Predicated region
    $region66: #{teim_forward.1} parent=1 // pred_check
      _
    $region67: #{teim_forward.1} parent=1 // pred_check_branch
      %153 = sbr.rel (0) target = $region69
    $region68: #{teim_forward.1} parent=1 // pred_region
      %s155 = ssub.s32 8192, 8192
      %156 = vsyncadd [#allocation18], %s155
      %s157 = sshll.u32 [#allocation17], 4
      %s158 = int_to_ptr.vmem [resolvable:$true] %s157
      %163 = dma.hbm_to_vmem [thread:$0]  %s16, 8192, %s158, [#allocation18], 256, 256, 16
    $region69: #{teim_forward.1} parent=1 // pred_fallthru
      _
    // Predicated region
    $region70: #{teim_forward.1} parent=1 // pred_check
      _
    $region71: #{teim_forward.1} parent=1 // pred_check_branch
      %165 = sbr.rel (0) target = $region73
    $region72: #{teim_forward.1} parent=1 // pred_region
      %s167 = ssub.s32 64, 64
      %168 = vsyncadd [#allocation18], %s167
      %s170 = sshll.u32 [#allocation19], 4
      %s171 = int_to_ptr.vmem [resolvable:$true] %s170
      %173 = dma.hbm_to_vmem [thread:$0]  %s17, 64, %s171, [#allocation18]
    $region73: #{teim_forward.1} parent=1 // pred_fallthru
      _
    // Predicated region
    $region74: #{teim_forward.1} parent=1 // pred_check
      _
    $region75: #{teim_forward.1} parent=1 // pred_check_branch
      %175 = sbr.rel (0) target = $region77
    $region76: #{teim_forward.1} parent=1 // pred_region
      %s177 = ssub.s32 64, 64
      %178 = vsyncadd [#allocation21], %s177
      %s180 = sshll.u32 [#allocation20], 4
      %s181 = int_to_ptr.vmem [resolvable:$true] %s180
      %183 = dma.hbm_to_vmem [thread:$0]  %s18, 64, %s181, [#allocation21]
    $region77: #{teim_forward.1} parent=1 // pred_fallthru
      _
    // Predicated region
    $region78: #{teim_forward.1} parent=1 // pred_check
      _
    $region79: #{teim_forward.1} parent=1 // pred_check_branch
      %185 = sbr.rel (0) target = $region81
    $region80: #{teim_forward.1} parent=1 // pred_region
      _
    $region81: #{teim_forward.1} parent=1 // pred_fallthru
      _
    // Predicated region
    $region82: #{teim_forward.1} parent=1 // pred_check
      _
    $region83: #{teim_forward.1} parent=1 // pred_check_branch
      %187 = sbr.rel (0) target = $region85
    $region84: #{teim_forward.1} parent=1 // pred_region
      %s189 = ssub.s32 32, 32
      %190 = vsyncadd [#allocation21], %s189
      %s192 = sshll.u32 [#allocation22], 4
      %s193 = int_to_ptr.vmem [resolvable:$true] %s192
      %195 = dma.hbm_to_vmem [thread:$0]  %s20, 32, %s193, [#allocation21]
    $region85: #{teim_forward.1} parent=1 // pred_fallthru
      _
    // Predicated region
    $region86: #{teim_forward.1} parent=1 // pred_check
      _
    $region87: #{teim_forward.1} parent=1 // pred_check_branch
      %197 = sbr.rel (0) target = $region89
    $region88: #{teim_forward.1} parent=1 // pred_region
      %s199 = ssub.s32 32, 32
      %200 = vsyncadd [#allocation24], %s199
      %s202 = sshll.u32 [#allocation23], 4
      %s203 = int_to_ptr.vmem [resolvable:$true] %s202
      %205 = dma.hbm_to_vmem [thread:$0]  %s21, 32, %s203, [#allocation24]
    $region89: #{teim_forward.1} parent=1 // pred_fallthru
      _
    // Predicated region
    $region90: #{teim_forward.1} parent=1 // pred_check
      _
    $region91: #{teim_forward.1} parent=1 // pred_check_branch
      %207 = sbr.rel (0) target = $region93
    $region92: #{teim_forward.1} parent=1 // pred_region
      %s209 = ssub.s32 2048, 2048
      %210 = vsyncadd [#allocation24], %s209
      %s211 = sshll.u32 [#allocation25], 4
      %s212 = int_to_ptr.vmem [resolvable:$true] %s211
      %217 = dma.hbm_to_vmem [thread:$0]  %s22, 2048, %s212, [#allocation24], 64, 64, 4
    $region93: #{teim_forward.1} parent=1 // pred_fallthru
      _
    // Predicated region
    $region94: #{teim_forward.1} parent=1 // pred_check
      _
    $region95: #{teim_forward.1} parent=1 // pred_check_branch
      %219 = sbr.rel (0) target = $region97
    $region96: #{teim_forward.1} parent=1 // pred_region
      %s221 = ssub.s32 16, 16
      %222 = vsyncadd [#allocation27], %s221
      %s224 = sshll.u32 [#allocation26], 4
      %s225 = int_to_ptr.vmem [resolvable:$true] %s224
      %227 = dma.hbm_to_vmem [thread:$0]  %s23, 16, %s225, [#allocation27]
    $region97: #{teim_forward.1} parent=1 // pred_fallthru
      _
    // Predicated region
    $region98: #{teim_forward.1} parent=1 // pred_check
      _
    $region99: #{teim_forward.1} parent=1 // pred_check_branch
      %229 = sbr.rel (0) target = $region101
    $region100: #{teim_forward.1} parent=1 // pred_region
      %s231 = ssub.s32 16, 16
      %232 = vsyncadd [#allocation27], %s231
      %s234 = sshll.u32 [#allocation28], 4
      %s235 = int_to_ptr.vmem [resolvable:$true] %s234
      %237 = dma.hbm_to_vmem [thread:$0]  %s24, 16, %s235, [#allocation27]
    $region101: #{teim_forward.1} parent=1 // pred_fallthru
      _
    // Predicated region
    $region102: #{teim_forward.1} parent=1 // pred_check
      _
    $region103: #{teim_forward.1} parent=1 // pred_check_branch
      %239 = sbr.rel (0) target = $region105
    $region104: #{teim_forward.1} parent=1 // pred_region
      %s241 = ssub.s32 16, 16
      %242 = vsyncadd [#allocation30], %s241
      %s244 = sshll.u32 [#allocation29], 4
      %s245 = int_to_ptr.vmem [resolvable:$true] %s244
      %247 = dma.hbm_to_vmem [thread:$0]  %s25, 16, %s245, [#allocation30]
    $region105: #{teim_forward.1} parent=1 // pred_fallthru
      _
    // Predicated region
    $region106: #{teim_forward.1} parent=1 // pred_check
      _
    $region107: #{teim_forward.1} parent=1 // pred_check_branch
      %249 = sbr.rel (0) target = $region109
    $region108: #{teim_forward.1} parent=1 // pred_region
      _
    $region109: #{teim_forward.1} parent=1 // pred_fallthru
      _
    // Predicated region
    $region110: #{teim_forward.1} parent=1 // pred_check
      _
    $region111: #{teim_forward.1} parent=1 // pred_check_branch
      %251 = sbr.rel (0) target = $region113
    $region112: #{teim_forward.1} parent=1 // pred_region
      %252 = dma.done [#allocation4], 16
    $region113: #{teim_forward.1} parent=1 // pred_fallthru
      _
    // Predicated region
    $region114: #{teim_forward.1} parent=1 // pred_check
      _
    $region115: #{teim_forward.1} parent=1 // pred_check_branch
      %254 = sbr.rel (0) target = $region117
    $region116: #{teim_forward.1} parent=1 // pred_region
      %255 = dma.done [#allocation6], 512
    $region117: #{teim_forward.1} parent=1 // pred_fallthru
      _
    // Predicated region
    $region118: #{teim_forward.1} parent=1 // pred_check
      _
    $region119: #{teim_forward.1} parent=1 // pred_check_branch
      %257 = sbr.rel (0) target = $region121
    $region120: #{teim_forward.1} parent=1 // pred_region
      %258 = dma.done [#allocation6], 16
    $region121: #{teim_forward.1} parent=1 // pred_fallthru
      _
    // Predicated region
    $region122: #{teim_forward.1} parent=1 // pred_check
      _
    $region123: #{teim_forward.1} parent=1 // pred_check_branch
      %260 = sbr.rel (0) target = $region125
    $region124: #{teim_forward.1} parent=1 // pred_region
      %261 = dma.done [#allocation9], 16
    $region125: #{teim_forward.1} parent=1 // pred_fallthru
      _
    // Predicated region
    $region126: #{teim_forward.1} parent=1 // pred_check
      _
    $region127: #{teim_forward.1} parent=1 // pred_check_branch
      %263 = sbr.rel (0) target = $region129
    $region128: #{teim_forward.1} parent=1 // pred_region
      %264 = dma.done [#allocation9], 512
    $region129: #{teim_forward.1} parent=1 // pred_fallthru
      _
    // Predicated region
    $region130: #{teim_forward.1} parent=1 // pred_check
      _
    $region131: #{teim_forward.1} parent=1 // pred_check_branch
      %266 = sbr.rel (0) target = $region133
    $region132: #{teim_forward.1} parent=1 // pred_region
      %267 = dma.done [#allocation12], 16
    $region133: #{teim_forward.1} parent=1 // pred_fallthru
      _
    // Predicated region
    $region134: #{teim_forward.1} parent=1 // pred_check
      _
    $region135: #{teim_forward.1} parent=1 // pred_check_branch
      %269 = sbr.rel (0) target = $region137
    $region136: #{teim_forward.1} parent=1 // pred_region
      %270 = dma.done [#allocation12], 16
    $region137: #{teim_forward.1} parent=1 // pred_fallthru
      _
    // Predicated region
    $region138: #{teim_forward.1} parent=1 // pred_check
      _
    $region139: #{teim_forward.1} parent=1 // pred_check_branch
      %272 = sbr.rel (0) target = $region141
    $region140: #{teim_forward.1} parent=1 // pred_region
      %273 = dma.done [#allocation15], 32
    $region141: #{teim_forward.1} parent=1 // pred_fallthru
      _
    // Predicated region
    $region142: #{teim_forward.1} parent=1 // pred_check
      _
    $region143: #{teim_forward.1} parent=1 // pred_check_branch
      %275 = sbr.rel (0) target = $region145
    $region144: #{teim_forward.1} parent=1 // pred_region
      %276 = dma.done [#allocation15], 32
    $region145: #{teim_forward.1} parent=1 // pred_fallthru
      _
    // Predicated region
    $region146: #{teim_forward.1} parent=1 // pred_check
      _
    $region147: #{teim_forward.1} parent=1 // pred_check_branch
      %278 = sbr.rel (0) target = $region149
    $region148: #{teim_forward.1} parent=1 // pred_region
      %279 = dma.done [#allocation18], 8192
    $region149: #{teim_forward.1} parent=1 // pred_fallthru
      _
    // Predicated region
    $region150: #{teim_forward.1} parent=1 // pred_check
      _
    $region151: #{teim_forward.1} parent=1 // pred_check_branch
      %281 = sbr.rel (0) target = $region153
    $region152: #{teim_forward.1} parent=1 // pred_region
      %282 = dma.done [#allocation18], 64
    $region153: #{teim_forward.1} parent=1 // pred_fallthru
      _
    // Predicated region
    $region154: #{teim_forward.1} parent=1 // pred_check
      _
    $region155: #{teim_forward.1} parent=1 // pred_check_branch
      %284 = sbr.rel (0) target = $region157
    $region156: #{teim_forward.1} parent=1 // pred_region
      %285 = dma.done [#allocation21], 64
    $region157: #{teim_forward.1} parent=1 // pred_fallthru
      _
    // Predicated region
    $region158: #{teim_forward.1} parent=1 // pred_check
      _
    $region159: #{teim_forward.1} parent=1 // pred_check_branch
      %287 = sbr.rel (0) target = $region161
    $region160: #{teim_forward.1} parent=1 // pred_region
      %288 = dma.done [#allocation21], 32
    $region161: #{teim_forward.1} parent=1 // pred_fallthru
      _
    // Predicated region
    $region162: #{teim_forward.1} parent=1 // pred_check
      _
    $region163: #{teim_forward.1} parent=1 // pred_check_branch
      %290 = sbr.rel (0) target = $region165
    $region164: #{teim_forward.1} parent=1 // pred_region
      %291 = dma.done [#allocation24], 32
    $region165: #{teim_forward.1} parent=1 // pred_fallthru
      _
    // Predicated region
    $region166: #{teim_forward.1} parent=1 // pred_check
      _
    $region167: #{teim_forward.1} parent=1 // pred_check_branch
      %293 = sbr.rel (0) target = $region169
    $region168: #{teim_forward.1} parent=1 // pred_region
      %294 = dma.done [#allocation24], 2048
    $region169: #{teim_forward.1} parent=1 // pred_fallthru
      _
    // Predicated region
    $region170: #{teim_forward.1} parent=1 // pred_check
      _
    $region171: #{teim_forward.1} parent=1 // pred_check_branch
      %296 = sbr.rel (0) target = $region173
    $region172: #{teim_forward.1} parent=1 // pred_region
      %297 = dma.done [#allocation27], 16
    $region173: #{teim_forward.1} parent=1 // pred_fallthru
      _
    // Predicated region
    $region174: #{teim_forward.1} parent=1 // pred_check
      _
    $region175: #{teim_forward.1} parent=1 // pred_check_branch
      %299 = sbr.rel (0) target = $region177
    $region176: #{teim_forward.1} parent=1 // pred_region
      %300 = dma.done [#allocation27], 16
    $region177: #{teim_forward.1} parent=1 // pred_fallthru
      _
    // Predicated region
    $region178: #{teim_forward.1} parent=1 // pred_check
      _
    $region179: #{teim_forward.1} parent=1 // pred_check_branch
      %302 = sbr.rel (0) target = $region181
    $region180: #{teim_forward.1} parent=1 // pred_region
      %303 = dma.done [#allocation30], 16
    $region181: #{teim_forward.1} parent=1 // pred_fallthru
      _
    %v305 = vld [vmem:[%s0] sm:$0xf]
    %v306 = vld [vmem:[%s0 + $0x4] sm:$0xf]
    %v307 = vld [vmem:[%s0 + $0x8] sm:$0xf]
    %v308 = vld [vmem:[%s0 + $0xc] sm:$0xf]
    %v309 = vld [vmem:[%s0 + $0x10] sm:$0xf]
    %v310 = vld [vmem:[%s0 + $0x14] sm:$0xf]
    %v311 = vld [vmem:[%s0 + $0x18] sm:$0xf]
    %v312 = vld [vmem:[%s0 + $0x1c] sm:$0xf]
    %v313 = vld [vmem:[%s0 + $0x20] sm:$0xf]
    %v314 = vld [vmem:[%s0 + $0x24] sm:$0xf]
    %v315 = vld [vmem:[%s0 + $0x28] sm:$0xf]
    %v316 = vld [vmem:[%s0 + $0x2c] sm:$0xf]
    %v317 = vld [vmem:[%s0 + $0x30] sm:$0xf]
    %v318 = vld [vmem:[%s0 + $0x34] sm:$0xf]
    %v319 = vld [vmem:[%s0 + $0x38] sm:$0xf]
    %v320 = vld [vmem:[%s0 + $0x3c] sm:$0xf]
    %v321 = vld [vmem:[%s3] sm:$0xf]
    %v322 = vld [vmem:[%s3 + $0x4] sm:$0xf]
    %v323 = vld [vmem:[%s3 + $0x8] sm:$0xf]
    %v324 = vld [vmem:[%s3 + $0xc] sm:$0xf]
    %v325 = vld [vmem:[%s3 + $0x10] sm:$0xf]
    %v326 = vld [vmem:[%s3 + $0x14] sm:$0xf]
    %v327 = vld [vmem:[%s3 + $0x18] sm:$0xf]
    %v328 = vld [vmem:[%s3 + $0x1c] sm:$0xf]
    %v329 = vld [vmem:[%s4] sm:$0x1]
    %v331 = vlaneseq
    %v332 = vshrl.u32 %v331, 7
    %v333 = vsub.s32 0, %v332
    %v334 = vrot.slane %v329, %v333
    %v352 = vunpack.c.l.b16 %v305
    %v353 = vunpack.c.l.b16 %v306
    %v354 = vunpack.c.l.b16 %v307
    %v355 = vunpack.c.l.b16 %v308
    %v356 = vunpack.c.l.b16 %v309
    %v357 = vunpack.c.l.b16 %v310
    %v358 = vunpack.c.l.b16 %v311
    %v359 = vunpack.c.l.b16 %v312
    %v360 = vunpack.c.l.b16 %v313
    %v361 = vunpack.c.l.b16 %v314
    %v362 = vunpack.c.l.b16 %v315
    %v363 = vunpack.c.l.b16 %v316
    %v364 = vunpack.c.l.b16 %v317
    %v365 = vunpack.c.l.b16 %v318
    %v366 = vunpack.c.l.b16 %v319
    %v367 = vunpack.c.l.b16 %v320
    %v368 = vpack.c.b16 %v353, %v352
    %v369 = vpack.c.b16 %v355, %v354
    %v370 = vpack.c.b16 %v357, %v356
    %v371 = vpack.c.b16 %v359, %v358
    %v372 = vpack.c.b16 %v361, %v360
    %v373 = vpack.c.b16 %v363, %v362
    %v374 = vpack.c.b16 %v365, %v364
    %v375 = vpack.c.b16 %v367, %v366
    %v384 = vunpack.c.l.b16 %v321
    %v385 = vunpack.c.l.b16 %v322
    %v386 = vunpack.c.l.b16 %v323
    %v387 = vunpack.c.l.b16 %v324
    %v388 = vunpack.c.l.b16 %v325
    %v389 = vunpack.c.l.b16 %v326
    %v390 = vunpack.c.l.b16 %v327
    %v391 = vunpack.c.l.b16 %v328
    %v392 = vpack.c.b16 %v385, %v384
    %v393 = vpack.c.b16 %v387, %v386
    %v394 = vpack.c.b16 %v389, %v388
    %v395 = vpack.c.b16 %v391, %v390
    %vm400 = vcmask 523264
    %v402 = vsel %vm400, %v368, 0
    %v405 = vsel %vm400, %v369, 0
    %v408 = vsel %vm400, %v370, 0
    %v411 = vsel %vm400, %v371, 0
    %v414 = vsel %vm400, %v372, 0
    %v417 = vsel %vm400, %v373, 0
    %v420 = vsel %vm400, %v374, 0
    %v423 = vsel %vm400, %v375, 0
    %425 = vmatprep.subr.bf16.mxu0 0
    %426 = vmatpush1.bf16.msra.mxu0 0
    %427 = vmatprep.subr.bf16.mxu0 0
    %428 = vmatpush1.bf16.msra.mxu0 0
    %429 = vmatprep.subr.bf16.mxu0 0
    %430 = vmatpush1.bf16.msra.mxu0 0
    %431 = vmatprep.subr.bf16.mxu0 0
    %432 = vmatpush1.bf16.msra.mxu0 0
    %433 = vmatprep.subr.bf16.mxu0 0
    %434 = vmatpush1.bf16.msra.mxu0 %v395
    %435 = vmatprep.subr.bf16.mxu0 0
    %436 = vmatpush1.bf16.msra.mxu0 %v394
    %437 = vmatprep.subr.bf16.mxu0 0
    %438 = vmatpush1.bf16.msra.mxu0 %v393
    %439 = vmatprep.subr.bf16.mxu0 0
    %440 = vmatpush1.bf16.msra.mxu0 %v392
    %441 = vmatprep.subr.bf16.mxu0 0
    %442 = vmatpush2.bf16.msra.mxu0 0
    %443 = vmatprep.subr.bf16.mxu0 0
    %444 = vmatpush2.bf16.msra.mxu0 0
    %445 = vmatprep.subr.bf16.mxu0 0
    %446 = vmatpush2.bf16.msra.mxu0 0
    %447 = vmatprep.subr.bf16.mxu0 0
    %448 = vmatpush2.bf16.msra.mxu0 0
    %449 = vmatprep.subr.bf16.mxu0 0
    %450 = vmatpush2.bf16.msra.mxu0 0
    %451 = vmatprep.subr.bf16.mxu0 0
    %452 = vmatpush2.bf16.msra.mxu0 0
    %453 = vmatprep.subr.bf16.mxu0 0
    %454 = vmatpush2.bf16.msra.mxu0 0
    %455 = vmatprep.subr.bf16.mxu0 0
    %456 = vmatpush2.bf16.msra.mxu0 0
    %457 = vmatprep.mubr.bf16.mxu0 0
    %458 = vmatmul.mubr.bf16.gmra.mxu0 %v402
    %v459 = vpop.f32.mrf.mxu0
    %v460 = vadd.f32 %v334, %v459
    %v461 = vpop.f32.mrf.mxu0
    %v462 = vpop.f32.mrf.mxu0
    %v463 = vadd.f32 %v334, %v462
    %v464 = vpop.f32.mrf.mxu0
    %465 = vmatprep.mubr.bf16.mxu0 0
    %466 = vmatmul.mubr.bf16.gmra.mxu0 %v405
    %v467 = vpop.f32.mrf.mxu0
    %v468 = vadd.f32 %v334, %v467
    %v469 = vpop.f32.mrf.mxu0
    %v470 = vpop.f32.mrf.mxu0
    %v471 = vadd.f32 %v334, %v470
    %v472 = vpop.f32.mrf.mxu0
    %473 = vmatprep.mubr.bf16.mxu0 0
    %474 = vmatmul.mubr.bf16.gmra.mxu0 %v408
    %v475 = vpop.f32.mrf.mxu0
    %v476 = vadd.f32 %v334, %v475
    %v477 = vpop.f32.mrf.mxu0
    %v478 = vpop.f32.mrf.mxu0
    %v479 = vadd.f32 %v334, %v478
    %v480 = vpop.f32.mrf.mxu0
    %481 = vmatprep.mubr.bf16.mxu0 0
    %482 = vmatmul.mubr.bf16.gmra.mxu0 %v411
    %v483 = vpop.f32.mrf.mxu0
    %v484 = vadd.f32 %v334, %v483
    %v485 = vpop.f32.mrf.mxu0
    %v486 = vpop.f32.mrf.mxu0
    %v487 = vadd.f32 %v334, %v486
    %v488 = vpop.f32.mrf.mxu0
    %489 = vmatprep.mubr.bf16.mxu0 0
    %490 = vmatmul.mubr.bf16.gmra.mxu0 %v414
    %v491 = vpop.f32.mrf.mxu0
    %v492 = vadd.f32 %v334, %v491
    %v493 = vpop.f32.mrf.mxu0
    %v494 = vpop.f32.mrf.mxu0
    %v495 = vadd.f32 %v334, %v494
    %v496 = vpop.f32.mrf.mxu0
    %497 = vmatprep.mubr.bf16.mxu0 0
    %498 = vmatmul.mubr.bf16.gmra.mxu0 %v417
    %v499 = vpop.f32.mrf.mxu0
    %v500 = vadd.f32 %v334, %v499
    %v501 = vpop.f32.mrf.mxu0
    %v502 = vpop.f32.mrf.mxu0
    %v503 = vadd.f32 %v334, %v502
    %v504 = vpop.f32.mrf.mxu0
    %505 = vmatprep.mubr.bf16.mxu0 0
    %506 = vmatmul.mubr.bf16.gmra.mxu0 %v420
    %v507 = vpop.f32.mrf.mxu0
    %v508 = vadd.f32 %v334, %v507
    %v509 = vpop.f32.mrf.mxu0
    %v510 = vpop.f32.mrf.mxu0
    %v511 = vadd.f32 %v334, %v510
    %v512 = vpop.f32.mrf.mxu0
    %513 = vmatprep.mubr.bf16.mxu0 0
    %514 = vmatmul.mubr.bf16.gmra.mxu0 %v423
    %v515 = vpop.f32.mrf.mxu0
    %v516 = vadd.f32 %v334, %v515
    %v517 = vpop.f32.mrf.mxu0
    %v518 = vpop.f32.mrf.mxu0
    %v519 = vadd.f32 %v334, %v518
    %v520 = vpop.f32.mrf.mxu0
    %521 = vdwg.mxu0
    %v522 = vld [vmem:[%s1] sm:$0xf]
    %v523 = vld [vmem:[%s1 + $0x4] sm:$0xf]
    %v524 = vld [vmem:[%s1 + $0x8] sm:$0xf]
    %v525 = vld [vmem:[%s1 + $0xc] sm:$0xf]
    %v526 = vld [vmem:[%s1 + $0x10] sm:$0xf]
    %v527 = vld [vmem:[%s1 + $0x14] sm:$0xf]
    %v528 = vld [vmem:[%s1 + $0x18] sm:$0xf]
    %v529 = vld [vmem:[%s1 + $0x1c] sm:$0xf]
    %v530 = vld [vmem:[%s1 + $0x20] sm:$0xf]
    %v531 = vld [vmem:[%s1 + $0x24] sm:$0xf]
    %v532 = vld [vmem:[%s1 + $0x28] sm:$0xf]
    %v533 = vld [vmem:[%s1 + $0x2c] sm:$0xf]
    %v534 = vld [vmem:[%s1 + $0x30] sm:$0xf]
    %v535 = vld [vmem:[%s1 + $0x34] sm:$0xf]
    %v536 = vld [vmem:[%s1 + $0x38] sm:$0xf]
    %v537 = vld [vmem:[%s1 + $0x3c] sm:$0xf]
    %v538 = vld [vmem:[%s5] sm:$0xf]
    %v539 = vld [vmem:[%s5 + $0x4] sm:$0xf]
    %v540 = vld [vmem:[%s5 + $0x8] sm:$0xf]
    %v541 = vld [vmem:[%s5 + $0xc] sm:$0xf]
    %v542 = vld [vmem:[%s5 + $0x10] sm:$0xf]
    %v543 = vld [vmem:[%s5 + $0x14] sm:$0xf]
    %v544 = vld [vmem:[%s5 + $0x18] sm:$0xf]
    %v545 = vld [vmem:[%s5 + $0x1c] sm:$0xf]
    %v546 = vld [vmem:[#allocation3] sm:$0x1]
    %v548 = vlaneseq
    %v549 = vshrl.u32 %v548, 7
    %v550 = vsub.s32 0, %v549
    %v551 = vrot.slane %v546, %v550
    %v569 = vunpack.c.l.b16 %v522
    %v570 = vunpack.c.l.b16 %v523
    %v571 = vunpack.c.l.b16 %v524
    %v572 = vunpack.c.l.b16 %v525
    %v573 = vunpack.c.l.b16 %v526
    %v574 = vunpack.c.l.b16 %v527
    %v575 = vunpack.c.l.b16 %v528
    %v576 = vunpack.c.l.b16 %v529
    %v577 = vunpack.c.l.b16 %v530
    %v578 = vunpack.c.l.b16 %v531
    %v579 = vunpack.c.l.b16 %v532
    %v580 = vunpack.c.l.b16 %v533
    %v581 = vunpack.c.l.b16 %v534
    %v582 = vunpack.c.l.b16 %v535
    %v583 = vunpack.c.l.b16 %v536
    %v584 = vunpack.c.l.b16 %v537
    %v585 = vpack.c.b16 %v570, %v569
    %v586 = vpack.c.b16 %v572, %v571
    %v587 = vpack.c.b16 %v574, %v573
    %v588 = vpack.c.b16 %v576, %v575
    %v589 = vpack.c.b16 %v578, %v577
    %v590 = vpack.c.b16 %v580, %v579
    %v591 = vpack.c.b16 %v582, %v581
    %v592 = vpack.c.b16 %v584, %v583
    %v601 = vunpack.c.l.b16 %v538
    %v602 = vunpack.c.l.b16 %v539
    %v603 = vunpack.c.l.b16 %v540
    %v604 = vunpack.c.l.b16 %v541
    %v605 = vunpack.c.l.b16 %v542
    %v606 = vunpack.c.l.b16 %v543
    %v607 = vunpack.c.l.b16 %v544
    %v608 = vunpack.c.l.b16 %v545
    %v609 = vpack.c.b16 %v602, %v601
    %v610 = vpack.c.b16 %v604, %v603
    %v611 = vpack.c.b16 %v606, %v605
    %v612 = vpack.c.b16 %v608, %v607
    %v618 = vsel %vm400, %v585, 0
    %v621 = vsel %vm400, %v586, 0
    %v624 = vsel %vm400, %v587, 0
    %v627 = vsel %vm400, %v588, 0
    %v630 = vsel %vm400, %v589, 0
    %v633 = vsel %vm400, %v590, 0
    %v636 = vsel %vm400, %v591, 0
    %v639 = vsel %vm400, %v592, 0
    %641 = vmatprep.subr.bf16.mxu0 0
    %642 = vmatpush1.bf16.msra.mxu0 0
    %643 = vmatprep.subr.bf16.mxu0 0
    %644 = vmatpush1.bf16.msra.mxu0 0
    %645 = vmatprep.subr.bf16.mxu0 0
    %646 = vmatpush1.bf16.msra.mxu0 0
    %647 = vmatprep.subr.bf16.mxu0 0
    %648 = vmatpush1.bf16.msra.mxu0 0
    %649 = vmatprep.subr.bf16.mxu0 0
    %650 = vmatpush1.bf16.msra.mxu0 %v612
    %651 = vmatprep.subr.bf16.mxu0 0
    %652 = vmatpush1.bf16.msra.mxu0 %v611
    %653 = vmatprep.subr.bf16.mxu0 0
    %654 = vmatpush1.bf16.msra.mxu0 %v610
    %655 = vmatprep.subr.bf16.mxu0 0
    %656 = vmatpush1.bf16.msra.mxu0 %v609
    %657 = vmatprep.subr.bf16.mxu0 0
    %658 = vmatpush2.bf16.msra.mxu0 0
    %659 = vmatprep.subr.bf16.mxu0 0
    %660 = vmatpush2.bf16.msra.mxu0 0
    %661 = vmatprep.subr.bf16.mxu0 0
    %662 = vmatpush2.bf16.msra.mxu0 0
    %663 = vmatprep.subr.bf16.mxu0 0
    %664 = vmatpush2.bf16.msra.mxu0 0
    %665 = vmatprep.subr.bf16.mxu0 0
    %666 = vmatpush2.bf16.msra.mxu0 0
    %667 = vmatprep.subr.bf16.mxu0 0
    %668 = vmatpush2.bf16.msra.mxu0 0
    %669 = vmatprep.subr.bf16.mxu0 0
    %670 = vmatpush2.bf16.msra.mxu0 0
    %671 = vmatprep.subr.bf16.mxu0 0
    %672 = vmatpush2.bf16.msra.mxu0 0
    %673 = vmatprep.mubr.bf16.mxu0 0
    %674 = vmatmul.mubr.bf16.gmra.mxu0 %v618
    %v675 = vpop.f32.mrf.mxu0
    %v676 = vadd.f32 %v551, %v675
    %v677 = vpop.f32.mrf.mxu0
    %v678 = vpop.f32.mrf.mxu0
    %v679 = vadd.f32 %v551, %v678
    %v680 = vpop.f32.mrf.mxu0
    %681 = vmatprep.mubr.bf16.mxu0 0
    %682 = vmatmul.mubr.bf16.gmra.mxu0 %v621
    %v683 = vpop.f32.mrf.mxu0
    %v684 = vadd.f32 %v551, %v683
    %v685 = vpop.f32.mrf.mxu0
    %v686 = vpop.f32.mrf.mxu0
    %v687 = vadd.f32 %v551, %v686
    %v688 = vpop.f32.mrf.mxu0
    %689 = vmatprep.mubr.bf16.mxu0 0
    %690 = vmatmul.mubr.bf16.gmra.mxu0 %v624
    %v691 = vpop.f32.mrf.mxu0
    %v692 = vadd.f32 %v551, %v691
    %v693 = vpop.f32.mrf.mxu0
    %v694 = vpop.f32.mrf.mxu0
    %v695 = vadd.f32 %v551, %v694
    %v696 = vpop.f32.mrf.mxu0
    %697 = vmatprep.mubr.bf16.mxu0 0
    %698 = vmatmul.mubr.bf16.gmra.mxu0 %v627
    %v699 = vpop.f32.mrf.mxu0
    %v700 = vadd.f32 %v551, %v699
    %v701 = vpop.f32.mrf.mxu0
    %v702 = vpop.f32.mrf.mxu0
    %v703 = vadd.f32 %v551, %v702
    %v704 = vpop.f32.mrf.mxu0
    %705 = vmatprep.mubr.bf16.mxu0 0
    %706 = vmatmul.mubr.bf16.gmra.mxu0 %v630
    %v707 = vpop.f32.mrf.mxu0
    %v708 = vadd.f32 %v551, %v707
    %v709 = vpop.f32.mrf.mxu0
    %v710 = vpop.f32.mrf.mxu0
    %v711 = vadd.f32 %v551, %v710
    %v712 = vpop.f32.mrf.mxu0
    %713 = vmatprep.mubr.bf16.mxu0 0
    %714 = vmatmul.mubr.bf16.gmra.mxu0 %v633
    %v715 = vpop.f32.mrf.mxu0
    %v716 = vadd.f32 %v551, %v715
    %v717 = vpop.f32.mrf.mxu0
    %v718 = vpop.f32.mrf.mxu0
    %v719 = vadd.f32 %v551, %v718
    %v720 = vpop.f32.mrf.mxu0
    %721 = vmatprep.mubr.bf16.mxu0 0
    %722 = vmatmul.mubr.bf16.gmra.mxu0 %v636
    %v723 = vpop.f32.mrf.mxu0
    %v724 = vadd.f32 %v551, %v723
    %v725 = vpop.f32.mrf.mxu0
    %v726 = vpop.f32.mrf.mxu0
    %v727 = vadd.f32 %v551, %v726
    %v728 = vpop.f32.mrf.mxu0
    %729 = vmatprep.mubr.bf16.mxu0 0
    %730 = vmatmul.mubr.bf16.gmra.mxu0 %v639
    %v731 = vpop.f32.mrf.mxu0
    %v732 = vadd.f32 %v551, %v731
    %v733 = vpop.f32.mrf.mxu0
    %v734 = vpop.f32.mrf.mxu0
    %v735 = vadd.f32 %v551, %v734
    %v736 = vpop.f32.mrf.mxu0
    %737 = vdwg.mxu0
    %v738 = vpack.c.bf16 %v463, %v460
    %v739 = vpack.c.bf16 %v471, %v468
    %v740 = vpack.c.bf16 %v479, %v476
    %v741 = vpack.c.bf16 %v487, %v484
    %v742 = vpack.c.bf16 %v495, %v492
    %v743 = vpack.c.bf16 %v503, %v500
    %v744 = vpack.c.bf16 %v511, %v508
    %v745 = vpack.c.bf16 %v519, %v516
    %v746 = vpack.c.bf16 %v679, %v676
    %v747 = vpack.c.bf16 %v687, %v684
    %v748 = vpack.c.bf16 %v695, %v692
    %v749 = vpack.c.bf16 %v703, %v700
    %v750 = vpack.c.bf16 %v711, %v708
    %v751 = vpack.c.bf16 %v719, %v716
    %v752 = vpack.c.bf16 %v727, %v724
    %v753 = vpack.c.bf16 %v735, %v732
    %v754 = vld [vmem:[%s2] sm:$0x1]
    %v756 = vlaneseq
    %v757 = vshrl.u32 %v756, 7
    %v758 = vsub.s32 0, %v757
    %v759 = vrot.slane %v754, %v758
    %vm761 = vcmask 261120
    %v763 = vsel %vm761, %v738, 0
    %v766 = vsel %vm761, %v739, 0
    %v769 = vsel %vm761, %v740, 0
    %v772 = vsel %vm761, %v741, 0
    %v775 = vsel %vm761, %v742, 0
    %v778 = vsel %vm761, %v743, 0
    %v781 = vsel %vm761, %v744, 0
    %v784 = vsel %vm761, %v745, 0
    %v787 = vsel %vm761, %v746, 0
    %v790 = vsel %vm761, %v747, 0
    %v793 = vsel %vm761, %v748, 0
    %v796 = vsel %vm761, %v749, 0
    %v799 = vsel %vm761, %v750, 0
    %v802 = vsel %vm761, %v751, 0
    %v805 = vsel %vm761, %v752, 0
    %v808 = vsel %vm761, %v753, 0
    %810 = vmatprep.subr.bf16.mxu0 0
    %811 = vmatpush1.bf16.xpose.msra.mxu0 %v808
    %812 = vmatprep.subr.bf16.mxu0 0
    %813 = vmatpush1.bf16.xpose.msra.mxu0 %v805
    %814 = vmatprep.subr.bf16.mxu0 0
    %815 = vmatpush1.bf16.xpose.msra.mxu0 %v802
    %816 = vmatprep.subr.bf16.mxu0 0
    %817 = vmatpush1.bf16.xpose.msra.mxu0 %v799
    %818 = vmatprep.subr.bf16.mxu0 0
    %819 = vmatpush1.bf16.xpose.msra.mxu0 %v796
    %820 = vmatprep.subr.bf16.mxu0 0
    %821 = vmatpush1.bf16.xpose.msra.mxu0 %v793
    %822 = vmatprep.subr.bf16.mxu0 0
    %823 = vmatpush1.bf16.xpose.msra.mxu0 %v790
    %824 = vmatprep.subr.bf16.mxu0 0
    %825 = vmatpush1.bf16.xpose.msra.mxu0 %v787
    %826 = vmatprep.subr.bf16.mxu0 0
    %827 = vmatpush2.bf16.xpose.msra.mxu0 0
    %828 = vmatprep.subr.bf16.mxu0 0
    %829 = vmatpush2.bf16.xpose.msra.mxu0 0
    %830 = vmatprep.subr.bf16.mxu0 0
    %831 = vmatpush2.bf16.xpose.msra.mxu0 0
    %832 = vmatprep.subr.bf16.mxu0 0
    %833 = vmatpush2.bf16.xpose.msra.mxu0 0
    %834 = vmatprep.subr.bf16.mxu0 0
    %835 = vmatpush2.bf16.xpose.msra.mxu0 0
    %836 = vmatprep.subr.bf16.mxu0 0
    %837 = vmatpush2.bf16.xpose.msra.mxu0 0
    %838 = vmatprep.subr.bf16.mxu0 0
    %839 = vmatpush2.bf16.xpose.msra.mxu0 0
    %840 = vmatprep.subr.bf16.mxu0 0
    %841 = vmatpush2.bf16.xpose.msra.mxu0 0
    %842 = vmatprep.mubr.bf16.mxu0 0
    %843 = vmatmul.mubr.bf16.gmra.mxu0 %v763
    %v844 = vpop.f32.mrf.mxu0
    %v845 = vadd.f32 %v759, %v844
    %v846 = vpop.f32.mrf.mxu0
    %v847 = vpop.f32.mrf.mxu0
    %v848 = vadd.f32 %v759, %v847
    %v849 = vpop.f32.mrf.mxu0
    %850 = vmatprep.mubr.bf16.mxu0 0
    %851 = vmatmul.mubr.bf16.gmra.mxu0 %v766
    %v852 = vpop.f32.mrf.mxu0
    %v853 = vadd.f32 %v759, %v852
    %v854 = vpop.f32.mrf.mxu0
    %v855 = vpop.f32.mrf.mxu0
    %v856 = vadd.f32 %v759, %v855
    %v857 = vpop.f32.mrf.mxu0
    %858 = vmatprep.mubr.bf16.mxu0 0
    %859 = vmatmul.mubr.bf16.gmra.mxu0 %v769
    %v860 = vpop.f32.mrf.mxu0
    %v861 = vadd.f32 %v759, %v860
    %v862 = vpop.f32.mrf.mxu0
    %v863 = vpop.f32.mrf.mxu0
    %v864 = vadd.f32 %v759, %v863
    %v865 = vpop.f32.mrf.mxu0
    %866 = vmatprep.mubr.bf16.mxu0 0
    %867 = vmatmul.mubr.bf16.gmra.mxu0 %v772
    %v868 = vpop.f32.mrf.mxu0
    %v869 = vadd.f32 %v759, %v868
    %v870 = vpop.f32.mrf.mxu0
    %v871 = vpop.f32.mrf.mxu0
    %v872 = vadd.f32 %v759, %v871
    %v873 = vpop.f32.mrf.mxu0
    %874 = vmatprep.mubr.bf16.mxu0 0
    %875 = vmatmul.mubr.bf16.gmra.mxu0 %v775
    %v876 = vpop.f32.mrf.mxu0
    %v877 = vadd.f32 %v759, %v876
    %v878 = vpop.f32.mrf.mxu0
    %v879 = vpop.f32.mrf.mxu0
    %v880 = vadd.f32 %v759, %v879
    %v881 = vpop.f32.mrf.mxu0
    %882 = vmatprep.mubr.bf16.mxu0 0
    %883 = vmatmul.mubr.bf16.gmra.mxu0 %v778
    %v884 = vpop.f32.mrf.mxu0
    %v885 = vadd.f32 %v759, %v884
    %v886 = vpop.f32.mrf.mxu0
    %v887 = vpop.f32.mrf.mxu0
    %v888 = vadd.f32 %v759, %v887
    %v889 = vpop.f32.mrf.mxu0
    %890 = vmatprep.mubr.bf16.mxu0 0
    %891 = vmatmul.mubr.bf16.gmra.mxu0 %v781
    %v892 = vpop.f32.mrf.mxu0
    %v893 = vadd.f32 %v759, %v892
    %v894 = vpop.f32.mrf.mxu0
    %v895 = vpop.f32.mrf.mxu0
    %v896 = vadd.f32 %v759, %v895
    %v897 = vpop.f32.mrf.mxu0
    %898 = vmatprep.mubr.bf16.mxu0 0
    %899 = vmatmul.mubr.bf16.gmra.mxu0 %v784
    %v900 = vpop.f32.mrf.mxu0
    %v901 = vadd.f32 %v759, %v900
    %v902 = vpop.f32.mrf.mxu0
    %v903 = vpop.f32.mrf.mxu0
    %v904 = vadd.f32 %v759, %v903
    %v905 = vpop.f32.mrf.mxu0
    %906 = vdwg.mxu0
    %907 = vmax.xlane.f32.xlu0 %v845
    %v908 = vpop.xlane.xlu0 %907
    %909 = vmax.xlane.f32.xlu0 %v848
    %v910 = vpop.xlane.xlu0 %909
    %911 = vmax.xlane.f32.xlu0 %v853
    %v912 = vpop.xlane.xlu0 %911
    %913 = vmax.xlane.f32.xlu0 %v856
    %v914 = vpop.xlane.xlu0 %913
    %915 = vmax.xlane.f32.xlu0 %v861
    %v916 = vpop.xlane.xlu0 %915
    %917 = vmax.xlane.f32.xlu0 %v864
    %v918 = vpop.xlane.xlu0 %917
    %919 = vmax.xlane.f32.xlu0 %v869
    %v920 = vpop.xlane.xlu0 %919
    %921 = vmax.xlane.f32.xlu0 %v872
    %v922 = vpop.xlane.xlu0 %921
    %923 = vmax.xlane.f32.xlu0 %v877
    %v924 = vpop.xlane.xlu0 %923
    %925 = vmax.xlane.f32.xlu0 %v880
    %v926 = vpop.xlane.xlu0 %925
    %927 = vmax.xlane.f32.xlu0 %v885
    %v928 = vpop.xlane.xlu0 %927
    %929 = vmax.xlane.f32.xlu0 %v888
    %v930 = vpop.xlane.xlu0 %929
    %931 = vmax.xlane.f32.xlu0 %v893
    %v932 = vpop.xlane.xlu0 %931
    %933 = vmax.xlane.f32.xlu0 %v896
    %v934 = vpop.xlane.xlu0 %933
    %935 = vmax.xlane.f32.xlu0 %v901
    %v936 = vpop.xlane.xlu0 %935
    %937 = vmax.xlane.f32.xlu0 %v904
    %v938 = vpop.xlane.xlu0 %937
    %v939 = vsub.f32 %v845, %v908
    %v940 = vsub.f32 %v848, %v910
    %v941 = vsub.f32 %v853, %v912
    %v942 = vsub.f32 %v856, %v914
    %v943 = vsub.f32 %v861, %v916
    %v944 = vsub.f32 %v864, %v918
    %v945 = vsub.f32 %v869, %v920
    %v946 = vsub.f32 %v872, %v922
    %v947 = vsub.f32 %v877, %v924
    %v948 = vsub.f32 %v880, %v926
    %v949 = vsub.f32 %v885, %v928
    %v950 = vsub.f32 %v888, %v930
    %v951 = vsub.f32 %v893, %v932
    %v952 = vsub.f32 %v896, %v934
    %v953 = vsub.f32 %v901, %v936
    %v954 = vsub.f32 %v904, %v938
    %v955 = vmul.f32 %v939, 1.442695
    %v956 = vpow.pop %v955
    %v957 = vmul.f32 %v940, 1.442695
    %v958 = vpow.pop %v957
    %v959 = vmul.f32 %v941, 1.442695
    %v960 = vpow.pop %v959
    %v961 = vmul.f32 %v942, 1.442695
    %v962 = vpow.pop %v961
    %v963 = vmul.f32 %v943, 1.442695
    %v964 = vpow.pop %v963
    %v965 = vmul.f32 %v944, 1.442695
    %v966 = vpow.pop %v965
    %v967 = vmul.f32 %v945, 1.442695
    %v968 = vpow.pop %v967
    %v969 = vmul.f32 %v946, 1.442695
    %v970 = vpow.pop %v969
    %v971 = vmul.f32 %v947, 1.442695
    %v972 = vpow.pop %v971
    %v973 = vmul.f32 %v948, 1.442695
    %v974 = vpow.pop %v973
    %v975 = vmul.f32 %v949, 1.442695
    %v976 = vpow.pop %v975
    %v977 = vmul.f32 %v950, 1.442695
    %v978 = vpow.pop %v977
    %v979 = vmul.f32 %v951, 1.442695
    %v980 = vpow.pop %v979
    %v981 = vmul.f32 %v952, 1.442695
    %v982 = vpow.pop %v981
    %v983 = vmul.f32 %v953, 1.442695
    %v984 = vpow.pop %v983
    %v985 = vmul.f32 %v954, 1.442695
    %v986 = vpow.pop %v985
    %987 = vadd.xlane.f32.xlu0 %v956
    %v988 = vpop.xlane.xlu0 %987
    %989 = vadd.xlane.f32.xlu0 %v958
    %v990 = vpop.xlane.xlu0 %989
    %991 = vadd.xlane.f32.xlu0 %v960
    %v992 = vpop.xlane.xlu0 %991
    %993 = vadd.xlane.f32.xlu0 %v962
    %v994 = vpop.xlane.xlu0 %993
    %995 = vadd.xlane.f32.xlu0 %v964
    %v996 = vpop.xlane.xlu0 %995
    %997 = vadd.xlane.f32.xlu0 %v966
    %v998 = vpop.xlane.xlu0 %997
    %999 = vadd.xlane.f32.xlu0 %v968
    %v1000 = vpop.xlane.xlu0 %999
    %1001 = vadd.xlane.f32.xlu0 %v970
    %v1002 = vpop.xlane.xlu0 %1001
    %1003 = vadd.xlane.f32.xlu0 %v972
    %v1004 = vpop.xlane.xlu0 %1003
    %1005 = vadd.xlane.f32.xlu0 %v974
    %v1006 = vpop.xlane.xlu0 %1005
    %1007 = vadd.xlane.f32.xlu0 %v976
    %v1008 = vpop.xlane.xlu0 %1007
    %1009 = vadd.xlane.f32.xlu0 %v978
    %v1010 = vpop.xlane.xlu0 %1009
    %1011 = vadd.xlane.f32.xlu0 %v980
    %v1012 = vpop.xlane.xlu0 %1011
    %1013 = vadd.xlane.f32.xlu0 %v982
    %v1014 = vpop.xlane.xlu0 %1013
    %1015 = vadd.xlane.f32.xlu0 %v984
    %v1016 = vpop.xlane.xlu0 %1015
    %1017 = vadd.xlane.f32.xlu0 %v986
    %v1018 = vpop.xlane.xlu0 %1017
    %v1019 = vrcp.pop %v988
    %v1020 = vrcp.pop %v990
    %v1021 = vrcp.pop %v992
    %v1022 = vrcp.pop %v994
    %v1023 = vrcp.pop %v996
    %v1024 = vrcp.pop %v998
    %v1025 = vrcp.pop %v1000
    %v1026 = vrcp.pop %v1002
    %v1027 = vrcp.pop %v1004
    %v1028 = vrcp.pop %v1006
    %v1029 = vrcp.pop %v1008
    %v1030 = vrcp.pop %v1010
    %v1031 = vrcp.pop %v1012
    %v1032 = vrcp.pop %v1014
    %v1033 = vrcp.pop %v1016
    %v1034 = vrcp.pop %v1018
    %v1035 = vmul.f32 %v956, %v1019
    %v1036 = vmul.f32 %v958, %v1020
    %v1037 = vmul.f32 %v960, %v1021
    %v1038 = vmul.f32 %v962, %v1022
    %v1039 = vmul.f32 %v964, %v1023
    %v1040 = vmul.f32 %v966, %v1024
    %v1041 = vmul.f32 %v968, %v1025
    %v1042 = vmul.f32 %v970, %v1026
    %v1043 = vmul.f32 %v972, %v1027
    %v1044 = vmul.f32 %v974, %v1028
    %v1045 = vmul.f32 %v976, %v1029
    %v1046 = vmul.f32 %v978, %v1030
    %v1047 = vmul.f32 %v980, %v1031
    %v1048 = vmul.f32 %v982, %v1032
    %v1049 = vmul.f32 %v984, %v1033
    %v1050 = vmul.f32 %v986, %v1034
    %v1051 = vpack.c.bf16 %v1036, %v1035
    %v1052 = vpack.c.bf16 %v1038, %v1037
    %v1053 = vpack.c.bf16 %v1040, %v1039
    %v1054 = vpack.c.bf16 %v1042, %v1041
    %v1055 = vpack.c.bf16 %v1044, %v1043
    %v1056 = vpack.c.bf16 %v1046, %v1045
    %v1057 = vpack.c.bf16 %v1048, %v1047
    %v1058 = vpack.c.bf16 %v1050, %v1049
    %1059 = vmatprep.subr.bf16.mxu0 0
    %1060 = vmatpush1.bf16.msra.mxu0 %v753
    %1061 = vmatprep.subr.bf16.mxu0 0
    %1062 = vmatpush1.bf16.msra.mxu0 %v752
    %1063 = vmatprep.subr.bf16.mxu0 0
    %1064 = vmatpush1.bf16.msra.mxu0 %v751
    %1065 = vmatprep.subr.bf16.mxu0 0
    %1066 = vmatpush1.bf16.msra.mxu0 %v750
    %1067 = vmatprep.subr.bf16.mxu0 0
    %1068 = vmatpush1.bf16.msra.mxu0 %v749
    %1069 = vmatprep.subr.bf16.mxu0 0
    %1070 = vmatpush1.bf16.msra.mxu0 %v748
    %1071 = vmatprep.subr.bf16.mxu0 0
    %1072 = vmatpush1.bf16.msra.mxu0 %v747
    %1073 = vmatprep.subr.bf16.mxu0 0
    %1074 = vmatpush1.bf16.msra.mxu0 %v746
    %1075 = vmatprep.subr.bf16.mxu0 0
    %1076 = vmatpush2.bf16.msra.mxu0 0
    %1077 = vmatprep.subr.bf16.mxu0 0
    %1078 = vmatpush2.bf16.msra.mxu0 0
    %1079 = vmatprep.subr.bf16.mxu0 0
    %1080 = vmatpush2.bf16.msra.mxu0 0
    %1081 = vmatprep.subr.bf16.mxu0 0
    %1082 = vmatpush2.bf16.msra.mxu0 0
    %1083 = vmatprep.subr.bf16.mxu0 0
    %1084 = vmatpush2.bf16.msra.mxu0 0
    %1085 = vmatprep.subr.bf16.mxu0 0
    %1086 = vmatpush2.bf16.msra.mxu0 0
    %1087 = vmatprep.subr.bf16.mxu0 0
    %1088 = vmatpush2.bf16.msra.mxu0 0
    %1089 = vmatprep.subr.bf16.mxu0 0
    %1090 = vmatpush2.bf16.msra.mxu0 0
    %1091 = vmatprep.mubr.bf16.mxu0 0
    %1092 = vmatmul.mubr.bf16.gmra.mxu0 %v1051
    %v1093 = vpop.f32.mrf.mxu0
    %v1094 = vadd.f32 0.0, %v1093
    %v1095 = vpop.f32.mrf.mxu0
    %v1096 = vpop.f32.mrf.mxu0
    %v1097 = vadd.f32 0.0, %v1096
    %v1098 = vpop.f32.mrf.mxu0
    %1099 = vmatprep.mubr.bf16.mxu0 0
    %1100 = vmatmul.mubr.bf16.gmra.mxu0 %v1052
    %v1101 = vpop.f32.mrf.mxu0
    %v1102 = vadd.f32 0.0, %v1101
    %v1103 = vpop.f32.mrf.mxu0
    %v1104 = vpop.f32.mrf.mxu0
    %v1105 = vadd.f32 0.0, %v1104
    %v1106 = vpop.f32.mrf.mxu0
    %1107 = vmatprep.mubr.bf16.mxu0 0
    %1108 = vmatmul.mubr.bf16.gmra.mxu0 %v1053
    %v1109 = vpop.f32.mrf.mxu0
    %v1110 = vadd.f32 0.0, %v1109
    %v1111 = vpop.f32.mrf.mxu0
    %v1112 = vpop.f32.mrf.mxu0
    %v1113 = vadd.f32 0.0, %v1112
    %v1114 = vpop.f32.mrf.mxu0
    %1115 = vmatprep.mubr.bf16.mxu0 0
    %1116 = vmatmul.mubr.bf16.gmra.mxu0 %v1054
    %v1117 = vpop.f32.mrf.mxu0
    %v1118 = vadd.f32 0.0, %v1117
    %v1119 = vpop.f32.mrf.mxu0
    %v1120 = vpop.f32.mrf.mxu0
    %v1121 = vadd.f32 0.0, %v1120
    %v1122 = vpop.f32.mrf.mxu0
    %1123 = vmatprep.mubr.bf16.mxu0 0
    %1124 = vmatmul.mubr.bf16.gmra.mxu0 %v1055
    %v1125 = vpop.f32.mrf.mxu0
    %v1126 = vadd.f32 0.0, %v1125
    %v1127 = vpop.f32.mrf.mxu0
    %v1128 = vpop.f32.mrf.mxu0
    %v1129 = vadd.f32 0.0, %v1128
    %v1130 = vpop.f32.mrf.mxu0
    %1131 = vmatprep.mubr.bf16.mxu0 0
    %1132 = vmatmul.mubr.bf16.gmra.mxu0 %v1056
    %v1133 = vpop.f32.mrf.mxu0
    %v1134 = vadd.f32 0.0, %v1133
    %v1135 = vpop.f32.mrf.mxu0
    %v1136 = vpop.f32.mrf.mxu0
    %v1137 = vadd.f32 0.0, %v1136
    %v1138 = vpop.f32.mrf.mxu0
    %1139 = vmatprep.mubr.bf16.mxu0 0
    %1140 = vmatmul.mubr.bf16.gmra.mxu0 %v1057
    %v1141 = vpop.f32.mrf.mxu0
    %v1142 = vadd.f32 0.0, %v1141
    %v1143 = vpop.f32.mrf.mxu0
    %v1144 = vpop.f32.mrf.mxu0
    %v1145 = vadd.f32 0.0, %v1144
    %v1146 = vpop.f32.mrf.mxu0
    %1147 = vmatprep.mubr.bf16.mxu0 0
    %1148 = vmatmul.mubr.bf16.gmra.mxu0 %v1058
    %v1149 = vpop.f32.mrf.mxu0
    %v1150 = vadd.f32 0.0, %v1149
    %v1151 = vpop.f32.mrf.mxu0
    %v1152 = vpop.f32.mrf.mxu0
    %v1153 = vadd.f32 0.0, %v1152
    %v1154 = vpop.f32.mrf.mxu0
    %1155 = vdwg.mxu0
    %v1156 = vpack.c.bf16 %v1097, %v1094
    %v1157 = vpack.c.bf16 %v1105, %v1102
    %v1158 = vpack.c.bf16 %v1113, %v1110
    %v1159 = vpack.c.bf16 %v1121, %v1118
    %v1160 = vpack.c.bf16 %v1129, %v1126
    %v1161 = vpack.c.bf16 %v1137, %v1134
    %v1162 = vpack.c.bf16 %v1145, %v1142
    %v1163 = vpack.c.bf16 %v1153, %v1150
    %1172 = vrot.lane.b32.xlu0 %v1156, 32
    %v1173 = vpop.permute.xlu0 %1172
    %1174 = vrot.lane.b32.xlu0 %v1157, 32
    %v1175 = vpop.permute.xlu0 %1174
    %1176 = vrot.lane.b32.xlu0 %v1158, 32
    %v1177 = vpop.permute.xlu0 %1176
    %1178 = vrot.lane.b32.xlu0 %v1159, 32
    %v1179 = vpop.permute.xlu0 %1178
    %1180 = vrot.lane.b32.xlu0 %v1160, 32
    %v1181 = vpop.permute.xlu0 %1180
    %1182 = vrot.lane.b32.xlu0 %v1161, 32
    %v1183 = vpop.permute.xlu0 %1182
    %1184 = vrot.lane.b32.xlu0 %v1162, 32
    %v1185 = vpop.permute.xlu0 %1184
    %1186 = vrot.lane.b32.xlu0 %v1163, 32
    %v1187 = vpop.permute.xlu0 %1186
    %v1189 = vsel %vm761, %v738, %v1173
    %v1191 = vsel %vm761, %v739, %v1175
    %v1193 = vsel %vm761, %v740, %v1177
    %v1195 = vsel %vm761, %v741, %v1179
    %v1197 = vsel %vm761, %v742, %v1181
    %v1199 = vsel %vm761, %v743, %v1183
    %v1201 = vsel %vm761, %v744, %v1185
    %v1203 = vsel %vm761, %v745, %v1187
    %v1204 = vld [vmem:[#allocation5] sm:$0xf]
    %v1205 = vld [vmem:[#allocation5 + $0x4] sm:$0xf]
    %v1206 = vld [vmem:[#allocation5 + $0x8] sm:$0xf]
    %v1207 = vld [vmem:[#allocation5 + $0xc] sm:$0xf]
    %v1208 = vld [vmem:[#allocation5 + $0x10] sm:$0xf]
    %v1209 = vld [vmem:[#allocation5 + $0x14] sm:$0xf]
    %v1210 = vld [vmem:[#allocation5 + $0x18] sm:$0xf]
    %v1211 = vld [vmem:[#allocation5 + $0x1c] sm:$0xf]
    %v1220 = vunpack.c.l.b16 %v1204
    %v1221 = vunpack.c.l.b16 %v1205
    %v1222 = vunpack.c.l.b16 %v1206
    %v1223 = vunpack.c.l.b16 %v1207
    %v1224 = vunpack.c.l.b16 %v1208
    %v1225 = vunpack.c.l.b16 %v1209
    %v1226 = vunpack.c.l.b16 %v1210
    %v1227 = vunpack.c.l.b16 %v1211
    %v1228 = vpack.c.b16 %v1221, %v1220
    %v1229 = vpack.c.b16 %v1223, %v1222
    %v1230 = vpack.c.b16 %v1225, %v1224
    %v1231 = vpack.c.b16 %v1227, %v1226
    %v1236 = vsel %vm400, %v1189, 0
    %v1238 = vsel %vm400, %v1191, 0
    %v1240 = vsel %vm400, %v1193, 0
    %v1242 = vsel %vm400, %v1195, 0
    %v1244 = vsel %vm400, %v1197, 0
    %v1246 = vsel %vm400, %v1199, 0
    %v1248 = vsel %vm400, %v1201, 0
    %v1250 = vsel %vm400, %v1203, 0
    %1252 = vmatprep.subr.bf16.mxu0 0
    %1253 = vmatpush1.bf16.msra.mxu0 0
    %1254 = vmatprep.subr.bf16.mxu0 0
    %1255 = vmatpush1.bf16.msra.mxu0 0
    %1256 = vmatprep.subr.bf16.mxu0 0
    %1257 = vmatpush1.bf16.msra.mxu0 0
    %1258 = vmatprep.subr.bf16.mxu0 0
    %1259 = vmatpush1.bf16.msra.mxu0 0
    %1260 = vmatprep.subr.bf16.mxu0 0
    %1261 = vmatpush1.bf16.msra.mxu0 %v1231
    %1262 = vmatprep.subr.bf16.mxu0 0
    %1263 = vmatpush1.bf16.msra.mxu0 %v1230
    %1264 = vmatprep.subr.bf16.mxu0 0
    %1265 = vmatpush1.bf16.msra.mxu0 %v1229
    %1266 = vmatprep.subr.bf16.mxu0 0
    %1267 = vmatpush1.bf16.msra.mxu0 %v1228
    %1268 = vmatprep.subr.bf16.mxu0 0
    %1269 = vmatpush2.bf16.msra.mxu0 0
    %1270 = vmatprep.subr.bf16.mxu0 0
    %1271 = vmatpush2.bf16.msra.mxu0 0
    %1272 = vmatprep.subr.bf16.mxu0 0
    %1273 = vmatpush2.bf16.msra.mxu0 0
    %1274 = vmatprep.subr.bf16.mxu0 0
    %1275 = vmatpush2.bf16.msra.mxu0 0
    %1276 = vmatprep.subr.bf16.mxu0 0
    %1277 = vmatpush2.bf16.msra.mxu0 0
    %1278 = vmatprep.subr.bf16.mxu0 0
    %1279 = vmatpush2.bf16.msra.mxu0 0
    %1280 = vmatprep.subr.bf16.mxu0 0
    %1281 = vmatpush2.bf16.msra.mxu0 0
    %1282 = vmatprep.subr.bf16.mxu0 0
    %1283 = vmatpush2.bf16.msra.mxu0 0
    %1284 = vmatprep.mubr.bf16.mxu0 0
    %1285 = vmatmul.mubr.bf16.gmra.mxu0 %v1236
    %v1286 = vpop.f32.mrf.mxu0
    %v1287 = vadd.f32 0.0, %v1286
    %v1288 = vpop.f32.mrf.mxu0
    %v1289 = vpop.f32.mrf.mxu0
    %v1290 = vadd.f32 0.0, %v1289
    %v1291 = vpop.f32.mrf.mxu0
    %1292 = vmatprep.mubr.bf16.mxu0 0
    %1293 = vmatmul.mubr.bf16.gmra.mxu0 %v1238
    %v1294 = vpop.f32.mrf.mxu0
    %v1295 = vadd.f32 0.0, %v1294
    %v1296 = vpop.f32.mrf.mxu0
    %v1297 = vpop.f32.mrf.mxu0
    %v1298 = vadd.f32 0.0, %v1297
    %v1299 = vpop.f32.mrf.mxu0
    %1300 = vmatprep.mubr.bf16.mxu0 0
    %1301 = vmatmul.mubr.bf16.gmra.mxu0 %v1240
    %v1302 = vpop.f32.mrf.mxu0
    %v1303 = vadd.f32 0.0, %v1302
    %v1304 = vpop.f32.mrf.mxu0
    %v1305 = vpop.f32.mrf.mxu0
    %v1306 = vadd.f32 0.0, %v1305
    %v1307 = vpop.f32.mrf.mxu0
    %1308 = vmatprep.mubr.bf16.mxu0 0
    %1309 = vmatmul.mubr.bf16.gmra.mxu0 %v1242
    %v1310 = vpop.f32.mrf.mxu0
    %v1311 = vadd.f32 0.0, %v1310
    %v1312 = vpop.f32.mrf.mxu0
    %v1313 = vpop.f32.mrf.mxu0
    %v1314 = vadd.f32 0.0, %v1313
    %v1315 = vpop.f32.mrf.mxu0
    %1316 = vmatprep.mubr.bf16.mxu0 0
    %1317 = vmatmul.mubr.bf16.gmra.mxu0 %v1244
    %v1318 = vpop.f32.mrf.mxu0
    %v1319 = vadd.f32 0.0, %v1318
    %v1320 = vpop.f32.mrf.mxu0
    %v1321 = vpop.f32.mrf.mxu0
    %v1322 = vadd.f32 0.0, %v1321
    %v1323 = vpop.f32.mrf.mxu0
    %1324 = vmatprep.mubr.bf16.mxu0 0
    %1325 = vmatmul.mubr.bf16.gmra.mxu0 %v1246
    %v1326 = vpop.f32.mrf.mxu0
    %v1327 = vadd.f32 0.0, %v1326
    %v1328 = vpop.f32.mrf.mxu0
    %v1329 = vpop.f32.mrf.mxu0
    %v1330 = vadd.f32 0.0, %v1329
    %v1331 = vpop.f32.mrf.mxu0
    %1332 = vmatprep.mubr.bf16.mxu0 0
    %1333 = vmatmul.mubr.bf16.gmra.mxu0 %v1248
    %v1334 = vpop.f32.mrf.mxu0
    %v1335 = vadd.f32 0.0, %v1334
    %v1336 = vpop.f32.mrf.mxu0
    %v1337 = vpop.f32.mrf.mxu0
    %v1338 = vadd.f32 0.0, %v1337
    %v1339 = vpop.f32.mrf.mxu0
    %1340 = vmatprep.mubr.bf16.mxu0 0
    %1341 = vmatmul.mubr.bf16.gmra.mxu0 %v1250
    %v1342 = vpop.f32.mrf.mxu0
    %v1343 = vadd.f32 0.0, %v1342
    %v1344 = vpop.f32.mrf.mxu0
    %v1345 = vpop.f32.mrf.mxu0
    %v1346 = vadd.f32 0.0, %v1345
    %v1347 = vpop.f32.mrf.mxu0
    %1348 = vdwg.mxu0
    %v1349 = vld [vmem:[#allocation7] sm:$0x1]
    %v1351 = vlaneseq
    %v1352 = vshrl.u32 %v1351, 7
    %v1353 = vsub.s32 0, %v1352
    %v1354 = vrot.slane %v1349, %v1353
    %v1356 = vmul.f32 %v1287, %v1354
    %v1357 = vmul.f32 %v1290, %v1354
    %v1358 = vmul.f32 %v1295, %v1354
    %v1359 = vmul.f32 %v1298, %v1354
    %v1360 = vmul.f32 %v1303, %v1354
    %v1361 = vmul.f32 %v1306, %v1354
    %v1362 = vmul.f32 %v1311, %v1354
    %v1363 = vmul.f32 %v1314, %v1354
    %v1364 = vmul.f32 %v1319, %v1354
    %v1365 = vmul.f32 %v1322, %v1354
    %v1366 = vmul.f32 %v1327, %v1354
    %v1367 = vmul.f32 %v1330, %v1354
    %v1368 = vmul.f32 %v1335, %v1354
    %v1369 = vmul.f32 %v1338, %v1354
    %v1370 = vmul.f32 %v1343, %v1354
    %v1371 = vmul.f32 %v1346, %v1354
    %v1372 = vld [vmem:[#allocation8] sm:$0x1]
    %v1374 = vlaneseq
    %v1375 = vshrl.u32 %v1374, 7
    %v1376 = vsub.s32 0, %v1375
    %v1377 = vrot.slane %v1372, %v1376
    %v1379 = vadd.f32 %v1356, %v1377
    %v1380 = vadd.f32 %v1357, %v1377
    %v1381 = vadd.f32 %v1358, %v1377
    %v1382 = vadd.f32 %v1359, %v1377
    %v1383 = vadd.f32 %v1360, %v1377
    %v1384 = vadd.f32 %v1361, %v1377
    %v1385 = vadd.f32 %v1362, %v1377
    %v1386 = vadd.f32 %v1363, %v1377
    %v1387 = vadd.f32 %v1364, %v1377
    %v1388 = vadd.f32 %v1365, %v1377
    %v1389 = vadd.f32 %v1366, %v1377
    %v1390 = vadd.f32 %v1367, %v1377
    %v1391 = vadd.f32 %v1368, %v1377
    %v1392 = vadd.f32 %v1369, %v1377
    %v1393 = vadd.f32 %v1370, %v1377
    %v1394 = vadd.f32 %v1371, %v1377
    %v1395 = vmax.f32 %v1379, 0.0
    %v1396 = vmax.f32 %v1380, 0.0
    %v1397 = vmax.f32 %v1381, 0.0
    %v1398 = vmax.f32 %v1382, 0.0
    %v1399 = vmax.f32 %v1383, 0.0
    %v1400 = vmax.f32 %v1384, 0.0
    %v1401 = vmax.f32 %v1385, 0.0
    %v1402 = vmax.f32 %v1386, 0.0
    %v1403 = vmax.f32 %v1387, 0.0
    %v1404 = vmax.f32 %v1388, 0.0
    %v1405 = vmax.f32 %v1389, 0.0
    %v1406 = vmax.f32 %v1390, 0.0
    %v1407 = vmax.f32 %v1391, 0.0
    %v1408 = vmax.f32 %v1392, 0.0
    %v1409 = vmax.f32 %v1393, 0.0
    %v1410 = vmax.f32 %v1394, 0.0
    %1427 = vrot.lane.b32.xlu0 %v1395, 64
    %v1428 = vpop.permute.xlu0 %1427
    %1429 = vrot.lane.b32.xlu0 %v1396, 64
    %v1430 = vpop.permute.xlu0 %1429
    %1431 = vrot.lane.b32.xlu0 %v1397, 64
    %v1432 = vpop.permute.xlu0 %1431
    %1433 = vrot.lane.b32.xlu0 %v1398, 64
    %v1434 = vpop.permute.xlu0 %1433
    %1435 = vrot.lane.b32.xlu0 %v1399, 64
    %v1436 = vpop.permute.xlu0 %1435
    %1437 = vrot.lane.b32.xlu0 %v1400, 64
    %v1438 = vpop.permute.xlu0 %1437
    %1439 = vrot.lane.b32.xlu0 %v1401, 64
    %v1440 = vpop.permute.xlu0 %1439
    %1441 = vrot.lane.b32.xlu0 %v1402, 64
    %v1442 = vpop.permute.xlu0 %1441
    %1443 = vrot.lane.b32.xlu0 %v1403, 64
    %v1444 = vpop.permute.xlu0 %1443
    %1445 = vrot.lane.b32.xlu0 %v1404, 64
    %v1446 = vpop.permute.xlu0 %1445
    %1447 = vrot.lane.b32.xlu0 %v1405, 64
    %v1448 = vpop.permute.xlu0 %1447
    %1449 = vrot.lane.b32.xlu0 %v1406, 64
    %v1450 = vpop.permute.xlu0 %1449
    %1451 = vrot.lane.b32.xlu0 %v1407, 64
    %v1452 = vpop.permute.xlu0 %1451
    %1453 = vrot.lane.b32.xlu0 %v1408, 64
    %v1454 = vpop.permute.xlu0 %1453
    %1455 = vrot.lane.b32.xlu0 %v1409, 64
    %v1456 = vpop.permute.xlu0 %1455
    %1457 = vrot.lane.b32.xlu0 %v1410, 64
    %v1458 = vpop.permute.xlu0 %1457
    %v1475 = vmax.f32 %v1395, %v1428
    %v1476 = vmax.f32 %v1396, %v1430
    %v1477 = vmax.f32 %v1397, %v1432
    %v1478 = vmax.f32 %v1398, %v1434
    %v1479 = vmax.f32 %v1399, %v1436
    %v1480 = vmax.f32 %v1400, %v1438
    %v1481 = vmax.f32 %v1401, %v1440
    %v1482 = vmax.f32 %v1402, %v1442
    %v1483 = vmax.f32 %v1403, %v1444
    %v1484 = vmax.f32 %v1404, %v1446
    %v1485 = vmax.f32 %v1405, %v1448
    %v1486 = vmax.f32 %v1406, %v1450
    %v1487 = vmax.f32 %v1407, %v1452
    %v1488 = vmax.f32 %v1408, %v1454
    %v1489 = vmax.f32 %v1409, %v1456
    %v1490 = vmax.f32 %v1410, %v1458
    %v1491 = vpack.c.bf16 %v1476, %v1475
    %v1492 = vpack.c.bf16 %v1478, %v1477
    %v1493 = vpack.c.bf16 %v1480, %v1479
    %v1494 = vpack.c.bf16 %v1482, %v1481
    %v1495 = vpack.c.bf16 %v1484, %v1483
    %v1496 = vpack.c.bf16 %v1486, %v1485
    %v1497 = vpack.c.bf16 %v1488, %v1487
    %v1498 = vpack.c.bf16 %v1490, %v1489
    %v1499 = vld [vmem:[#allocation10] sm:$0xf]
    %v1500 = vld [vmem:[#allocation10 + $0x4] sm:$0xf]
    %v1501 = vld [vmem:[#allocation10 + $0x8] sm:$0xf]
    %v1502 = vld [vmem:[#allocation10 + $0xc] sm:$0xf]
    %v1503 = vld [vmem:[#allocation10 + $0x10] sm:$0xf]
    %v1504 = vld [vmem:[#allocation10 + $0x14] sm:$0xf]
    %v1505 = vld [vmem:[#allocation10 + $0x18] sm:$0xf]
    %v1506 = vld [vmem:[#allocation10 + $0x1c] sm:$0xf]
    %v1515 = vunpack.c.l.b16 %v1499
    %v1516 = vunpack.c.l.b16 %v1500
    %v1517 = vunpack.c.l.b16 %v1501
    %v1518 = vunpack.c.l.b16 %v1502
    %v1519 = vunpack.c.l.b16 %v1503
    %v1520 = vunpack.c.l.b16 %v1504
    %v1521 = vunpack.c.l.b16 %v1505
    %v1522 = vunpack.c.l.b16 %v1506
    %v1523 = vpack.c.b16 %v1516, %v1515
    %v1524 = vpack.c.b16 %v1518, %v1517
    %v1525 = vpack.c.b16 %v1520, %v1519
    %v1526 = vpack.c.b16 %v1522, %v1521
    %v1532 = vsel %vm400, %v1491, 0
    %v1535 = vsel %vm400, %v1492, 0
    %v1538 = vsel %vm400, %v1493, 0
    %v1541 = vsel %vm400, %v1494, 0
    %v1544 = vsel %vm400, %v1495, 0
    %v1547 = vsel %vm400, %v1496, 0
    %v1550 = vsel %vm400, %v1497, 0
    %v1553 = vsel %vm400, %v1498, 0
    %1555 = vmatprep.subr.bf16.mxu0 0
    %1556 = vmatpush1.bf16.msra.mxu0 0
    %1557 = vmatprep.subr.bf16.mxu0 0
    %1558 = vmatpush1.bf16.msra.mxu0 0
    %1559 = vmatprep.subr.bf16.mxu0 0
    %1560 = vmatpush1.bf16.msra.mxu0 0
    %1561 = vmatprep.subr.bf16.mxu0 0
    %1562 = vmatpush1.bf16.msra.mxu0 0
    %1563 = vmatprep.subr.bf16.mxu0 0
    %1564 = vmatpush1.bf16.msra.mxu0 %v1526
    %1565 = vmatprep.subr.bf16.mxu0 0
    %1566 = vmatpush1.bf16.msra.mxu0 %v1525
    %1567 = vmatprep.subr.bf16.mxu0 0
    %1568 = vmatpush1.bf16.msra.mxu0 %v1524
    %1569 = vmatprep.subr.bf16.mxu0 0
    %1570 = vmatpush1.bf16.msra.mxu0 %v1523
    %1571 = vmatprep.subr.bf16.mxu0 0
    %1572 = vmatpush2.bf16.msra.mxu0 0
    %1573 = vmatprep.subr.bf16.mxu0 0
    %1574 = vmatpush2.bf16.msra.mxu0 0
    %1575 = vmatprep.subr.bf16.mxu0 0
    %1576 = vmatpush2.bf16.msra.mxu0 0
    %1577 = vmatprep.subr.bf16.mxu0 0
    %1578 = vmatpush2.bf16.msra.mxu0 0
    %1579 = vmatprep.subr.bf16.mxu0 0
    %1580 = vmatpush2.bf16.msra.mxu0 0
    %1581 = vmatprep.subr.bf16.mxu0 0
    %1582 = vmatpush2.bf16.msra.mxu0 0
    %1583 = vmatprep.subr.bf16.mxu0 0
    %1584 = vmatpush2.bf16.msra.mxu0 0
    %1585 = vmatprep.subr.bf16.mxu0 0
    %1586 = vmatpush2.bf16.msra.mxu0 0
    %1587 = vmatprep.mubr.bf16.mxu0 0
    %1588 = vmatmul.mubr.bf16.gmra.mxu0 %v1532
    %v1589 = vpop.f32.mrf.mxu0
    %v1590 = vadd.f32 0.0, %v1589
    %v1591 = vpop.f32.mrf.mxu0
    %v1592 = vpop.f32.mrf.mxu0
    %v1593 = vadd.f32 0.0, %v1592
    %v1594 = vpop.f32.mrf.mxu0
    %1595 = vmatprep.mubr.bf16.mxu0 0
    %1596 = vmatmul.mubr.bf16.gmra.mxu0 %v1535
    %v1597 = vpop.f32.mrf.mxu0
    %v1598 = vadd.f32 0.0, %v1597
    %v1599 = vpop.f32.mrf.mxu0
    %v1600 = vpop.f32.mrf.mxu0
    %v1601 = vadd.f32 0.0, %v1600
    %v1602 = vpop.f32.mrf.mxu0
    %1603 = vmatprep.mubr.bf16.mxu0 0
    %1604 = vmatmul.mubr.bf16.gmra.mxu0 %v1538
    %v1605 = vpop.f32.mrf.mxu0
    %v1606 = vadd.f32 0.0, %v1605
    %v1607 = vpop.f32.mrf.mxu0
    %v1608 = vpop.f32.mrf.mxu0
    %v1609 = vadd.f32 0.0, %v1608
    %v1610 = vpop.f32.mrf.mxu0
    %1611 = vmatprep.mubr.bf16.mxu0 0
    %1612 = vmatmul.mubr.bf16.gmra.mxu0 %v1541
    %v1613 = vpop.f32.mrf.mxu0
    %v1614 = vadd.f32 0.0, %v1613
    %v1615 = vpop.f32.mrf.mxu0
    %v1616 = vpop.f32.mrf.mxu0
    %v1617 = vadd.f32 0.0, %v1616
    %v1618 = vpop.f32.mrf.mxu0
    %1619 = vmatprep.mubr.bf16.mxu0 0
    %1620 = vmatmul.mubr.bf16.gmra.mxu0 %v1544
    %v1621 = vpop.f32.mrf.mxu0
    %v1622 = vadd.f32 0.0, %v1621
    %v1623 = vpop.f32.mrf.mxu0
    %v1624 = vpop.f32.mrf.mxu0
    %v1625 = vadd.f32 0.0, %v1624
    %v1626 = vpop.f32.mrf.mxu0
    %1627 = vmatprep.mubr.bf16.mxu0 0
    %1628 = vmatmul.mubr.bf16.gmra.mxu0 %v1547
    %v1629 = vpop.f32.mrf.mxu0
    %v1630 = vadd.f32 0.0, %v1629
    %v1631 = vpop.f32.mrf.mxu0
    %v1632 = vpop.f32.mrf.mxu0
    %v1633 = vadd.f32 0.0, %v1632
    %v1634 = vpop.f32.mrf.mxu0
    %1635 = vmatprep.mubr.bf16.mxu0 0
    %1636 = vmatmul.mubr.bf16.gmra.mxu0 %v1550
    %v1637 = vpop.f32.mrf.mxu0
    %v1638 = vadd.f32 0.0, %v1637
    %v1639 = vpop.f32.mrf.mxu0
    %v1640 = vpop.f32.mrf.mxu0
    %v1641 = vadd.f32 0.0, %v1640
    %v1642 = vpop.f32.mrf.mxu0
    %1643 = vmatprep.mubr.bf16.mxu0 0
    %1644 = vmatmul.mubr.bf16.gmra.mxu0 %v1553
    %v1645 = vpop.f32.mrf.mxu0
    %v1646 = vadd.f32 0.0, %v1645
    %v1647 = vpop.f32.mrf.mxu0
    %v1648 = vpop.f32.mrf.mxu0
    %v1649 = vadd.f32 0.0, %v1648
    %v1650 = vpop.f32.mrf.mxu0
    %1651 = vdwg.mxu0
    %v1652 = vld [vmem:[#allocation11] sm:$0x1]
    %v1654 = vlaneseq
    %v1655 = vshrl.u32 %v1654, 7
    %v1656 = vsub.s32 0, %v1655
    %v1657 = vrot.slane %v1652, %v1656
    %v1659 = vmul.f32 %v1590, %v1657
    %v1660 = vmul.f32 %v1593, %v1657
    %v1661 = vmul.f32 %v1598, %v1657
    %v1662 = vmul.f32 %v1601, %v1657
    %v1663 = vmul.f32 %v1606, %v1657
    %v1664 = vmul.f32 %v1609, %v1657
    %v1665 = vmul.f32 %v1614, %v1657
    %v1666 = vmul.f32 %v1617, %v1657
    %v1667 = vmul.f32 %v1622, %v1657
    %v1668 = vmul.f32 %v1625, %v1657
    %v1669 = vmul.f32 %v1630, %v1657
    %v1670 = vmul.f32 %v1633, %v1657
    %v1671 = vmul.f32 %v1638, %v1657
    %v1672 = vmul.f32 %v1641, %v1657
    %v1673 = vmul.f32 %v1646, %v1657
    %v1674 = vmul.f32 %v1649, %v1657
    %v1675 = vld [vmem:[#allocation13] sm:$0x1]
    %v1677 = vlaneseq
    %v1678 = vshrl.u32 %v1677, 7
    %v1679 = vsub.s32 0, %v1678
    %v1680 = vrot.slane %v1675, %v1679
    %v1682 = vadd.f32 %v1659, %v1680
    %v1683 = vadd.f32 %v1660, %v1680
    %v1684 = vadd.f32 %v1661, %v1680
    %v1685 = vadd.f32 %v1662, %v1680
    %v1686 = vadd.f32 %v1663, %v1680
    %v1687 = vadd.f32 %v1664, %v1680
    %v1688 = vadd.f32 %v1665, %v1680
    %v1689 = vadd.f32 %v1666, %v1680
    %v1690 = vadd.f32 %v1667, %v1680
    %v1691 = vadd.f32 %v1668, %v1680
    %v1692 = vadd.f32 %v1669, %v1680
    %v1693 = vadd.f32 %v1670, %v1680
    %v1694 = vadd.f32 %v1671, %v1680
    %v1695 = vadd.f32 %v1672, %v1680
    %v1696 = vadd.f32 %v1673, %v1680
    %v1697 = vadd.f32 %v1674, %v1680
    %v1698 = vmax.f32 %v1682, 0.0
    %v1699 = vmax.f32 %v1683, 0.0
    %v1700 = vmax.f32 %v1684, 0.0
    %v1701 = vmax.f32 %v1685, 0.0
    %v1702 = vmax.f32 %v1686, 0.0
    %v1703 = vmax.f32 %v1687, 0.0
    %v1704 = vmax.f32 %v1688, 0.0
    %v1705 = vmax.f32 %v1689, 0.0
    %v1706 = vmax.f32 %v1690, 0.0
    %v1707 = vmax.f32 %v1691, 0.0
    %v1708 = vmax.f32 %v1692, 0.0
    %v1709 = vmax.f32 %v1693, 0.0
    %v1710 = vmax.f32 %v1694, 0.0
    %v1711 = vmax.f32 %v1695, 0.0
    %v1712 = vmax.f32 %v1696, 0.0
    %v1713 = vmax.f32 %v1697, 0.0
    %v1714 = vpack.c.bf16 %v1699, %v1698
    %v1715 = vpack.c.bf16 %v1701, %v1700
    %v1716 = vpack.c.bf16 %v1703, %v1702
    %v1717 = vpack.c.bf16 %v1705, %v1704
    %v1718 = vpack.c.bf16 %v1707, %v1706
    %v1719 = vpack.c.bf16 %v1709, %v1708
    %v1720 = vpack.c.bf16 %v1711, %v1710
    %v1721 = vpack.c.bf16 %v1713, %v1712
    %v1722 = vld [vmem:[%s13] sm:$0xff]
    %v1723 = vld [vmem:[%s13 + $0x8] sm:$0xff]
    %v1724 = vld [vmem:[%s13 + $0x10] sm:$0xff]
    %v1725 = vld [vmem:[%s13 + $0x18] sm:$0xff]
    %v1726 = vld [vmem:[%s13 + $0x20] sm:$0xff]
    %v1727 = vld [vmem:[%s13 + $0x28] sm:$0xff]
    %v1728 = vld [vmem:[%s13 + $0x30] sm:$0xff]
    %v1729 = vld [vmem:[%s13 + $0x38] sm:$0xff]
    %v1730 = vld [vmem:[%s13 + $0x40] sm:$0xff]
    %v1731 = vld [vmem:[%s13 + $0x48] sm:$0xff]
    %v1732 = vld [vmem:[%s13 + $0x50] sm:$0xff]
    %v1733 = vld [vmem:[%s13 + $0x58] sm:$0xff]
    %v1734 = vld [vmem:[%s13 + $0x60] sm:$0xff]
    %v1735 = vld [vmem:[%s13 + $0x68] sm:$0xff]
    %v1736 = vld [vmem:[%s13 + $0x70] sm:$0xff]
    %v1737 = vld [vmem:[%s13 + $0x78] sm:$0xff]
    %v1754 = vunpack.c.l.b16 %v1722
    %v1755 = vunpack.c.h.b16 %v1722
    %v1756 = vunpack.c.l.b16 %v1723
    %v1757 = vunpack.c.h.b16 %v1723
    %v1758 = vunpack.c.l.b16 %v1724
    %v1759 = vunpack.c.h.b16 %v1724
    %v1760 = vunpack.c.l.b16 %v1725
    %v1761 = vunpack.c.h.b16 %v1725
    %v1762 = vunpack.c.l.b16 %v1726
    %v1763 = vunpack.c.h.b16 %v1726
    %v1764 = vunpack.c.l.b16 %v1727
    %v1765 = vunpack.c.h.b16 %v1727
    %v1766 = vunpack.c.l.b16 %v1728
    %v1767 = vunpack.c.h.b16 %v1728
    %v1768 = vunpack.c.l.b16 %v1729
    %v1769 = vunpack.c.h.b16 %v1729
    %v1770 = vunpack.c.l.b16 %v1730
    %v1771 = vunpack.c.h.b16 %v1730
    %v1772 = vunpack.c.l.b16 %v1731
    %v1773 = vunpack.c.h.b16 %v1731
    %v1774 = vunpack.c.l.b16 %v1732
    %v1775 = vunpack.c.h.b16 %v1732
    %v1776 = vunpack.c.l.b16 %v1733
    %v1777 = vunpack.c.h.b16 %v1733
    %v1778 = vunpack.c.l.b16 %v1734
    %v1779 = vunpack.c.h.b16 %v1734
    %v1780 = vunpack.c.l.b16 %v1735
    %v1781 = vunpack.c.h.b16 %v1735
    %v1782 = vunpack.c.l.b16 %v1736
    %v1783 = vunpack.c.h.b16 %v1736
    %v1784 = vunpack.c.l.b16 %v1737
    %v1785 = vunpack.c.h.b16 %v1737
    %v1786 = vpack.c.b16 %v1756, %v1754
    %v1787 = vpack.c.b16 %v1757, %v1755
    %v1788 = vpack.c.b16 %v1760, %v1758
    %v1789 = vpack.c.b16 %v1761, %v1759
    %v1790 = vpack.c.b16 %v1764, %v1762
    %v1791 = vpack.c.b16 %v1765, %v1763
    %v1792 = vpack.c.b16 %v1768, %v1766
    %v1793 = vpack.c.b16 %v1769, %v1767
    %v1794 = vpack.c.b16 %v1772, %v1770
    %v1795 = vpack.c.b16 %v1773, %v1771
    %v1796 = vpack.c.b16 %v1776, %v1774
    %v1797 = vpack.c.b16 %v1777, %v1775
    %v1798 = vpack.c.b16 %v1780, %v1778
    %v1799 = vpack.c.b16 %v1781, %v1779
    %v1800 = vpack.c.b16 %v1784, %v1782
    %v1801 = vpack.c.b16 %v1785, %v1783
    %1818 = vmatprep.subr.bf16.mxu0 %v1801
    %1819 = vmatpush1.bf16.msra.mxu0 %v1800
    %1820 = vmatprep.subr.bf16.mxu0 %v1799
    %1821 = vmatpush1.bf16.msra.mxu0 %v1798
    %1822 = vmatprep.subr.bf16.mxu0 %v1797
    %1823 = vmatpush1.bf16.msra.mxu0 %v1796
    %1824 = vmatprep.subr.bf16.mxu0 %v1795
    %1825 = vmatpush1.bf16.msra.mxu0 %v1794
    %1826 = vmatprep.subr.bf16.mxu0 %v1793
    %1827 = vmatpush1.bf16.msra.mxu0 %v1792
    %1828 = vmatprep.subr.bf16.mxu0 %v1791
    %1829 = vmatpush1.bf16.msra.mxu0 %v1790
    %1830 = vmatprep.subr.bf16.mxu0 %v1789
    %1831 = vmatpush1.bf16.msra.mxu0 %v1788
    %1832 = vmatprep.subr.bf16.mxu0 %v1787
    %1833 = vmatpush1.bf16.msra.mxu0 %v1786
    %1834 = vmatprep.subr.bf16.mxu0 0
    %1835 = vmatpush2.bf16.msra.mxu0 0
    %1836 = vmatprep.subr.bf16.mxu0 0
    %1837 = vmatpush2.bf16.msra.mxu0 0
    %1838 = vmatprep.subr.bf16.mxu0 0
    %1839 = vmatpush2.bf16.msra.mxu0 0
    %1840 = vmatprep.subr.bf16.mxu0 0
    %1841 = vmatpush2.bf16.msra.mxu0 0
    %1842 = vmatprep.subr.bf16.mxu0 0
    %1843 = vmatpush2.bf16.msra.mxu0 0
    %1844 = vmatprep.subr.bf16.mxu0 0
    %1845 = vmatpush2.bf16.msra.mxu0 0
    %1846 = vmatprep.subr.bf16.mxu0 0
    %1847 = vmatpush2.bf16.msra.mxu0 0
    %1848 = vmatprep.subr.bf16.mxu0 0
    %1849 = vmatpush2.bf16.msra.mxu0 0
    %1850 = vmatprep.mubr.bf16.mxu0 0
    %1851 = vmatmul.mubr.bf16.gmra.mxu0 %v1714
    %v1852 = vpop.f32.mrf.mxu0
    %v1853 = vadd.f32 0.0, %v1852
    %v1854 = vpop.f32.mrf.mxu0
    %v1855 = vadd.f32 0.0, %v1854
    %v1856 = vpop.f32.mrf.mxu0
    %v1857 = vadd.f32 0.0, %v1856
    %v1858 = vpop.f32.mrf.mxu0
    %v1859 = vadd.f32 0.0, %v1858
    %1860 = vmatprep.mubr.bf16.mxu0 0
    %1861 = vmatmul.mubr.bf16.gmra.mxu0 %v1715
    %v1862 = vpop.f32.mrf.mxu0
    %v1863 = vadd.f32 0.0, %v1862
    %v1864 = vpop.f32.mrf.mxu0
    %v1865 = vadd.f32 0.0, %v1864
    %v1866 = vpop.f32.mrf.mxu0
    %v1867 = vadd.f32 0.0, %v1866
    %v1868 = vpop.f32.mrf.mxu0
    %v1869 = vadd.f32 0.0, %v1868
    %1870 = vmatprep.mubr.bf16.mxu0 0
    %1871 = vmatmul.mubr.bf16.gmra.mxu0 %v1716
    %v1872 = vpop.f32.mrf.mxu0
    %v1873 = vadd.f32 0.0, %v1872
    %v1874 = vpop.f32.mrf.mxu0
    %v1875 = vadd.f32 0.0, %v1874
    %v1876 = vpop.f32.mrf.mxu0
    %v1877 = vadd.f32 0.0, %v1876
    %v1878 = vpop.f32.mrf.mxu0
    %v1879 = vadd.f32 0.0, %v1878
    %1880 = vmatprep.mubr.bf16.mxu0 0
    %1881 = vmatmul.mubr.bf16.gmra.mxu0 %v1717
    %v1882 = vpop.f32.mrf.mxu0
    %v1883 = vadd.f32 0.0, %v1882
    %v1884 = vpop.f32.mrf.mxu0
    %v1885 = vadd.f32 0.0, %v1884
    %v1886 = vpop.f32.mrf.mxu0
    %v1887 = vadd.f32 0.0, %v1886
    %v1888 = vpop.f32.mrf.mxu0
    %v1889 = vadd.f32 0.0, %v1888
    %1890 = vmatprep.mubr.bf16.mxu0 0
    %1891 = vmatmul.mubr.bf16.gmra.mxu0 %v1718
    %v1892 = vpop.f32.mrf.mxu0
    %v1893 = vadd.f32 0.0, %v1892
    %v1894 = vpop.f32.mrf.mxu0
    %v1895 = vadd.f32 0.0, %v1894
    %v1896 = vpop.f32.mrf.mxu0
    %v1897 = vadd.f32 0.0, %v1896
    %v1898 = vpop.f32.mrf.mxu0
    %v1899 = vadd.f32 0.0, %v1898
    %1900 = vmatprep.mubr.bf16.mxu0 0
    %1901 = vmatmul.mubr.bf16.gmra.mxu0 %v1719
    %v1902 = vpop.f32.mrf.mxu0
    %v1903 = vadd.f32 0.0, %v1902
    %v1904 = vpop.f32.mrf.mxu0
    %v1905 = vadd.f32 0.0, %v1904
    %v1906 = vpop.f32.mrf.mxu0
    %v1907 = vadd.f32 0.0, %v1906
    %v1908 = vpop.f32.mrf.mxu0
    %v1909 = vadd.f32 0.0, %v1908
    %1910 = vmatprep.mubr.bf16.mxu0 0
    %1911 = vmatmul.mubr.bf16.gmra.mxu0 %v1720
    %v1912 = vpop.f32.mrf.mxu0
    %v1913 = vadd.f32 0.0, %v1912
    %v1914 = vpop.f32.mrf.mxu0
    %v1915 = vadd.f32 0.0, %v1914
    %v1916 = vpop.f32.mrf.mxu0
    %v1917 = vadd.f32 0.0, %v1916
    %v1918 = vpop.f32.mrf.mxu0
    %v1919 = vadd.f32 0.0, %v1918
    %1920 = vmatprep.mubr.bf16.mxu0 0
    %1921 = vmatmul.mubr.bf16.gmra.mxu0 %v1721
    %v1922 = vpop.f32.mrf.mxu0
    %v1923 = vadd.f32 0.0, %v1922
    %v1924 = vpop.f32.mrf.mxu0
    %v1925 = vadd.f32 0.0, %v1924
    %v1926 = vpop.f32.mrf.mxu0
    %v1927 = vadd.f32 0.0, %v1926
    %v1928 = vpop.f32.mrf.mxu0
    %v1929 = vadd.f32 0.0, %v1928
    %1930 = vdwg.mxu0
    %v1931 = vld [vmem:[#allocation14] sm:$0x3]
    %v1933 = vlaneseq
    %v1934 = vshrl.u32 %v1933, 7
    %v1935 = vsub.s32 0, %v1934
    %v1936 = vrot.slane %v1931, %v1935
    %v1937 = vlaneseq
    %v1938 = vshrl.u32 %v1937, 7
    %v1939 = vsub.s32 1, %v1938
    %v1940 = vrot.slane %v1931, %v1939
    %v1943 = vmul.f32 %v1853, %v1936
    %v1944 = vmul.f32 %v1855, %v1940
    %v1945 = vmul.f32 %v1857, %v1936
    %v1946 = vmul.f32 %v1859, %v1940
    %v1947 = vmul.f32 %v1863, %v1936
    %v1948 = vmul.f32 %v1865, %v1940
    %v1949 = vmul.f32 %v1867, %v1936
    %v1950 = vmul.f32 %v1869, %v1940
    %v1951 = vmul.f32 %v1873, %v1936
    %v1952 = vmul.f32 %v1875, %v1940
    %v1953 = vmul.f32 %v1877, %v1936
    %v1954 = vmul.f32 %v1879, %v1940
    %v1955 = vmul.f32 %v1883, %v1936
    %v1956 = vmul.f32 %v1885, %v1940
    %v1957 = vmul.f32 %v1887, %v1936
    %v1958 = vmul.f32 %v1889, %v1940
    %v1959 = vmul.f32 %v1893, %v1936
    %v1960 = vmul.f32 %v1895, %v1940
    %v1961 = vmul.f32 %v1897, %v1936
    %v1962 = vmul.f32 %v1899, %v1940
    %v1963 = vmul.f32 %v1903, %v1936
    %v1964 = vmul.f32 %v1905, %v1940
    %v1965 = vmul.f32 %v1907, %v1936
    %v1966 = vmul.f32 %v1909, %v1940
    %v1967 = vmul.f32 %v1913, %v1936
    %v1968 = vmul.f32 %v1915, %v1940
    %v1969 = vmul.f32 %v1917, %v1936
    %v1970 = vmul.f32 %v1919, %v1940
    %v1971 = vmul.f32 %v1923, %v1936
    %v1972 = vmul.f32 %v1925, %v1940
    %v1973 = vmul.f32 %v1927, %v1936
    %v1974 = vmul.f32 %v1929, %v1940
    %v1975 = vld [vmem:[#allocation16] sm:$0x3]
    %v1977 = vlaneseq
    %v1978 = vshrl.u32 %v1977, 7
    %v1979 = vsub.s32 0, %v1978
    %v1980 = vrot.slane %v1975, %v1979
    %v1981 = vlaneseq
    %v1982 = vshrl.u32 %v1981, 7
    %v1983 = vsub.s32 1, %v1982
    %v1984 = vrot.slane %v1975, %v1983
    %v1987 = vadd.f32 %v1943, %v1980
    %v1988 = vadd.f32 %v1944, %v1984
    %v1989 = vadd.f32 %v1945, %v1980
    %v1990 = vadd.f32 %v1946, %v1984
    %v1991 = vadd.f32 %v1947, %v1980
    %v1992 = vadd.f32 %v1948, %v1984
    %v1993 = vadd.f32 %v1949, %v1980
    %v1994 = vadd.f32 %v1950, %v1984
    %v1995 = vadd.f32 %v1951, %v1980
    %v1996 = vadd.f32 %v1952, %v1984
    %v1997 = vadd.f32 %v1953, %v1980
    %v1998 = vadd.f32 %v1954, %v1984
    %v1999 = vadd.f32 %v1955, %v1980
    %v2000 = vadd.f32 %v1956, %v1984
    %v2001 = vadd.f32 %v1957, %v1980
    %v2002 = vadd.f32 %v1958, %v1984
    %v2003 = vadd.f32 %v1959, %v1980
    %v2004 = vadd.f32 %v1960, %v1984
    %v2005 = vadd.f32 %v1961, %v1980
    %v2006 = vadd.f32 %v1962, %v1984
    %v2007 = vadd.f32 %v1963, %v1980
    %v2008 = vadd.f32 %v1964, %v1984
    %v2009 = vadd.f32 %v1965, %v1980
    %v2010 = vadd.f32 %v1966, %v1984
    %v2011 = vadd.f32 %v1967, %v1980
    %v2012 = vadd.f32 %v1968, %v1984
    %v2013 = vadd.f32 %v1969, %v1980
    %v2014 = vadd.f32 %v1970, %v1984
    %v2015 = vadd.f32 %v1971, %v1980
    %v2016 = vadd.f32 %v1972, %v1984
    %v2017 = vadd.f32 %v1973, %v1980
    %v2018 = vadd.f32 %v1974, %v1984
    %v2019 = vmax.f32 %v1987, 0.0
    %v2020 = vmax.f32 %v1988, 0.0
    %v2021 = vmax.f32 %v1989, 0.0
    %v2022 = vmax.f32 %v1990, 0.0
    %v2023 = vmax.f32 %v1991, 0.0
    %v2024 = vmax.f32 %v1992, 0.0
    %v2025 = vmax.f32 %v1993, 0.0
    %v2026 = vmax.f32 %v1994, 0.0
    %v2027 = vmax.f32 %v1995, 0.0
    %v2028 = vmax.f32 %v1996, 0.0
    %v2029 = vmax.f32 %v1997, 0.0
    %v2030 = vmax.f32 %v1998, 0.0
    %v2031 = vmax.f32 %v1999, 0.0
    %v2032 = vmax.f32 %v2000, 0.0
    %v2033 = vmax.f32 %v2001, 0.0
    %v2034 = vmax.f32 %v2002, 0.0
    %v2035 = vmax.f32 %v2003, 0.0
    %v2036 = vmax.f32 %v2004, 0.0
    %v2037 = vmax.f32 %v2005, 0.0
    %v2038 = vmax.f32 %v2006, 0.0
    %v2039 = vmax.f32 %v2007, 0.0
    %v2040 = vmax.f32 %v2008, 0.0
    %v2041 = vmax.f32 %v2009, 0.0
    %v2042 = vmax.f32 %v2010, 0.0
    %v2043 = vmax.f32 %v2011, 0.0
    %v2044 = vmax.f32 %v2012, 0.0
    %v2045 = vmax.f32 %v2013, 0.0
    %v2046 = vmax.f32 %v2014, 0.0
    %v2047 = vmax.f32 %v2015, 0.0
    %v2048 = vmax.f32 %v2016, 0.0
    %v2049 = vmax.f32 %v2017, 0.0
    %v2050 = vmax.f32 %v2018, 0.0
    %v2051 = vpack.c.bf16 %v2021, %v2019
    %v2052 = vpack.c.bf16 %v2022, %v2020
    %v2053 = vpack.c.bf16 %v2025, %v2023
    %v2054 = vpack.c.bf16 %v2026, %v2024
    %v2055 = vpack.c.bf16 %v2029, %v2027
    %v2056 = vpack.c.bf16 %v2030, %v2028
    %v2057 = vpack.c.bf16 %v2033, %v2031
    %v2058 = vpack.c.bf16 %v2034, %v2032
    %v2059 = vpack.c.bf16 %v2037, %v2035
    %v2060 = vpack.c.bf16 %v2038, %v2036
    %v2061 = vpack.c.bf16 %v2041, %v2039
    %v2062 = vpack.c.bf16 %v2042, %v2040
    %v2063 = vpack.c.bf16 %v2045, %v2043
    %v2064 = vpack.c.bf16 %v2046, %v2044
    %v2065 = vpack.c.bf16 %v2049, %v2047
    %v2066 = vpack.c.bf16 %v2050, %v2048
    %v2067 = vld [vmem:[#allocation17] sm:$0xff]
    %v2068 = vld [vmem:[#allocation17 + $0x8] sm:$0xff]
    %v2069 = vld [vmem:[#allocation17 + $0x10] sm:$0xff]
    %v2070 = vld [vmem:[#allocation17 + $0x18] sm:$0xff]
    %v2071 = vld [vmem:[#allocation17 + $0x20] sm:$0xff]
    %v2072 = vld [vmem:[#allocation17 + $0x28] sm:$0xff]
    %v2073 = vld [vmem:[#allocation17 + $0x30] sm:$0xff]
    %v2074 = vld [vmem:[#allocation17 + $0x38] sm:$0xff]
    %v2075 = vld [vmem:[#allocation17 + $0x40] sm:$0xff]
    %v2076 = vld [vmem:[#allocation17 + $0x48] sm:$0xff]
    %v2077 = vld [vmem:[#allocation17 + $0x50] sm:$0xff]
    %v2078 = vld [vmem:[#allocation17 + $0x58] sm:$0xff]
    %v2079 = vld [vmem:[#allocation17 + $0x60] sm:$0xff]
    %v2080 = vld [vmem:[#allocation17 + $0x68] sm:$0xff]
    %v2081 = vld [vmem:[#allocation17 + $0x70] sm:$0xff]
    %v2082 = vld [vmem:[#allocation17 + $0x78] sm:$0xff]
    %v2083 = vld [vmem:[#allocation17 + $0x80] sm:$0xff]
    %v2084 = vld [vmem:[#allocation17 + $0x88] sm:$0xff]
    %v2085 = vld [vmem:[#allocation17 + $0x90] sm:$0xff]
    %v2086 = vld [vmem:[#allocation17 + $0x98] sm:$0xff]
    %v2087 = vld [vmem:[#allocation17 + $0xa0] sm:$0xff]
    %v2088 = vld [vmem:[#allocation17 + $0xa8] sm:$0xff]
    %v2089 = vld [vmem:[#allocation17 + $0xb0] sm:$0xff]
    %v2090 = vld [vmem:[#allocation17 + $0xb8] sm:$0xff]
    %v2091 = vld [vmem:[#allocation17 + $0xc0] sm:$0xff]
    %v2092 = vld [vmem:[#allocation17 + $0xc8] sm:$0xff]
    %v2093 = vld [vmem:[#allocation17 + $0xd0] sm:$0xff]
    %v2094 = vld [vmem:[#allocation17 + $0xd8] sm:$0xff]
    %v2095 = vld [vmem:[#allocation17 + $0xe0] sm:$0xff]
    %v2096 = vld [vmem:[#allocation17 + $0xe8] sm:$0xff]
    %v2097 = vld [vmem:[#allocation17 + $0xf0] sm:$0xff]
    %v2098 = vld [vmem:[#allocation17 + $0xf8] sm:$0xff]
    %v2099 = vld [vmem:[#allocation17 + $0x100] sm:$0xff]
    %v2100 = vld [vmem:[#allocation17 + $0x108] sm:$0xff]
    %v2101 = vld [vmem:[#allocation17 + $0x110] sm:$0xff]
    %v2102 = vld [vmem:[#allocation17 + $0x118] sm:$0xff]
    %v2103 = vld [vmem:[#allocation17 + $0x120] sm:$0xff]
    %v2104 = vld [vmem:[#allocation17 + $0x128] sm:$0xff]
    %v2105 = vld [vmem:[#allocation17 + $0x130] sm:$0xff]
    %v2106 = vld [vmem:[#allocation17 + $0x138] sm:$0xff]
    %v2107 = vld [vmem:[#allocation17 + $0x140] sm:$0xff]
    %v2108 = vld [vmem:[#allocation17 + $0x148] sm:$0xff]
    %v2109 = vld [vmem:[#allocation17 + $0x150] sm:$0xff]
    %v2110 = vld [vmem:[#allocation17 + $0x158] sm:$0xff]
    %v2111 = vld [vmem:[#allocation17 + $0x160] sm:$0xff]
    %v2112 = vld [vmem:[#allocation17 + $0x168] sm:$0xff]
    %v2113 = vld [vmem:[#allocation17 + $0x170] sm:$0xff]
    %v2114 = vld [vmem:[#allocation17 + $0x178] sm:$0xff]
    %v2115 = vld [vmem:[#allocation17 + $0x180] sm:$0xff]
    %v2116 = vld [vmem:[#allocation17 + $0x188] sm:$0xff]
    %v2117 = vld [vmem:[#allocation17 + $0x190] sm:$0xff]
    %v2118 = vld [vmem:[#allocation17 + $0x198] sm:$0xff]
    %v2119 = vld [vmem:[#allocation17 + $0x1a0] sm:$0xff]
    %v2120 = vld [vmem:[#allocation17 + $0x1a8] sm:$0xff]
    %v2121 = vld [vmem:[#allocation17 + $0x1b0] sm:$0xff]
    %v2122 = vld [vmem:[#allocation17 + $0x1b8] sm:$0xff]
    %v2123 = vld [vmem:[#allocation17 + $0x1c0] sm:$0xff]
    %v2124 = vld [vmem:[#allocation17 + $0x1c8] sm:$0xff]
    %v2125 = vld [vmem:[#allocation17 + $0x1d0] sm:$0xff]
    %v2126 = vld [vmem:[#allocation17 + $0x1d8] sm:$0xff]
    %v2127 = vld [vmem:[#allocation17 + $0x1e0] sm:$0xff]
    %v2128 = vld [vmem:[#allocation17 + $0x1e8] sm:$0xff]
    %v2129 = vld [vmem:[#allocation17 + $0x1f0] sm:$0xff]
    %v2130 = vld [vmem:[#allocation17 + $0x1f8] sm:$0xff]
    %v2195 = vunpack.c.l.b16 %v2067
    %v2196 = vunpack.c.h.b16 %v2067
    %v2197 = vunpack.c.l.b16 %v2068
    %v2198 = vunpack.c.h.b16 %v2068
    %v2199 = vunpack.c.l.b16 %v2069
    %v2200 = vunpack.c.h.b16 %v2069
    %v2201 = vunpack.c.l.b16 %v2070
    %v2202 = vunpack.c.h.b16 %v2070
    %v2203 = vunpack.c.l.b16 %v2071
    %v2204 = vunpack.c.h.b16 %v2071
    %v2205 = vunpack.c.l.b16 %v2072
    %v2206 = vunpack.c.h.b16 %v2072
    %v2207 = vunpack.c.l.b16 %v2073
    %v2208 = vunpack.c.h.b16 %v2073
    %v2209 = vunpack.c.l.b16 %v2074
    %v2210 = vunpack.c.h.b16 %v2074
    %v2211 = vunpack.c.l.b16 %v2075
    %v2212 = vunpack.c.h.b16 %v2075
    %v2213 = vunpack.c.l.b16 %v2076
    %v2214 = vunpack.c.h.b16 %v2076
    %v2215 = vunpack.c.l.b16 %v2077
    %v2216 = vunpack.c.h.b16 %v2077
    %v2217 = vunpack.c.l.b16 %v2078
    %v2218 = vunpack.c.h.b16 %v2078
    %v2219 = vunpack.c.l.b16 %v2079
    %v2220 = vunpack.c.h.b16 %v2079
    %v2221 = vunpack.c.l.b16 %v2080
    %v2222 = vunpack.c.h.b16 %v2080
    %v2223 = vunpack.c.l.b16 %v2081
    %v2224 = vunpack.c.h.b16 %v2081
    %v2225 = vunpack.c.l.b16 %v2082
    %v2226 = vunpack.c.h.b16 %v2082
    %v2227 = vunpack.c.l.b16 %v2083
    %v2228 = vunpack.c.h.b16 %v2083
    %v2229 = vunpack.c.l.b16 %v2084
    %v2230 = vunpack.c.h.b16 %v2084
    %v2231 = vunpack.c.l.b16 %v2085
    %v2232 = vunpack.c.h.b16 %v2085
    %v2233 = vunpack.c.l.b16 %v2086
    %v2234 = vunpack.c.h.b16 %v2086
    %v2235 = vunpack.c.l.b16 %v2087
    %v2236 = vunpack.c.h.b16 %v2087
    %v2237 = vunpack.c.l.b16 %v2088
    %v2238 = vunpack.c.h.b16 %v2088
    %v2239 = vunpack.c.l.b16 %v2089
    %v2240 = vunpack.c.h.b16 %v2089
    %v2241 = vunpack.c.l.b16 %v2090
    %v2242 = vunpack.c.h.b16 %v2090
    %v2243 = vunpack.c.l.b16 %v2091
    %v2244 = vunpack.c.h.b16 %v2091
    %v2245 = vunpack.c.l.b16 %v2092
    %v2246 = vunpack.c.h.b16 %v2092
    %v2247 = vunpack.c.l.b16 %v2093
    %v2248 = vunpack.c.h.b16 %v2093
    %v2249 = vunpack.c.l.b16 %v2094
    %v2250 = vunpack.c.h.b16 %v2094
    %v2251 = vunpack.c.l.b16 %v2095
    %v2252 = vunpack.c.h.b16 %v2095
    %v2253 = vunpack.c.l.b16 %v2096
    %v2254 = vunpack.c.h.b16 %v2096
    %v2255 = vunpack.c.l.b16 %v2097
    %v2256 = vunpack.c.h.b16 %v2097
    %v2257 = vunpack.c.l.b16 %v2098
    %v2258 = vunpack.c.h.b16 %v2098
    %v2259 = vunpack.c.l.b16 %v2099
    %v2260 = vunpack.c.h.b16 %v2099
    %v2261 = vunpack.c.l.b16 %v2100
    %v2262 = vunpack.c.h.b16 %v2100
    %v2263 = vunpack.c.l.b16 %v2101
    %v2264 = vunpack.c.h.b16 %v2101
    %v2265 = vunpack.c.l.b16 %v2102
    %v2266 = vunpack.c.h.b16 %v2102
    %v2267 = vunpack.c.l.b16 %v2103
    %v2268 = vunpack.c.h.b16 %v2103
    %v2269 = vunpack.c.l.b16 %v2104
    %v2270 = vunpack.c.h.b16 %v2104
    %v2271 = vunpack.c.l.b16 %v2105
    %v2272 = vunpack.c.h.b16 %v2105
    %v2273 = vunpack.c.l.b16 %v2106
    %v2274 = vunpack.c.h.b16 %v2106
    %v2275 = vunpack.c.l.b16 %v2107
    %v2276 = vunpack.c.h.b16 %v2107
    %v2277 = vunpack.c.l.b16 %v2108
    %v2278 = vunpack.c.h.b16 %v2108
    %v2279 = vunpack.c.l.b16 %v2109
    %v2280 = vunpack.c.h.b16 %v2109
    %v2281 = vunpack.c.l.b16 %v2110
    %v2282 = vunpack.c.h.b16 %v2110
    %v2283 = vunpack.c.l.b16 %v2111
    %v2284 = vunpack.c.h.b16 %v2111
    %v2285 = vunpack.c.l.b16 %v2112
    %v2286 = vunpack.c.h.b16 %v2112
    %v2287 = vunpack.c.l.b16 %v2113
    %v2288 = vunpack.c.h.b16 %v2113
    %v2289 = vunpack.c.l.b16 %v2114
    %v2290 = vunpack.c.h.b16 %v2114
    %v2291 = vunpack.c.l.b16 %v2115
    %v2292 = vunpack.c.h.b16 %v2115
    %v2293 = vunpack.c.l.b16 %v2116
    %v2294 = vunpack.c.h.b16 %v2116
    %v2295 = vunpack.c.l.b16 %v2117
    %v2296 = vunpack.c.h.b16 %v2117
    %v2297 = vunpack.c.l.b16 %v2118
    %v2298 = vunpack.c.h.b16 %v2118
    %v2299 = vunpack.c.l.b16 %v2119
    %v2300 = vunpack.c.h.b16 %v2119
    %v2301 = vunpack.c.l.b16 %v2120
    %v2302 = vunpack.c.h.b16 %v2120
    %v2303 = vunpack.c.l.b16 %v2121
    %v2304 = vunpack.c.h.b16 %v2121
    %v2305 = vunpack.c.l.b16 %v2122
    %v2306 = vunpack.c.h.b16 %v2122
    %v2307 = vunpack.c.l.b16 %v2123
    %v2308 = vunpack.c.h.b16 %v2123
    %v2309 = vunpack.c.l.b16 %v2124
    %v2310 = vunpack.c.h.b16 %v2124
    %v2311 = vunpack.c.l.b16 %v2125
    %v2312 = vunpack.c.h.b16 %v2125
    %v2313 = vunpack.c.l.b16 %v2126
    %v2314 = vunpack.c.h.b16 %v2126
    %v2315 = vunpack.c.l.b16 %v2127
    %v2316 = vunpack.c.h.b16 %v2127
    %v2317 = vunpack.c.l.b16 %v2128
    %v2318 = vunpack.c.h.b16 %v2128
    %v2319 = vunpack.c.l.b16 %v2129
    %v2320 = vunpack.c.h.b16 %v2129
    %v2321 = vunpack.c.l.b16 %v2130
    %v2322 = vunpack.c.h.b16 %v2130
    %v2323 = vpack.c.b16 %v2199, %v2195
    %v2324 = vpack.c.b16 %v2200, %v2196
    %v2325 = vpack.c.b16 %v2201, %v2197
    %v2326 = vpack.c.b16 %v2202, %v2198
    %v2327 = vpack.c.b16 %v2207, %v2203
    %v2328 = vpack.c.b16 %v2208, %v2204
    %v2329 = vpack.c.b16 %v2209, %v2205
    %v2330 = vpack.c.b16 %v2210, %v2206
    %v2331 = vpack.c.b16 %v2215, %v2211
    %v2332 = vpack.c.b16 %v2216, %v2212
    %v2333 = vpack.c.b16 %v2217, %v2213
    %v2334 = vpack.c.b16 %v2218, %v2214
    %v2335 = vpack.c.b16 %v2223, %v2219
    %v2336 = vpack.c.b16 %v2224, %v2220
    %v2337 = vpack.c.b16 %v2225, %v2221
    %v2338 = vpack.c.b16 %v2226, %v2222
    %v2339 = vpack.c.b16 %v2231, %v2227
    %v2340 = vpack.c.b16 %v2232, %v2228
    %v2341 = vpack.c.b16 %v2233, %v2229
    %v2342 = vpack.c.b16 %v2234, %v2230
    %v2343 = vpack.c.b16 %v2239, %v2235
    %v2344 = vpack.c.b16 %v2240, %v2236
    %v2345 = vpack.c.b16 %v2241, %v2237
    %v2346 = vpack.c.b16 %v2242, %v2238
    %v2347 = vpack.c.b16 %v2247, %v2243
    %v2348 = vpack.c.b16 %v2248, %v2244
    %v2349 = vpack.c.b16 %v2249, %v2245
    %v2350 = vpack.c.b16 %v2250, %v2246
    %v2351 = vpack.c.b16 %v2255, %v2251
    %v2352 = vpack.c.b16 %v2256, %v2252
    %v2353 = vpack.c.b16 %v2257, %v2253
    %v2354 = vpack.c.b16 %v2258, %v2254
    %v2355 = vpack.c.b16 %v2263, %v2259
    %v2356 = vpack.c.b16 %v2264, %v2260
    %v2357 = vpack.c.b16 %v2265, %v2261
    %v2358 = vpack.c.b16 %v2266, %v2262
    %v2359 = vpack.c.b16 %v2271, %v2267
    %v2360 = vpack.c.b16 %v2272, %v2268
    %v2361 = vpack.c.b16 %v2273, %v2269
    %v2362 = vpack.c.b16 %v2274, %v2270
    %v2363 = vpack.c.b16 %v2279, %v2275
    %v2364 = vpack.c.b16 %v2280, %v2276
    %v2365 = vpack.c.b16 %v2281, %v2277
    %v2366 = vpack.c.b16 %v2282, %v2278
    %v2367 = vpack.c.b16 %v2287, %v2283
    %v2368 = vpack.c.b16 %v2288, %v2284
    %v2369 = vpack.c.b16 %v2289, %v2285
    %v2370 = vpack.c.b16 %v2290, %v2286
    %v2371 = vpack.c.b16 %v2295, %v2291
    %v2372 = vpack.c.b16 %v2296, %v2292
    %v2373 = vpack.c.b16 %v2297, %v2293
    %v2374 = vpack.c.b16 %v2298, %v2294
    %v2375 = vpack.c.b16 %v2303, %v2299
    %v2376 = vpack.c.b16 %v2304, %v2300
    %v2377 = vpack.c.b16 %v2305, %v2301
    %v2378 = vpack.c.b16 %v2306, %v2302
    %v2379 = vpack.c.b16 %v2311, %v2307
    %v2380 = vpack.c.b16 %v2312, %v2308
    %v2381 = vpack.c.b16 %v2313, %v2309
    %v2382 = vpack.c.b16 %v2314, %v2310
    %v2383 = vpack.c.b16 %v2319, %v2315
    %v2384 = vpack.c.b16 %v2320, %v2316
    %v2385 = vpack.c.b16 %v2321, %v2317
    %v2386 = vpack.c.b16 %v2322, %v2318
    %2451 = vmatprep.subr.bf16.mxu0 %v2352
    %2452 = vmatpush1.bf16.msra.mxu0 %v2351
    %2453 = vmatprep.subr.bf16.mxu0 %v2348
    %2454 = vmatpush1.bf16.msra.mxu0 %v2347
    %2455 = vmatprep.subr.bf16.mxu0 %v2344
    %2456 = vmatpush1.bf16.msra.mxu0 %v2343
    %2457 = vmatprep.subr.bf16.mxu0 %v2340
    %2458 = vmatpush1.bf16.msra.mxu0 %v2339
    %2459 = vmatprep.subr.bf16.mxu0 %v2336
    %2460 = vmatpush1.bf16.msra.mxu0 %v2335
    %2461 = vmatprep.subr.bf16.mxu0 %v2332
    %2462 = vmatpush1.bf16.msra.mxu0 %v2331
    %2463 = vmatprep.subr.bf16.mxu0 %v2328
    %2464 = vmatpush1.bf16.msra.mxu0 %v2327
    %2465 = vmatprep.subr.bf16.mxu0 %v2324
    %2466 = vmatpush1.bf16.msra.mxu0 %v2323
    %2467 = vmatprep.subr.bf16.mxu0 %v2384
    %2468 = vmatpush2.bf16.msra.mxu0 %v2383
    %2469 = vmatprep.subr.bf16.mxu0 %v2380
    %2470 = vmatpush2.bf16.msra.mxu0 %v2379
    %2471 = vmatprep.subr.bf16.mxu0 %v2376
    %2472 = vmatpush2.bf16.msra.mxu0 %v2375
    %2473 = vmatprep.subr.bf16.mxu0 %v2372
    %2474 = vmatpush2.bf16.msra.mxu0 %v2371
    %2475 = vmatprep.subr.bf16.mxu0 %v2368
    %2476 = vmatpush2.bf16.msra.mxu0 %v2367
    %2477 = vmatprep.subr.bf16.mxu0 %v2364
    %2478 = vmatpush2.bf16.msra.mxu0 %v2363
    %2479 = vmatprep.subr.bf16.mxu0 %v2360
    %2480 = vmatpush2.bf16.msra.mxu0 %v2359
    %2481 = vmatprep.subr.bf16.mxu0 %v2356
    %2482 = vmatpush2.bf16.msra.mxu0 %v2355
    %2483 = vmatprep.mubr.bf16.mxu0 %v2052
    %2484 = vmatmul.mubr.bf16.gmra.mxu0 %v2051
    %v2485 = vpop.f32.mrf.mxu0
    %v2486 = vadd.f32 0.0, %v2485
    %v2487 = vpop.f32.mrf.mxu0
    %v2488 = vadd.f32 0.0, %v2487
    %v2489 = vpop.f32.mrf.mxu0
    %v2490 = vadd.f32 0.0, %v2489
    %v2491 = vpop.f32.mrf.mxu0
    %v2492 = vadd.f32 0.0, %v2491
    %2493 = vmatprep.mubr.bf16.mxu0 %v2054
    %2494 = vmatmul.mubr.bf16.gmra.mxu0 %v2053
    %v2495 = vpop.f32.mrf.mxu0
    %v2496 = vadd.f32 0.0, %v2495
    %v2497 = vpop.f32.mrf.mxu0
    %v2498 = vadd.f32 0.0, %v2497
    %v2499 = vpop.f32.mrf.mxu0
    %v2500 = vadd.f32 0.0, %v2499
    %v2501 = vpop.f32.mrf.mxu0
    %v2502 = vadd.f32 0.0, %v2501
    %2503 = vmatprep.mubr.bf16.mxu0 %v2056
    %2504 = vmatmul.mubr.bf16.gmra.mxu0 %v2055
    %v2505 = vpop.f32.mrf.mxu0
    %v2506 = vadd.f32 0.0, %v2505
    %v2507 = vpop.f32.mrf.mxu0
    %v2508 = vadd.f32 0.0, %v2507
    %v2509 = vpop.f32.mrf.mxu0
    %v2510 = vadd.f32 0.0, %v2509
    %v2511 = vpop.f32.mrf.mxu0
    %v2512 = vadd.f32 0.0, %v2511
    %2513 = vmatprep.mubr.bf16.mxu0 %v2058
    %2514 = vmatmul.mubr.bf16.gmra.mxu0 %v2057
    %v2515 = vpop.f32.mrf.mxu0
    %v2516 = vadd.f32 0.0, %v2515
    %v2517 = vpop.f32.mrf.mxu0
    %v2518 = vadd.f32 0.0, %v2517
    %v2519 = vpop.f32.mrf.mxu0
    %v2520 = vadd.f32 0.0, %v2519
    %v2521 = vpop.f32.mrf.mxu0
    %v2522 = vadd.f32 0.0, %v2521
    %2523 = vmatprep.mubr.bf16.mxu0 %v2060
    %2524 = vmatmul.mubr.bf16.gmra.mxu0 %v2059
    %v2525 = vpop.f32.mrf.mxu0
    %v2526 = vadd.f32 0.0, %v2525
    %v2527 = vpop.f32.mrf.mxu0
    %v2528 = vadd.f32 0.0, %v2527
    %v2529 = vpop.f32.mrf.mxu0
    %v2530 = vadd.f32 0.0, %v2529
    %v2531 = vpop.f32.mrf.mxu0
    %v2532 = vadd.f32 0.0, %v2531
    %2533 = vmatprep.mubr.bf16.mxu0 %v2062
    %2534 = vmatmul.mubr.bf16.gmra.mxu0 %v2061
    %v2535 = vpop.f32.mrf.mxu0
    %v2536 = vadd.f32 0.0, %v2535
    %v2537 = vpop.f32.mrf.mxu0
    %v2538 = vadd.f32 0.0, %v2537
    %v2539 = vpop.f32.mrf.mxu0
    %v2540 = vadd.f32 0.0, %v2539
    %v2541 = vpop.f32.mrf.mxu0
    %v2542 = vadd.f32 0.0, %v2541
    %2543 = vmatprep.mubr.bf16.mxu0 %v2064
    %2544 = vmatmul.mubr.bf16.gmra.mxu0 %v2063
    %v2545 = vpop.f32.mrf.mxu0
    %v2546 = vadd.f32 0.0, %v2545
    %v2547 = vpop.f32.mrf.mxu0
    %v2548 = vadd.f32 0.0, %v2547
    %v2549 = vpop.f32.mrf.mxu0
    %v2550 = vadd.f32 0.0, %v2549
    %v2551 = vpop.f32.mrf.mxu0
    %v2552 = vadd.f32 0.0, %v2551
    %2553 = vmatprep.mubr.bf16.mxu0 %v2066
    %2554 = vmatmul.mubr.bf16.gmra.mxu0 %v2065
    %v2555 = vpop.f32.mrf.mxu0
    %v2556 = vadd.f32 0.0, %v2555
    %v2557 = vpop.f32.mrf.mxu0
    %v2558 = vadd.f32 0.0, %v2557
    %v2559 = vpop.f32.mrf.mxu0
    %v2560 = vadd.f32 0.0, %v2559
    %v2561 = vpop.f32.mrf.mxu0
    %v2562 = vadd.f32 0.0, %v2561
    %2563 = vdwg.mxu0
    %2564 = vmatprep.subr.bf16.mxu0 %v2354
    %2565 = vmatpush1.bf16.msra.mxu0 %v2353
    %2566 = vmatprep.subr.bf16.mxu0 %v2350
    %2567 = vmatpush1.bf16.msra.mxu0 %v2349
    %2568 = vmatprep.subr.bf16.mxu0 %v2346
    %2569 = vmatpush1.bf16.msra.mxu0 %v2345
    %2570 = vmatprep.subr.bf16.mxu0 %v2342
    %2571 = vmatpush1.bf16.msra.mxu0 %v2341
    %2572 = vmatprep.subr.bf16.mxu0 %v2338
    %2573 = vmatpush1.bf16.msra.mxu0 %v2337
    %2574 = vmatprep.subr.bf16.mxu0 %v2334
    %2575 = vmatpush1.bf16.msra.mxu0 %v2333
    %2576 = vmatprep.subr.bf16.mxu0 %v2330
    %2577 = vmatpush1.bf16.msra.mxu0 %v2329
    %2578 = vmatprep.subr.bf16.mxu0 %v2326
    %2579 = vmatpush1.bf16.msra.mxu0 %v2325
    %2580 = vmatprep.subr.bf16.mxu0 %v2386
    %2581 = vmatpush2.bf16.msra.mxu0 %v2385
    %2582 = vmatprep.subr.bf16.mxu0 %v2382
    %2583 = vmatpush2.bf16.msra.mxu0 %v2381
    %2584 = vmatprep.subr.bf16.mxu0 %v2378
    %2585 = vmatpush2.bf16.msra.mxu0 %v2377
    %2586 = vmatprep.subr.bf16.mxu0 %v2374
    %2587 = vmatpush2.bf16.msra.mxu0 %v2373
    %2588 = vmatprep.subr.bf16.mxu0 %v2370
    %2589 = vmatpush2.bf16.msra.mxu0 %v2369
    %2590 = vmatprep.subr.bf16.mxu0 %v2366
    %2591 = vmatpush2.bf16.msra.mxu0 %v2365
    %2592 = vmatprep.subr.bf16.mxu0 %v2362
    %2593 = vmatpush2.bf16.msra.mxu0 %v2361
    %2594 = vmatprep.subr.bf16.mxu0 %v2358
    %2595 = vmatpush2.bf16.msra.mxu0 %v2357
    %2596 = vmatprep.mubr.bf16.mxu0 %v2052
    %2597 = vmatmul.mubr.bf16.gmra.mxu0 %v2051
    %v2598 = vpop.f32.mrf.mxu0
    %v2599 = vadd.f32 0.0, %v2598
    %v2600 = vpop.f32.mrf.mxu0
    %v2601 = vadd.f32 0.0, %v2600
    %v2602 = vpop.f32.mrf.mxu0
    %v2603 = vadd.f32 0.0, %v2602
    %v2604 = vpop.f32.mrf.mxu0
    %v2605 = vadd.f32 0.0, %v2604
    %2606 = vmatprep.mubr.bf16.mxu0 %v2054
    %2607 = vmatmul.mubr.bf16.gmra.mxu0 %v2053
    %v2608 = vpop.f32.mrf.mxu0
    %v2609 = vadd.f32 0.0, %v2608
    %v2610 = vpop.f32.mrf.mxu0
    %v2611 = vadd.f32 0.0, %v2610
    %v2612 = vpop.f32.mrf.mxu0
    %v2613 = vadd.f32 0.0, %v2612
    %v2614 = vpop.f32.mrf.mxu0
    %v2615 = vadd.f32 0.0, %v2614
    %2616 = vmatprep.mubr.bf16.mxu0 %v2056
    %2617 = vmatmul.mubr.bf16.gmra.mxu0 %v2055
    %v2618 = vpop.f32.mrf.mxu0
    %v2619 = vadd.f32 0.0, %v2618
    %v2620 = vpop.f32.mrf.mxu0
    %v2621 = vadd.f32 0.0, %v2620
    %v2622 = vpop.f32.mrf.mxu0
    %v2623 = vadd.f32 0.0, %v2622
    %v2624 = vpop.f32.mrf.mxu0
    %v2625 = vadd.f32 0.0, %v2624
    %2626 = vmatprep.mubr.bf16.mxu0 %v2058
    %2627 = vmatmul.mubr.bf16.gmra.mxu0 %v2057
    %v2628 = vpop.f32.mrf.mxu0
    %v2629 = vadd.f32 0.0, %v2628
    %v2630 = vpop.f32.mrf.mxu0
    %v2631 = vadd.f32 0.0, %v2630
    %v2632 = vpop.f32.mrf.mxu0
    %v2633 = vadd.f32 0.0, %v2632
    %v2634 = vpop.f32.mrf.mxu0
    %v2635 = vadd.f32 0.0, %v2634
    %2636 = vmatprep.mubr.bf16.mxu0 %v2060
    %2637 = vmatmul.mubr.bf16.gmra.mxu0 %v2059
    %v2638 = vpop.f32.mrf.mxu0
    %v2639 = vadd.f32 0.0, %v2638
    %v2640 = vpop.f32.mrf.mxu0
    %v2641 = vadd.f32 0.0, %v2640
    %v2642 = vpop.f32.mrf.mxu0
    %v2643 = vadd.f32 0.0, %v2642
    %v2644 = vpop.f32.mrf.mxu0
    %v2645 = vadd.f32 0.0, %v2644
    %2646 = vmatprep.mubr.bf16.mxu0 %v2062
    %2647 = vmatmul.mubr.bf16.gmra.mxu0 %v2061
    %v2648 = vpop.f32.mrf.mxu0
    %v2649 = vadd.f32 0.0, %v2648
    %v2650 = vpop.f32.mrf.mxu0
    %v2651 = vadd.f32 0.0, %v2650
    %v2652 = vpop.f32.mrf.mxu0
    %v2653 = vadd.f32 0.0, %v2652
    %v2654 = vpop.f32.mrf.mxu0
    %v2655 = vadd.f32 0.0, %v2654
    %2656 = vmatprep.mubr.bf16.mxu0 %v2064
    %2657 = vmatmul.mubr.bf16.gmra.mxu0 %v2063
    %v2658 = vpop.f32.mrf.mxu0
    %v2659 = vadd.f32 0.0, %v2658
    %v2660 = vpop.f32.mrf.mxu0
    %v2661 = vadd.f32 0.0, %v2660
    %v2662 = vpop.f32.mrf.mxu0
    %v2663 = vadd.f32 0.0, %v2662
    %v2664 = vpop.f32.mrf.mxu0
    %v2665 = vadd.f32 0.0, %v2664
    %2666 = vmatprep.mubr.bf16.mxu0 %v2066
    %2667 = vmatmul.mubr.bf16.gmra.mxu0 %v2065
    %v2668 = vpop.f32.mrf.mxu0
    %v2669 = vadd.f32 0.0, %v2668
    %v2670 = vpop.f32.mrf.mxu0
    %v2671 = vadd.f32 0.0, %v2670
    %v2672 = vpop.f32.mrf.mxu0
    %v2673 = vadd.f32 0.0, %v2672
    %v2674 = vpop.f32.mrf.mxu0
    %v2675 = vadd.f32 0.0, %v2674
    %2676 = vdwg.mxu0
    %v2677 = vld [vmem:[#allocation19] sm:$0xf]
    %v2679 = vlaneseq
    %v2680 = vshrl.u32 %v2679, 7
    %v2681 = vsub.s32 0, %v2680
    %v2682 = vrot.slane %v2677, %v2681
    %v2683 = vlaneseq
    %v2684 = vshrl.u32 %v2683, 7
    %v2685 = vsub.s32 1, %v2684
    %v2686 = vrot.slane %v2677, %v2685
    %v2687 = vlaneseq
    %v2688 = vshrl.u32 %v2687, 7
    %v2689 = vsub.s32 2, %v2688
    %v2690 = vrot.slane %v2677, %v2689
    %v2691 = vlaneseq
    %v2692 = vshrl.u32 %v2691, 7
    %v2693 = vsub.s32 3, %v2692
    %v2694 = vrot.slane %v2677, %v2693
    %v2699 = vmul.f32 %v2486, %v2682
    %v2700 = vmul.f32 %v2488, %v2686
    %v2701 = vmul.f32 %v2599, %v2690
    %v2702 = vmul.f32 %v2601, %v2694
    %v2703 = vmul.f32 %v2490, %v2682
    %v2704 = vmul.f32 %v2492, %v2686
    %v2705 = vmul.f32 %v2603, %v2690
    %v2706 = vmul.f32 %v2605, %v2694
    %v2707 = vmul.f32 %v2496, %v2682
    %v2708 = vmul.f32 %v2498, %v2686
    %v2709 = vmul.f32 %v2609, %v2690
    %v2710 = vmul.f32 %v2611, %v2694
    %v2711 = vmul.f32 %v2500, %v2682
    %v2712 = vmul.f32 %v2502, %v2686
    %v2713 = vmul.f32 %v2613, %v2690
    %v2714 = vmul.f32 %v2615, %v2694
    %v2715 = vmul.f32 %v2506, %v2682
    %v2716 = vmul.f32 %v2508, %v2686
    %v2717 = vmul.f32 %v2619, %v2690
    %v2718 = vmul.f32 %v2621, %v2694
    %v2719 = vmul.f32 %v2510, %v2682
    %v2720 = vmul.f32 %v2512, %v2686
    %v2721 = vmul.f32 %v2623, %v2690
    %v2722 = vmul.f32 %v2625, %v2694
    %v2723 = vmul.f32 %v2516, %v2682
    %v2724 = vmul.f32 %v2518, %v2686
    %v2725 = vmul.f32 %v2629, %v2690
    %v2726 = vmul.f32 %v2631, %v2694
    %v2727 = vmul.f32 %v2520, %v2682
    %v2728 = vmul.f32 %v2522, %v2686
    %v2729 = vmul.f32 %v2633, %v2690
    %v2730 = vmul.f32 %v2635, %v2694
    %v2731 = vmul.f32 %v2526, %v2682
    %v2732 = vmul.f32 %v2528, %v2686
    %v2733 = vmul.f32 %v2639, %v2690
    %v2734 = vmul.f32 %v2641, %v2694
    %v2735 = vmul.f32 %v2530, %v2682
    %v2736 = vmul.f32 %v2532, %v2686
    %v2737 = vmul.f32 %v2643, %v2690
    %v2738 = vmul.f32 %v2645, %v2694
    %v2739 = vmul.f32 %v2536, %v2682
    %v2740 = vmul.f32 %v2538, %v2686
    %v2741 = vmul.f32 %v2649, %v2690
    %v2742 = vmul.f32 %v2651, %v2694
    %v2743 = vmul.f32 %v2540, %v2682
    %v2744 = vmul.f32 %v2542, %v2686
    %v2745 = vmul.f32 %v2653, %v2690
    %v2746 = vmul.f32 %v2655, %v2694
    %v2747 = vmul.f32 %v2546, %v2682
    %v2748 = vmul.f32 %v2548, %v2686
    %v2749 = vmul.f32 %v2659, %v2690
    %v2750 = vmul.f32 %v2661, %v2694
    %v2751 = vmul.f32 %v2550, %v2682
    %v2752 = vmul.f32 %v2552, %v2686
    %v2753 = vmul.f32 %v2663, %v2690
    %v2754 = vmul.f32 %v2665, %v2694
    %v2755 = vmul.f32 %v2556, %v2682
    %v2756 = vmul.f32 %v2558, %v2686
    %v2757 = vmul.f32 %v2669, %v2690
    %v2758 = vmul.f32 %v2671, %v2694
    %v2759 = vmul.f32 %v2560, %v2682
    %v2760 = vmul.f32 %v2562, %v2686
    %v2761 = vmul.f32 %v2673, %v2690
    %v2762 = vmul.f32 %v2675, %v2694
    %v2763 = vld [vmem:[#allocation20] sm:$0xf]
    %v2765 = vlaneseq
    %v2766 = vshrl.u32 %v2765, 7
    %v2767 = vsub.s32 0, %v2766
    %v2768 = vrot.slane %v2763, %v2767
    %v2769 = vlaneseq
    %v2770 = vshrl.u32 %v2769, 7
    %v2771 = vsub.s32 1, %v2770
    %v2772 = vrot.slane %v2763, %v2771
    %v2773 = vlaneseq
    %v2774 = vshrl.u32 %v2773, 7
    %v2775 = vsub.s32 2, %v2774
    %v2776 = vrot.slane %v2763, %v2775
    %v2777 = vlaneseq
    %v2778 = vshrl.u32 %v2777, 7
    %v2779 = vsub.s32 3, %v2778
    %v2780 = vrot.slane %v2763, %v2779
    %v2785 = vadd.f32 %v2699, %v2768
    %v2786 = vadd.f32 %v2700, %v2772
    %v2787 = vadd.f32 %v2701, %v2776
    %v2788 = vadd.f32 %v2702, %v2780
    %v2789 = vadd.f32 %v2703, %v2768
    %v2790 = vadd.f32 %v2704, %v2772
    %v2791 = vadd.f32 %v2705, %v2776
    %v2792 = vadd.f32 %v2706, %v2780
    %v2793 = vadd.f32 %v2707, %v2768
    %v2794 = vadd.f32 %v2708, %v2772
    %v2795 = vadd.f32 %v2709, %v2776
    %v2796 = vadd.f32 %v2710, %v2780
    %v2797 = vadd.f32 %v2711, %v2768
    %v2798 = vadd.f32 %v2712, %v2772
    %v2799 = vadd.f32 %v2713, %v2776
    %v2800 = vadd.f32 %v2714, %v2780
    %v2801 = vadd.f32 %v2715, %v2768
    %v2802 = vadd.f32 %v2716, %v2772
    %v2803 = vadd.f32 %v2717, %v2776
    %v2804 = vadd.f32 %v2718, %v2780
    %v2805 = vadd.f32 %v2719, %v2768
    %v2806 = vadd.f32 %v2720, %v2772
    %v2807 = vadd.f32 %v2721, %v2776
    %v2808 = vadd.f32 %v2722, %v2780
    %v2809 = vadd.f32 %v2723, %v2768
    %v2810 = vadd.f32 %v2724, %v2772
    %v2811 = vadd.f32 %v2725, %v2776
    %v2812 = vadd.f32 %v2726, %v2780
    %v2813 = vadd.f32 %v2727, %v2768
    %v2814 = vadd.f32 %v2728, %v2772
    %v2815 = vadd.f32 %v2729, %v2776
    %v2816 = vadd.f32 %v2730, %v2780
    %v2817 = vadd.f32 %v2731, %v2768
    %v2818 = vadd.f32 %v2732, %v2772
    %v2819 = vadd.f32 %v2733, %v2776
    %v2820 = vadd.f32 %v2734, %v2780
    %v2821 = vadd.f32 %v2735, %v2768
    %v2822 = vadd.f32 %v2736, %v2772
    %v2823 = vadd.f32 %v2737, %v2776
    %v2824 = vadd.f32 %v2738, %v2780
    %v2825 = vadd.f32 %v2739, %v2768
    %v2826 = vadd.f32 %v2740, %v2772
    %v2827 = vadd.f32 %v2741, %v2776
    %v2828 = vadd.f32 %v2742, %v2780
    %v2829 = vadd.f32 %v2743, %v2768
    %v2830 = vadd.f32 %v2744, %v2772
    %v2831 = vadd.f32 %v2745, %v2776
    %v2832 = vadd.f32 %v2746, %v2780
    %v2833 = vadd.f32 %v2747, %v2768
    %v2834 = vadd.f32 %v2748, %v2772
    %v2835 = vadd.f32 %v2749, %v2776
    %v2836 = vadd.f32 %v2750, %v2780
    %v2837 = vadd.f32 %v2751, %v2768
    %v2838 = vadd.f32 %v2752, %v2772
    %v2839 = vadd.f32 %v2753, %v2776
    %v2840 = vadd.f32 %v2754, %v2780
    %v2841 = vadd.f32 %v2755, %v2768
    %v2842 = vadd.f32 %v2756, %v2772
    %v2843 = vadd.f32 %v2757, %v2776
    %v2844 = vadd.f32 %v2758, %v2780
    %v2845 = vadd.f32 %v2759, %v2768
    %v2846 = vadd.f32 %v2760, %v2772
    %v2847 = vadd.f32 %v2761, %v2776
    %v2848 = vadd.f32 %v2762, %v2780
    %v2849 = vmax.f32 %v2785, 0.0
    %v2850 = vmax.f32 %v2786, 0.0
    %v2851 = vmax.f32 %v2787, 0.0
    %v2852 = vmax.f32 %v2788, 0.0
    %v2853 = vmax.f32 %v2789, 0.0
    %v2854 = vmax.f32 %v2790, 0.0
    %v2855 = vmax.f32 %v2791, 0.0
    %v2856 = vmax.f32 %v2792, 0.0
    %v2857 = vmax.f32 %v2793, 0.0
    %v2858 = vmax.f32 %v2794, 0.0
    %v2859 = vmax.f32 %v2795, 0.0
    %v2860 = vmax.f32 %v2796, 0.0
    %v2861 = vmax.f32 %v2797, 0.0
    %v2862 = vmax.f32 %v2798, 0.0
    %v2863 = vmax.f32 %v2799, 0.0
    %v2864 = vmax.f32 %v2800, 0.0
    %v2865 = vmax.f32 %v2801, 0.0
    %v2866 = vmax.f32 %v2802, 0.0
    %v2867 = vmax.f32 %v2803, 0.0
    %v2868 = vmax.f32 %v2804, 0.0
    %v2869 = vmax.f32 %v2805, 0.0
    %v2870 = vmax.f32 %v2806, 0.0
    %v2871 = vmax.f32 %v2807, 0.0
    %v2872 = vmax.f32 %v2808, 0.0
    %v2873 = vmax.f32 %v2809, 0.0
    %v2874 = vmax.f32 %v2810, 0.0
    %v2875 = vmax.f32 %v2811, 0.0
    %v2876 = vmax.f32 %v2812, 0.0
    %v2877 = vmax.f32 %v2813, 0.0
    %v2878 = vmax.f32 %v2814, 0.0
    %v2879 = vmax.f32 %v2815, 0.0
    %v2880 = vmax.f32 %v2816, 0.0
    %v2881 = vmax.f32 %v2817, 0.0
    %v2882 = vmax.f32 %v2818, 0.0
    %v2883 = vmax.f32 %v2819, 0.0
    %v2884 = vmax.f32 %v2820, 0.0
    %v2885 = vmax.f32 %v2821, 0.0
    %v2886 = vmax.f32 %v2822, 0.0
    %v2887 = vmax.f32 %v2823, 0.0
    %v2888 = vmax.f32 %v2824, 0.0
    %v2889 = vmax.f32 %v2825, 0.0
    %v2890 = vmax.f32 %v2826, 0.0
    %v2891 = vmax.f32 %v2827, 0.0
    %v2892 = vmax.f32 %v2828, 0.0
    %v2893 = vmax.f32 %v2829, 0.0
    %v2894 = vmax.f32 %v2830, 0.0
    %v2895 = vmax.f32 %v2831, 0.0
    %v2896 = vmax.f32 %v2832, 0.0
    %v2897 = vmax.f32 %v2833, 0.0
    %v2898 = vmax.f32 %v2834, 0.0
    %v2899 = vmax.f32 %v2835, 0.0
    %v2900 = vmax.f32 %v2836, 0.0
    %v2901 = vmax.f32 %v2837, 0.0
    %v2902 = vmax.f32 %v2838, 0.0
    %v2903 = vmax.f32 %v2839, 0.0
    %v2904 = vmax.f32 %v2840, 0.0
    %v2905 = vmax.f32 %v2841, 0.0
    %v2906 = vmax.f32 %v2842, 0.0
    %v2907 = vmax.f32 %v2843, 0.0
    %v2908 = vmax.f32 %v2844, 0.0
    %v2909 = vmax.f32 %v2845, 0.0
    %v2910 = vmax.f32 %v2846, 0.0
    %v2911 = vmax.f32 %v2847, 0.0
    %v2912 = vmax.f32 %v2848, 0.0
    %v2913 = vpack.c.bf16 %v2853, %v2849
    %v2914 = vpack.c.bf16 %v2854, %v2850
    %v2915 = vpack.c.bf16 %v2855, %v2851
    %v2916 = vpack.c.bf16 %v2856, %v2852
    %v2917 = vpack.c.bf16 %v2861, %v2857
    %v2918 = vpack.c.bf16 %v2862, %v2858
    %v2919 = vpack.c.bf16 %v2863, %v2859
    %v2920 = vpack.c.bf16 %v2864, %v2860
    %v2921 = vpack.c.bf16 %v2869, %v2865
    %v2922 = vpack.c.bf16 %v2870, %v2866
    %v2923 = vpack.c.bf16 %v2871, %v2867
    %v2924 = vpack.c.bf16 %v2872, %v2868
    %v2925 = vpack.c.bf16 %v2877, %v2873
    %v2926 = vpack.c.bf16 %v2878, %v2874
    %v2927 = vpack.c.bf16 %v2879, %v2875
    %v2928 = vpack.c.bf16 %v2880, %v2876
    %v2929 = vpack.c.bf16 %v2885, %v2881
    %v2930 = vpack.c.bf16 %v2886, %v2882
    %v2931 = vpack.c.bf16 %v2887, %v2883
    %v2932 = vpack.c.bf16 %v2888, %v2884
    %v2933 = vpack.c.bf16 %v2893, %v2889
    %v2934 = vpack.c.bf16 %v2894, %v2890
    %v2935 = vpack.c.bf16 %v2895, %v2891
    %v2936 = vpack.c.bf16 %v2896, %v2892
    %v2937 = vpack.c.bf16 %v2901, %v2897
    %v2938 = vpack.c.bf16 %v2902, %v2898
    %v2939 = vpack.c.bf16 %v2903, %v2899
    %v2940 = vpack.c.bf16 %v2904, %v2900
    %v2941 = vpack.c.bf16 %v2909, %v2905
    %v2942 = vpack.c.bf16 %v2910, %v2906
    %v2943 = vpack.c.bf16 %v2911, %v2907
    %v2944 = vpack.c.bf16 %v2912, %v2908
    %v2945 = vld [vmem:[%s19] sm:$0xff]
    %v2946 = vld [vmem:[%s19 + $0x8] sm:$0xff]
    %v2947 = vld [vmem:[%s19 + $0x10] sm:$0xff]
    %v2948 = vld [vmem:[%s19 + $0x18] sm:$0xff]
    %v2949 = vld [vmem:[%s19 + $0x20] sm:$0xff]
    %v2950 = vld [vmem:[%s19 + $0x28] sm:$0xff]
    %v2951 = vld [vmem:[%s19 + $0x30] sm:$0xff]
    %v2952 = vld [vmem:[%s19 + $0x38] sm:$0xff]
    %v2953 = vld [vmem:[%s19 + $0x40] sm:$0xff]
    %v2954 = vld [vmem:[%s19 + $0x48] sm:$0xff]
    %v2955 = vld [vmem:[%s19 + $0x50] sm:$0xff]
    %v2956 = vld [vmem:[%s19 + $0x58] sm:$0xff]
    %v2957 = vld [vmem:[%s19 + $0x60] sm:$0xff]
    %v2958 = vld [vmem:[%s19 + $0x68] sm:$0xff]
    %v2959 = vld [vmem:[%s19 + $0x70] sm:$0xff]
    %v2960 = vld [vmem:[%s19 + $0x78] sm:$0xff]
    %v2977 = vunpack.c.l.b16 %v2945
    %v2978 = vunpack.c.h.b16 %v2945
    %v2979 = vunpack.c.l.b16 %v2946
    %v2980 = vunpack.c.h.b16 %v2946
    %v2981 = vunpack.c.l.b16 %v2947
    %v2982 = vunpack.c.h.b16 %v2947
    %v2983 = vunpack.c.l.b16 %v2948
    %v2984 = vunpack.c.h.b16 %v2948
    %v2985 = vunpack.c.l.b16 %v2949
    %v2986 = vunpack.c.h.b16 %v2949
    %v2987 = vunpack.c.l.b16 %v2950
    %v2988 = vunpack.c.h.b16 %v2950
    %v2989 = vunpack.c.l.b16 %v2951
    %v2990 = vunpack.c.h.b16 %v2951
    %v2991 = vunpack.c.l.b16 %v2952
    %v2992 = vunpack.c.h.b16 %v2952
    %v2993 = vunpack.c.l.b16 %v2953
    %v2994 = vunpack.c.h.b16 %v2953
    %v2995 = vunpack.c.l.b16 %v2954
    %v2996 = vunpack.c.h.b16 %v2954
    %v2997 = vunpack.c.l.b16 %v2955
    %v2998 = vunpack.c.h.b16 %v2955
    %v2999 = vunpack.c.l.b16 %v2956
    %v3000 = vunpack.c.h.b16 %v2956
    %v3001 = vunpack.c.l.b16 %v2957
    %v3002 = vunpack.c.h.b16 %v2957
    %v3003 = vunpack.c.l.b16 %v2958
    %v3004 = vunpack.c.h.b16 %v2958
    %v3005 = vunpack.c.l.b16 %v2959
    %v3006 = vunpack.c.h.b16 %v2959
    %v3007 = vunpack.c.l.b16 %v2960
    %v3008 = vunpack.c.h.b16 %v2960
    %v3009 = vpack.c.b16 %v2979, %v2977
    %v3010 = vpack.c.b16 %v2980, %v2978
    %v3011 = vpack.c.b16 %v2983, %v2981
    %v3012 = vpack.c.b16 %v2984, %v2982
    %v3013 = vpack.c.b16 %v2987, %v2985
    %v3014 = vpack.c.b16 %v2988, %v2986
    %v3015 = vpack.c.b16 %v2991, %v2989
    %v3016 = vpack.c.b16 %v2992, %v2990
    %v3017 = vpack.c.b16 %v2995, %v2993
    %v3018 = vpack.c.b16 %v2996, %v2994
    %v3019 = vpack.c.b16 %v2999, %v2997
    %v3020 = vpack.c.b16 %v3000, %v2998
    %v3021 = vpack.c.b16 %v3003, %v3001
    %v3022 = vpack.c.b16 %v3004, %v3002
    %v3023 = vpack.c.b16 %v3007, %v3005
    %v3024 = vpack.c.b16 %v3008, %v3006
    %3041 = vmatprep.subr.bf16.mxu0 %v3024
    %3042 = vmatpush1.bf16.msra.mxu0 %v3023
    %3043 = vmatprep.subr.bf16.mxu0 %v3022
    %3044 = vmatpush1.bf16.msra.mxu0 %v3021
    %3045 = vmatprep.subr.bf16.mxu0 %v3020
    %3046 = vmatpush1.bf16.msra.mxu0 %v3019
    %3047 = vmatprep.subr.bf16.mxu0 %v3018
    %3048 = vmatpush1.bf16.msra.mxu0 %v3017
    %3049 = vmatprep.subr.bf16.mxu0 %v3016
    %3050 = vmatpush1.bf16.msra.mxu0 %v3015
    %3051 = vmatprep.subr.bf16.mxu0 %v3014
    %3052 = vmatpush1.bf16.msra.mxu0 %v3013
    %3053 = vmatprep.subr.bf16.mxu0 %v3012
    %3054 = vmatpush1.bf16.msra.mxu0 %v3011
    %3055 = vmatprep.subr.bf16.mxu0 %v3010
    %3056 = vmatpush1.bf16.msra.mxu0 %v3009
    %3057 = vmatprep.subr.bf16.mxu0 0
    %3058 = vmatpush2.bf16.msra.mxu0 0
    %3059 = vmatprep.subr.bf16.mxu0 0
    %3060 = vmatpush2.bf16.msra.mxu0 0
    %3061 = vmatprep.subr.bf16.mxu0 0
    %3062 = vmatpush2.bf16.msra.mxu0 0
    %3063 = vmatprep.subr.bf16.mxu0 0
    %3064 = vmatpush2.bf16.msra.mxu0 0
    %3065 = vmatprep.subr.bf16.mxu0 0
    %3066 = vmatpush2.bf16.msra.mxu0 0
    %3067 = vmatprep.subr.bf16.mxu0 0
    %3068 = vmatpush2.bf16.msra.mxu0 0
    %3069 = vmatprep.subr.bf16.mxu0 0
    %3070 = vmatpush2.bf16.msra.mxu0 0
    %3071 = vmatprep.subr.bf16.mxu0 0
    %3072 = vmatpush2.bf16.msra.mxu0 0
    %3073 = vmatprep.mubr.bf16.mxu0 0
    %3074 = vmatmul.mubr.bf16.gmra.mxu0 %v2913
    %v3075 = vpop.f32.mrf.mxu0
    %v3076 = vadd.f32 0.0, %v3075
    %v3077 = vpop.f32.mrf.mxu0
    %v3078 = vadd.f32 0.0, %v3077
    %v3079 = vpop.f32.mrf.mxu0
    %v3080 = vadd.f32 0.0, %v3079
    %v3081 = vpop.f32.mrf.mxu0
    %v3082 = vadd.f32 0.0, %v3081
    %3083 = vmatprep.mubr.bf16.mxu0 0
    %3084 = vmatmul.mubr.bf16.gmra.mxu0 %v2917
    %v3085 = vpop.f32.mrf.mxu0
    %v3086 = vadd.f32 0.0, %v3085
    %v3087 = vpop.f32.mrf.mxu0
    %v3088 = vadd.f32 0.0, %v3087
    %v3089 = vpop.f32.mrf.mxu0
    %v3090 = vadd.f32 0.0, %v3089
    %v3091 = vpop.f32.mrf.mxu0
    %v3092 = vadd.f32 0.0, %v3091
    %3093 = vmatprep.mubr.bf16.mxu0 0
    %3094 = vmatmul.mubr.bf16.gmra.mxu0 %v2921
    %v3095 = vpop.f32.mrf.mxu0
    %v3096 = vadd.f32 0.0, %v3095
    %v3097 = vpop.f32.mrf.mxu0
    %v3098 = vadd.f32 0.0, %v3097
    %v3099 = vpop.f32.mrf.mxu0
    %v3100 = vadd.f32 0.0, %v3099
    %v3101 = vpop.f32.mrf.mxu0
    %v3102 = vadd.f32 0.0, %v3101
    %3103 = vmatprep.mubr.bf16.mxu0 0
    %3104 = vmatmul.mubr.bf16.gmra.mxu0 %v2925
    %v3105 = vpop.f32.mrf.mxu0
    %v3106 = vadd.f32 0.0, %v3105
    %v3107 = vpop.f32.mrf.mxu0
    %v3108 = vadd.f32 0.0, %v3107
    %v3109 = vpop.f32.mrf.mxu0
    %v3110 = vadd.f32 0.0, %v3109
    %v3111 = vpop.f32.mrf.mxu0
    %v3112 = vadd.f32 0.0, %v3111
    %3113 = vmatprep.mubr.bf16.mxu0 0
    %3114 = vmatmul.mubr.bf16.gmra.mxu0 %v2929
    %v3115 = vpop.f32.mrf.mxu0
    %v3116 = vadd.f32 0.0, %v3115
    %v3117 = vpop.f32.mrf.mxu0
    %v3118 = vadd.f32 0.0, %v3117
    %v3119 = vpop.f32.mrf.mxu0
    %v3120 = vadd.f32 0.0, %v3119
    %v3121 = vpop.f32.mrf.mxu0
    %v3122 = vadd.f32 0.0, %v3121
    %3123 = vmatprep.mubr.bf16.mxu0 0
    %3124 = vmatmul.mubr.bf16.gmra.mxu0 %v2933
    %v3125 = vpop.f32.mrf.mxu0
    %v3126 = vadd.f32 0.0, %v3125
    %v3127 = vpop.f32.mrf.mxu0
    %v3128 = vadd.f32 0.0, %v3127
    %v3129 = vpop.f32.mrf.mxu0
    %v3130 = vadd.f32 0.0, %v3129
    %v3131 = vpop.f32.mrf.mxu0
    %v3132 = vadd.f32 0.0, %v3131
    %3133 = vmatprep.mubr.bf16.mxu0 0
    %3134 = vmatmul.mubr.bf16.gmra.mxu0 %v2937
    %v3135 = vpop.f32.mrf.mxu0
    %v3136 = vadd.f32 0.0, %v3135
    %v3137 = vpop.f32.mrf.mxu0
    %v3138 = vadd.f32 0.0, %v3137
    %v3139 = vpop.f32.mrf.mxu0
    %v3140 = vadd.f32 0.0, %v3139
    %v3141 = vpop.f32.mrf.mxu0
    %v3142 = vadd.f32 0.0, %v3141
    %3143 = vmatprep.mubr.bf16.mxu0 0
    %3144 = vmatmul.mubr.bf16.gmra.mxu0 %v2941
    %v3145 = vpop.f32.mrf.mxu0
    %v3146 = vadd.f32 0.0, %v3145
    %v3147 = vpop.f32.mrf.mxu0
    %v3148 = vadd.f32 0.0, %v3147
    %v3149 = vpop.f32.mrf.mxu0
    %v3150 = vadd.f32 0.0, %v3149
    %v3151 = vpop.f32.mrf.mxu0
    %v3152 = vadd.f32 0.0, %v3151
    %3153 = vmatprep.mubr.bf16.mxu0 0
    %3154 = vmatmul.mubr.bf16.gmra.mxu0 %v2914
    %v3155 = vpop.f32.mrf.mxu0
    %v3156 = vadd.f32 0.0, %v3155
    %v3157 = vpop.f32.mrf.mxu0
    %v3158 = vadd.f32 0.0, %v3157
    %v3159 = vpop.f32.mrf.mxu0
    %v3160 = vadd.f32 0.0, %v3159
    %v3161 = vpop.f32.mrf.mxu0
    %v3162 = vadd.f32 0.0, %v3161
    %3163 = vmatprep.mubr.bf16.mxu0 0
    %3164 = vmatmul.mubr.bf16.gmra.mxu0 %v2918
    %v3165 = vpop.f32.mrf.mxu0
    %v3166 = vadd.f32 0.0, %v3165
    %v3167 = vpop.f32.mrf.mxu0
    %v3168 = vadd.f32 0.0, %v3167
    %v3169 = vpop.f32.mrf.mxu0
    %v3170 = vadd.f32 0.0, %v3169
    %v3171 = vpop.f32.mrf.mxu0
    %v3172 = vadd.f32 0.0, %v3171
    %3173 = vmatprep.mubr.bf16.mxu0 0
    %3174 = vmatmul.mubr.bf16.gmra.mxu0 %v2922
    %v3175 = vpop.f32.mrf.mxu0
    %v3176 = vadd.f32 0.0, %v3175
    %v3177 = vpop.f32.mrf.mxu0
    %v3178 = vadd.f32 0.0, %v3177
    %v3179 = vpop.f32.mrf.mxu0
    %v3180 = vadd.f32 0.0, %v3179
    %v3181 = vpop.f32.mrf.mxu0
    %v3182 = vadd.f32 0.0, %v3181
    %3183 = vmatprep.mubr.bf16.mxu0 0
    %3184 = vmatmul.mubr.bf16.gmra.mxu0 %v2926
    %v3185 = vpop.f32.mrf.mxu0
    %v3186 = vadd.f32 0.0, %v3185
    %v3187 = vpop.f32.mrf.mxu0
    %v3188 = vadd.f32 0.0, %v3187
    %v3189 = vpop.f32.mrf.mxu0
    %v3190 = vadd.f32 0.0, %v3189
    %v3191 = vpop.f32.mrf.mxu0
    %v3192 = vadd.f32 0.0, %v3191
    %3193 = vmatprep.mubr.bf16.mxu0 0
    %3194 = vmatmul.mubr.bf16.gmra.mxu0 %v2930
    %v3195 = vpop.f32.mrf.mxu0
    %v3196 = vadd.f32 0.0, %v3195
    %v3197 = vpop.f32.mrf.mxu0
    %v3198 = vadd.f32 0.0, %v3197
    %v3199 = vpop.f32.mrf.mxu0
    %v3200 = vadd.f32 0.0, %v3199
    %v3201 = vpop.f32.mrf.mxu0
    %v3202 = vadd.f32 0.0, %v3201
    %3203 = vmatprep.mubr.bf16.mxu0 0
    %3204 = vmatmul.mubr.bf16.gmra.mxu0 %v2934
    %v3205 = vpop.f32.mrf.mxu0
    %v3206 = vadd.f32 0.0, %v3205
    %v3207 = vpop.f32.mrf.mxu0
    %v3208 = vadd.f32 0.0, %v3207
    %v3209 = vpop.f32.mrf.mxu0
    %v3210 = vadd.f32 0.0, %v3209
    %v3211 = vpop.f32.mrf.mxu0
    %v3212 = vadd.f32 0.0, %v3211
    %3213 = vmatprep.mubr.bf16.mxu0 0
    %3214 = vmatmul.mubr.bf16.gmra.mxu0 %v2938
    %v3215 = vpop.f32.mrf.mxu0
    %v3216 = vadd.f32 0.0, %v3215
    %v3217 = vpop.f32.mrf.mxu0
    %v3218 = vadd.f32 0.0, %v3217
    %v3219 = vpop.f32.mrf.mxu0
    %v3220 = vadd.f32 0.0, %v3219
    %v3221 = vpop.f32.mrf.mxu0
    %v3222 = vadd.f32 0.0, %v3221
    %3223 = vmatprep.mubr.bf16.mxu0 0
    %3224 = vmatmul.mubr.bf16.gmra.mxu0 %v2942
    %v3225 = vpop.f32.mrf.mxu0
    %v3226 = vadd.f32 0.0, %v3225
    %v3227 = vpop.f32.mrf.mxu0
    %v3228 = vadd.f32 0.0, %v3227
    %v3229 = vpop.f32.mrf.mxu0
    %v3230 = vadd.f32 0.0, %v3229
    %v3231 = vpop.f32.mrf.mxu0
    %v3232 = vadd.f32 0.0, %v3231
    %3233 = vmatprep.mubr.bf16.mxu0 0
    %3234 = vmatmul.mubr.bf16.gmra.mxu0 %v2915
    %v3235 = vpop.f32.mrf.mxu0
    %v3236 = vadd.f32 0.0, %v3235
    %v3237 = vpop.f32.mrf.mxu0
    %v3238 = vadd.f32 0.0, %v3237
    %v3239 = vpop.f32.mrf.mxu0
    %v3240 = vadd.f32 0.0, %v3239
    %v3241 = vpop.f32.mrf.mxu0
    %v3242 = vadd.f32 0.0, %v3241
    %3243 = vmatprep.mubr.bf16.mxu0 0
    %3244 = vmatmul.mubr.bf16.gmra.mxu0 %v2919
    %v3245 = vpop.f32.mrf.mxu0
    %v3246 = vadd.f32 0.0, %v3245
    %v3247 = vpop.f32.mrf.mxu0
    %v3248 = vadd.f32 0.0, %v3247
    %v3249 = vpop.f32.mrf.mxu0
    %v3250 = vadd.f32 0.0, %v3249
    %v3251 = vpop.f32.mrf.mxu0
    %v3252 = vadd.f32 0.0, %v3251
    %3253 = vmatprep.mubr.bf16.mxu0 0
    %3254 = vmatmul.mubr.bf16.gmra.mxu0 %v2923
    %v3255 = vpop.f32.mrf.mxu0
    %v3256 = vadd.f32 0.0, %v3255
    %v3257 = vpop.f32.mrf.mxu0
    %v3258 = vadd.f32 0.0, %v3257
    %v3259 = vpop.f32.mrf.mxu0
    %v3260 = vadd.f32 0.0, %v3259
    %v3261 = vpop.f32.mrf.mxu0
    %v3262 = vadd.f32 0.0, %v3261
    %3263 = vmatprep.mubr.bf16.mxu0 0
    %3264 = vmatmul.mubr.bf16.gmra.mxu0 %v2927
    %v3265 = vpop.f32.mrf.mxu0
    %v3266 = vadd.f32 0.0, %v3265
    %v3267 = vpop.f32.mrf.mxu0
    %v3268 = vadd.f32 0.0, %v3267
    %v3269 = vpop.f32.mrf.mxu0
    %v3270 = vadd.f32 0.0, %v3269
    %v3271 = vpop.f32.mrf.mxu0
    %v3272 = vadd.f32 0.0, %v3271
    %3273 = vmatprep.mubr.bf16.mxu0 0
    %3274 = vmatmul.mubr.bf16.gmra.mxu0 %v2931
    %v3275 = vpop.f32.mrf.mxu0
    %v3276 = vadd.f32 0.0, %v3275
    %v3277 = vpop.f32.mrf.mxu0
    %v3278 = vadd.f32 0.0, %v3277
    %v3279 = vpop.f32.mrf.mxu0
    %v3280 = vadd.f32 0.0, %v3279
    %v3281 = vpop.f32.mrf.mxu0
    %v3282 = vadd.f32 0.0, %v3281
    %3283 = vmatprep.mubr.bf16.mxu0 0
    %3284 = vmatmul.mubr.bf16.gmra.mxu0 %v2935
    %v3285 = vpop.f32.mrf.mxu0
    %v3286 = vadd.f32 0.0, %v3285
    %v3287 = vpop.f32.mrf.mxu0
    %v3288 = vadd.f32 0.0, %v3287
    %v3289 = vpop.f32.mrf.mxu0
    %v3290 = vadd.f32 0.0, %v3289
    %v3291 = vpop.f32.mrf.mxu0
    %v3292 = vadd.f32 0.0, %v3291
    %3293 = vmatprep.mubr.bf16.mxu0 0
    %3294 = vmatmul.mubr.bf16.gmra.mxu0 %v2939
    %v3295 = vpop.f32.mrf.mxu0
    %v3296 = vadd.f32 0.0, %v3295
    %v3297 = vpop.f32.mrf.mxu0
    %v3298 = vadd.f32 0.0, %v3297
    %v3299 = vpop.f32.mrf.mxu0
    %v3300 = vadd.f32 0.0, %v3299
    %v3301 = vpop.f32.mrf.mxu0
    %v3302 = vadd.f32 0.0, %v3301
    %3303 = vmatprep.mubr.bf16.mxu0 0
    %3304 = vmatmul.mubr.bf16.gmra.mxu0 %v2943
    %v3305 = vpop.f32.mrf.mxu0
    %v3306 = vadd.f32 0.0, %v3305
    %v3307 = vpop.f32.mrf.mxu0
    %v3308 = vadd.f32 0.0, %v3307
    %v3309 = vpop.f32.mrf.mxu0
    %v3310 = vadd.f32 0.0, %v3309
    %v3311 = vpop.f32.mrf.mxu0
    %v3312 = vadd.f32 0.0, %v3311
    %3313 = vmatprep.mubr.bf16.mxu0 0
    %3314 = vmatmul.mubr.bf16.gmra.mxu0 %v2916
    %v3315 = vpop.f32.mrf.mxu0
    %v3316 = vadd.f32 0.0, %v3315
    %v3317 = vpop.f32.mrf.mxu0
    %v3318 = vadd.f32 0.0, %v3317
    %v3319 = vpop.f32.mrf.mxu0
    %v3320 = vadd.f32 0.0, %v3319
    %v3321 = vpop.f32.mrf.mxu0
    %v3322 = vadd.f32 0.0, %v3321
    %3323 = vmatprep.mubr.bf16.mxu0 0
    %3324 = vmatmul.mubr.bf16.gmra.mxu0 %v2920
    %v3325 = vpop.f32.mrf.mxu0
    %v3326 = vadd.f32 0.0, %v3325
    %v3327 = vpop.f32.mrf.mxu0
    %v3328 = vadd.f32 0.0, %v3327
    %v3329 = vpop.f32.mrf.mxu0
    %v3330 = vadd.f32 0.0, %v3329
    %v3331 = vpop.f32.mrf.mxu0
    %v3332 = vadd.f32 0.0, %v3331
    %3333 = vmatprep.mubr.bf16.mxu0 0
    %3334 = vmatmul.mubr.bf16.gmra.mxu0 %v2924
    %v3335 = vpop.f32.mrf.mxu0
    %v3336 = vadd.f32 0.0, %v3335
    %v3337 = vpop.f32.mrf.mxu0
    %v3338 = vadd.f32 0.0, %v3337
    %v3339 = vpop.f32.mrf.mxu0
    %v3340 = vadd.f32 0.0, %v3339
    %v3341 = vpop.f32.mrf.mxu0
    %v3342 = vadd.f32 0.0, %v3341
    %3343 = vmatprep.mubr.bf16.mxu0 0
    %3344 = vmatmul.mubr.bf16.gmra.mxu0 %v2928
    %v3345 = vpop.f32.mrf.mxu0
    %v3346 = vadd.f32 0.0, %v3345
    %v3347 = vpop.f32.mrf.mxu0
    %v3348 = vadd.f32 0.0, %v3347
    %v3349 = vpop.f32.mrf.mxu0
    %v3350 = vadd.f32 0.0, %v3349
    %v3351 = vpop.f32.mrf.mxu0
    %v3352 = vadd.f32 0.0, %v3351
    %3353 = vmatprep.mubr.bf16.mxu0 0
    %3354 = vmatmul.mubr.bf16.gmra.mxu0 %v2932
    %v3355 = vpop.f32.mrf.mxu0
    %v3356 = vadd.f32 0.0, %v3355
    %v3357 = vpop.f32.mrf.mxu0
    %v3358 = vadd.f32 0.0, %v3357
    %v3359 = vpop.f32.mrf.mxu0
    %v3360 = vadd.f32 0.0, %v3359
    %v3361 = vpop.f32.mrf.mxu0
    %v3362 = vadd.f32 0.0, %v3361
    %3363 = vmatprep.mubr.bf16.mxu0 0
    %3364 = vmatmul.mubr.bf16.gmra.mxu0 %v2936
    %v3365 = vpop.f32.mrf.mxu0
    %v3366 = vadd.f32 0.0, %v3365
    %v3367 = vpop.f32.mrf.mxu0
    %v3368 = vadd.f32 0.0, %v3367
    %v3369 = vpop.f32.mrf.mxu0
    %v3370 = vadd.f32 0.0, %v3369
    %v3371 = vpop.f32.mrf.mxu0
    %v3372 = vadd.f32 0.0, %v3371
    %3373 = vmatprep.mubr.bf16.mxu0 0
    %3374 = vmatmul.mubr.bf16.gmra.mxu0 %v2940
    %v3375 = vpop.f32.mrf.mxu0
    %v3376 = vadd.f32 0.0, %v3375
    %v3377 = vpop.f32.mrf.mxu0
    %v3378 = vadd.f32 0.0, %v3377
    %v3379 = vpop.f32.mrf.mxu0
    %v3380 = vadd.f32 0.0, %v3379
    %v3381 = vpop.f32.mrf.mxu0
    %v3382 = vadd.f32 0.0, %v3381
    %3383 = vmatprep.mubr.bf16.mxu0 0
    %3384 = vmatmul.mubr.bf16.gmra.mxu0 %v2944
    %v3385 = vpop.f32.mrf.mxu0
    %v3386 = vadd.f32 0.0, %v3385
    %v3387 = vpop.f32.mrf.mxu0
    %v3388 = vadd.f32 0.0, %v3387
    %v3389 = vpop.f32.mrf.mxu0
    %v3390 = vadd.f32 0.0, %v3389
    %v3391 = vpop.f32.mrf.mxu0
    %v3392 = vadd.f32 0.0, %v3391
    %3393 = vdwg.mxu0
    %v3394 = vld [vmem:[#allocation22] sm:$0x3]
    %v3396 = vlaneseq
    %v3397 = vshrl.u32 %v3396, 7
    %v3398 = vsub.s32 0, %v3397
    %v3399 = vrot.slane %v3394, %v3398
    %v3400 = vlaneseq
    %v3401 = vshrl.u32 %v3400, 7
    %v3402 = vsub.s32 1, %v3401
    %v3403 = vrot.slane %v3394, %v3402
    %v3406 = vmul.f32 %v3076, %v3399
    %v3407 = vmul.f32 %v3078, %v3403
    %v3408 = vmul.f32 %v3080, %v3399
    %v3409 = vmul.f32 %v3082, %v3403
    %v3410 = vmul.f32 %v3086, %v3399
    %v3411 = vmul.f32 %v3088, %v3403
    %v3412 = vmul.f32 %v3090, %v3399
    %v3413 = vmul.f32 %v3092, %v3403
    %v3414 = vmul.f32 %v3096, %v3399
    %v3415 = vmul.f32 %v3098, %v3403
    %v3416 = vmul.f32 %v3100, %v3399
    %v3417 = vmul.f32 %v3102, %v3403
    %v3418 = vmul.f32 %v3106, %v3399
    %v3419 = vmul.f32 %v3108, %v3403
    %v3420 = vmul.f32 %v3110, %v3399
    %v3421 = vmul.f32 %v3112, %v3403
    %v3422 = vmul.f32 %v3116, %v3399
    %v3423 = vmul.f32 %v3118, %v3403
    %v3424 = vmul.f32 %v3120, %v3399
    %v3425 = vmul.f32 %v3122, %v3403
    %v3426 = vmul.f32 %v3126, %v3399
    %v3427 = vmul.f32 %v3128, %v3403
    %v3428 = vmul.f32 %v3130, %v3399
    %v3429 = vmul.f32 %v3132, %v3403
    %v3430 = vmul.f32 %v3136, %v3399
    %v3431 = vmul.f32 %v3138, %v3403
    %v3432 = vmul.f32 %v3140, %v3399
    %v3433 = vmul.f32 %v3142, %v3403
    %v3434 = vmul.f32 %v3146, %v3399
    %v3435 = vmul.f32 %v3148, %v3403
    %v3436 = vmul.f32 %v3150, %v3399
    %v3437 = vmul.f32 %v3152, %v3403
    %v3438 = vmul.f32 %v3156, %v3399
    %v3439 = vmul.f32 %v3158, %v3403
    %v3440 = vmul.f32 %v3160, %v3399
    %v3441 = vmul.f32 %v3162, %v3403
    %v3442 = vmul.f32 %v3166, %v3399
    %v3443 = vmul.f32 %v3168, %v3403
    %v3444 = vmul.f32 %v3170, %v3399
    %v3445 = vmul.f32 %v3172, %v3403
    %v3446 = vmul.f32 %v3176, %v3399
    %v3447 = vmul.f32 %v3178, %v3403
    %v3448 = vmul.f32 %v3180, %v3399
    %v3449 = vmul.f32 %v3182, %v3403
    %v3450 = vmul.f32 %v3186, %v3399
    %v3451 = vmul.f32 %v3188, %v3403
    %v3452 = vmul.f32 %v3190, %v3399
    %v3453 = vmul.f32 %v3192, %v3403
    %v3454 = vmul.f32 %v3196, %v3399
    %v3455 = vmul.f32 %v3198, %v3403
    %v3456 = vmul.f32 %v3200, %v3399
    %v3457 = vmul.f32 %v3202, %v3403
    %v3458 = vmul.f32 %v3206, %v3399
    %v3459 = vmul.f32 %v3208, %v3403
    %v3460 = vmul.f32 %v3210, %v3399
    %v3461 = vmul.f32 %v3212, %v3403
    %v3462 = vmul.f32 %v3216, %v3399
    %v3463 = vmul.f32 %v3218, %v3403
    %v3464 = vmul.f32 %v3220, %v3399
    %v3465 = vmul.f32 %v3222, %v3403
    %v3466 = vmul.f32 %v3226, %v3399
    %v3467 = vmul.f32 %v3228, %v3403
    %v3468 = vmul.f32 %v3230, %v3399
    %v3469 = vmul.f32 %v3232, %v3403
    %v3470 = vmul.f32 %v3236, %v3399
    %v3471 = vmul.f32 %v3238, %v3403
    %v3472 = vmul.f32 %v3240, %v3399
    %v3473 = vmul.f32 %v3242, %v3403
    %v3474 = vmul.f32 %v3246, %v3399
    %v3475 = vmul.f32 %v3248, %v3403
    %v3476 = vmul.f32 %v3250, %v3399
    %v3477 = vmul.f32 %v3252, %v3403
    %v3478 = vmul.f32 %v3256, %v3399
    %v3479 = vmul.f32 %v3258, %v3403
    %v3480 = vmul.f32 %v3260, %v3399
    %v3481 = vmul.f32 %v3262, %v3403
    %v3482 = vmul.f32 %v3266, %v3399
    %v3483 = vmul.f32 %v3268, %v3403
    %v3484 = vmul.f32 %v3270, %v3399
    %v3485 = vmul.f32 %v3272, %v3403
    %v3486 = vmul.f32 %v3276, %v3399
    %v3487 = vmul.f32 %v3278, %v3403
    %v3488 = vmul.f32 %v3280, %v3399
    %v3489 = vmul.f32 %v3282, %v3403
    %v3490 = vmul.f32 %v3286, %v3399
    %v3491 = vmul.f32 %v3288, %v3403
    %v3492 = vmul.f32 %v3290, %v3399
    %v3493 = vmul.f32 %v3292, %v3403
    %v3494 = vmul.f32 %v3296, %v3399
    %v3495 = vmul.f32 %v3298, %v3403
    %v3496 = vmul.f32 %v3300, %v3399
    %v3497 = vmul.f32 %v3302, %v3403
    %v3498 = vmul.f32 %v3306, %v3399
    %v3499 = vmul.f32 %v3308, %v3403
    %v3500 = vmul.f32 %v3310, %v3399
    %v3501 = vmul.f32 %v3312, %v3403
    %v3502 = vmul.f32 %v3316, %v3399
    %v3503 = vmul.f32 %v3318, %v3403
    %v3504 = vmul.f32 %v3320, %v3399
    %v3505 = vmul.f32 %v3322, %v3403
    %v3506 = vmul.f32 %v3326, %v3399
    %v3507 = vmul.f32 %v3328, %v3403
    %v3508 = vmul.f32 %v3330, %v3399
    %v3509 = vmul.f32 %v3332, %v3403
    %v3510 = vmul.f32 %v3336, %v3399
    %v3511 = vmul.f32 %v3338, %v3403
    %v3512 = vmul.f32 %v3340, %v3399
    %v3513 = vmul.f32 %v3342, %v3403
    %v3514 = vmul.f32 %v3346, %v3399
    %v3515 = vmul.f32 %v3348, %v3403
    %v3516 = vmul.f32 %v3350, %v3399
    %v3517 = vmul.f32 %v3352, %v3403
    %v3518 = vmul.f32 %v3356, %v3399
    %v3519 = vmul.f32 %v3358, %v3403
    %v3520 = vmul.f32 %v3360, %v3399
    %v3521 = vmul.f32 %v3362, %v3403
    %v3522 = vmul.f32 %v3366, %v3399
    %v3523 = vmul.f32 %v3368, %v3403
    %v3524 = vmul.f32 %v3370, %v3399
    %v3525 = vmul.f32 %v3372, %v3403
    %v3526 = vmul.f32 %v3376, %v3399
    %v3527 = vmul.f32 %v3378, %v3403
    %v3528 = vmul.f32 %v3380, %v3399
    %v3529 = vmul.f32 %v3382, %v3403
    %v3530 = vmul.f32 %v3386, %v3399
    %v3531 = vmul.f32 %v3388, %v3403
    %v3532 = vmul.f32 %v3390, %v3399
    %v3533 = vmul.f32 %v3392, %v3403
    %v3534 = vld [vmem:[#allocation23] sm:$0x3]
    %v3536 = vlaneseq
    %v3537 = vshrl.u32 %v3536, 7
    %v3538 = vsub.s32 0, %v3537
    %v3539 = vrot.slane %v3534, %v3538
    %v3540 = vlaneseq
    %v3541 = vshrl.u32 %v3540, 7
    %v3542 = vsub.s32 1, %v3541
    %v3543 = vrot.slane %v3534, %v3542
    %v3546 = vadd.f32 %v3406, %v3539
    %v3547 = vadd.f32 %v3407, %v3543
    %v3548 = vadd.f32 %v3408, %v3539
    %v3549 = vadd.f32 %v3409, %v3543
    %v3550 = vadd.f32 %v3410, %v3539
    %v3551 = vadd.f32 %v3411, %v3543
    %v3552 = vadd.f32 %v3412, %v3539
    %v3553 = vadd.f32 %v3413, %v3543
    %v3554 = vadd.f32 %v3414, %v3539
    %v3555 = vadd.f32 %v3415, %v3543
    %v3556 = vadd.f32 %v3416, %v3539
    %v3557 = vadd.f32 %v3417, %v3543
    %v3558 = vadd.f32 %v3418, %v3539
    %v3559 = vadd.f32 %v3419, %v3543
    %v3560 = vadd.f32 %v3420, %v3539
    %v3561 = vadd.f32 %v3421, %v3543
    %v3562 = vadd.f32 %v3422, %v3539
    %v3563 = vadd.f32 %v3423, %v3543
    %v3564 = vadd.f32 %v3424, %v3539
    %v3565 = vadd.f32 %v3425, %v3543
    %v3566 = vadd.f32 %v3426, %v3539
    %v3567 = vadd.f32 %v3427, %v3543
    %v3568 = vadd.f32 %v3428, %v3539
    %v3569 = vadd.f32 %v3429, %v3543
    %v3570 = vadd.f32 %v3430, %v3539
    %v3571 = vadd.f32 %v3431, %v3543
    %v3572 = vadd.f32 %v3432, %v3539
    %v3573 = vadd.f32 %v3433, %v3543
    %v3574 = vadd.f32 %v3434, %v3539
    %v3575 = vadd.f32 %v3435, %v3543
    %v3576 = vadd.f32 %v3436, %v3539
    %v3577 = vadd.f32 %v3437, %v3543
    %v3578 = vadd.f32 %v3438, %v3539
    %v3579 = vadd.f32 %v3439, %v3543
    %v3580 = vadd.f32 %v3440, %v3539
    %v3581 = vadd.f32 %v3441, %v3543
    %v3582 = vadd.f32 %v3442, %v3539
    %v3583 = vadd.f32 %v3443, %v3543
    %v3584 = vadd.f32 %v3444, %v3539
    %v3585 = vadd.f32 %v3445, %v3543
    %v3586 = vadd.f32 %v3446, %v3539
    %v3587 = vadd.f32 %v3447, %v3543
    %v3588 = vadd.f32 %v3448, %v3539
    %v3589 = vadd.f32 %v3449, %v3543
    %v3590 = vadd.f32 %v3450, %v3539
    %v3591 = vadd.f32 %v3451, %v3543
    %v3592 = vadd.f32 %v3452, %v3539
    %v3593 = vadd.f32 %v3453, %v3543
    %v3594 = vadd.f32 %v3454, %v3539
    %v3595 = vadd.f32 %v3455, %v3543
    %v3596 = vadd.f32 %v3456, %v3539
    %v3597 = vadd.f32 %v3457, %v3543
    %v3598 = vadd.f32 %v3458, %v3539
    %v3599 = vadd.f32 %v3459, %v3543
    %v3600 = vadd.f32 %v3460, %v3539
    %v3601 = vadd.f32 %v3461, %v3543
    %v3602 = vadd.f32 %v3462, %v3539
    %v3603 = vadd.f32 %v3463, %v3543
    %v3604 = vadd.f32 %v3464, %v3539
    %v3605 = vadd.f32 %v3465, %v3543
    %v3606 = vadd.f32 %v3466, %v3539
    %v3607 = vadd.f32 %v3467, %v3543
    %v3608 = vadd.f32 %v3468, %v3539
    %v3609 = vadd.f32 %v3469, %v3543
    %v3610 = vadd.f32 %v3470, %v3539
    %v3611 = vadd.f32 %v3471, %v3543
    %v3612 = vadd.f32 %v3472, %v3539
    %v3613 = vadd.f32 %v3473, %v3543
    %v3614 = vadd.f32 %v3474, %v3539
    %v3615 = vadd.f32 %v3475, %v3543
    %v3616 = vadd.f32 %v3476, %v3539
    %v3617 = vadd.f32 %v3477, %v3543
    %v3618 = vadd.f32 %v3478, %v3539
    %v3619 = vadd.f32 %v3479, %v3543
    %v3620 = vadd.f32 %v3480, %v3539
    %v3621 = vadd.f32 %v3481, %v3543
    %v3622 = vadd.f32 %v3482, %v3539
    %v3623 = vadd.f32 %v3483, %v3543
    %v3624 = vadd.f32 %v3484, %v3539
    %v3625 = vadd.f32 %v3485, %v3543
    %v3626 = vadd.f32 %v3486, %v3539
    %v3627 = vadd.f32 %v3487, %v3543
    %v3628 = vadd.f32 %v3488, %v3539
    %v3629 = vadd.f32 %v3489, %v3543
    %v3630 = vadd.f32 %v3490, %v3539
    %v3631 = vadd.f32 %v3491, %v3543
    %v3632 = vadd.f32 %v3492, %v3539
    %v3633 = vadd.f32 %v3493, %v3543
    %v3634 = vadd.f32 %v3494, %v3539
    %v3635 = vadd.f32 %v3495, %v3543
    %v3636 = vadd.f32 %v3496, %v3539
    %v3637 = vadd.f32 %v3497, %v3543
    %v3638 = vadd.f32 %v3498, %v3539
    %v3639 = vadd.f32 %v3499, %v3543
    %v3640 = vadd.f32 %v3500, %v3539
    %v3641 = vadd.f32 %v3501, %v3543
    %v3642 = vadd.f32 %v3502, %v3539
    %v3643 = vadd.f32 %v3503, %v3543
    %v3644 = vadd.f32 %v3504, %v3539
    %v3645 = vadd.f32 %v3505, %v3543
    %v3646 = vadd.f32 %v3506, %v3539
    %v3647 = vadd.f32 %v3507, %v3543
    %v3648 = vadd.f32 %v3508, %v3539
    %v3649 = vadd.f32 %v3509, %v3543
    %v3650 = vadd.f32 %v3510, %v3539
    %v3651 = vadd.f32 %v3511, %v3543
    %v3652 = vadd.f32 %v3512, %v3539
    %v3653 = vadd.f32 %v3513, %v3543
    %v3654 = vadd.f32 %v3514, %v3539
    %v3655 = vadd.f32 %v3515, %v3543
    %v3656 = vadd.f32 %v3516, %v3539
    %v3657 = vadd.f32 %v3517, %v3543
    %v3658 = vadd.f32 %v3518, %v3539
    %v3659 = vadd.f32 %v3519, %v3543
    %v3660 = vadd.f32 %v3520, %v3539
    %v3661 = vadd.f32 %v3521, %v3543
    %v3662 = vadd.f32 %v3522, %v3539
    %v3663 = vadd.f32 %v3523, %v3543
    %v3664 = vadd.f32 %v3524, %v3539
    %v3665 = vadd.f32 %v3525, %v3543
    %v3666 = vadd.f32 %v3526, %v3539
    %v3667 = vadd.f32 %v3527, %v3543
    %v3668 = vadd.f32 %v3528, %v3539
    %v3669 = vadd.f32 %v3529, %v3543
    %v3670 = vadd.f32 %v3530, %v3539
    %v3671 = vadd.f32 %v3531, %v3543
    %v3672 = vadd.f32 %v3532, %v3539
    %v3673 = vadd.f32 %v3533, %v3543
    %v3674 = vmax.f32 %v3546, 0.0
    %v3675 = vmax.f32 %v3547, 0.0
    %v3676 = vmax.f32 %v3548, 0.0
    %v3677 = vmax.f32 %v3549, 0.0
    %v3678 = vmax.f32 %v3550, 0.0
    %v3679 = vmax.f32 %v3551, 0.0
    %v3680 = vmax.f32 %v3552, 0.0
    %v3681 = vmax.f32 %v3553, 0.0
    %v3682 = vmax.f32 %v3554, 0.0
    %v3683 = vmax.f32 %v3555, 0.0
    %v3684 = vmax.f32 %v3556, 0.0
    %v3685 = vmax.f32 %v3557, 0.0
    %v3686 = vmax.f32 %v3558, 0.0
    %v3687 = vmax.f32 %v3559, 0.0
    %v3688 = vmax.f32 %v3560, 0.0
    %v3689 = vmax.f32 %v3561, 0.0
    %v3690 = vmax.f32 %v3562, 0.0
    %v3691 = vmax.f32 %v3563, 0.0
    %v3692 = vmax.f32 %v3564, 0.0
    %v3693 = vmax.f32 %v3565, 0.0
    %v3694 = vmax.f32 %v3566, 0.0
    %v3695 = vmax.f32 %v3567, 0.0
    %v3696 = vmax.f32 %v3568, 0.0
    %v3697 = vmax.f32 %v3569, 0.0
    %v3698 = vmax.f32 %v3570, 0.0
    %v3699 = vmax.f32 %v3571, 0.0
    %v3700 = vmax.f32 %v3572, 0.0
    %v3701 = vmax.f32 %v3573, 0.0
    %v3702 = vmax.f32 %v3574, 0.0
    %v3703 = vmax.f32 %v3575, 0.0
    %v3704 = vmax.f32 %v3576, 0.0
    %v3705 = vmax.f32 %v3577, 0.0
    %v3706 = vmax.f32 %v3578, 0.0
    %v3707 = vmax.f32 %v3579, 0.0
    %v3708 = vmax.f32 %v3580, 0.0
    %v3709 = vmax.f32 %v3581, 0.0
    %v3710 = vmax.f32 %v3582, 0.0
    %v3711 = vmax.f32 %v3583, 0.0
    %v3712 = vmax.f32 %v3584, 0.0
    %v3713 = vmax.f32 %v3585, 0.0
    %v3714 = vmax.f32 %v3586, 0.0
    %v3715 = vmax.f32 %v3587, 0.0
    %v3716 = vmax.f32 %v3588, 0.0
    %v3717 = vmax.f32 %v3589, 0.0
    %v3718 = vmax.f32 %v3590, 0.0
    %v3719 = vmax.f32 %v3591, 0.0
    %v3720 = vmax.f32 %v3592, 0.0
    %v3721 = vmax.f32 %v3593, 0.0
    %v3722 = vmax.f32 %v3594, 0.0
    %v3723 = vmax.f32 %v3595, 0.0
    %v3724 = vmax.f32 %v3596, 0.0
    %v3725 = vmax.f32 %v3597, 0.0
    %v3726 = vmax.f32 %v3598, 0.0
    %v3727 = vmax.f32 %v3599, 0.0
    %v3728 = vmax.f32 %v3600, 0.0
    %v3729 = vmax.f32 %v3601, 0.0
    %v3730 = vmax.f32 %v3602, 0.0
    %v3731 = vmax.f32 %v3603, 0.0
    %v3732 = vmax.f32 %v3604, 0.0
    %v3733 = vmax.f32 %v3605, 0.0
    %v3734 = vmax.f32 %v3606, 0.0
    %v3735 = vmax.f32 %v3607, 0.0
    %v3736 = vmax.f32 %v3608, 0.0
    %v3737 = vmax.f32 %v3609, 0.0
    %v3738 = vmax.f32 %v3610, 0.0
    %v3739 = vmax.f32 %v3611, 0.0
    %v3740 = vmax.f32 %v3612, 0.0
    %v3741 = vmax.f32 %v3613, 0.0
    %v3742 = vmax.f32 %v3614, 0.0
    %v3743 = vmax.f32 %v3615, 0.0
    %v3744 = vmax.f32 %v3616, 0.0
    %v3745 = vmax.f32 %v3617, 0.0
    %v3746 = vmax.f32 %v3618, 0.0
    %v3747 = vmax.f32 %v3619, 0.0
    %v3748 = vmax.f32 %v3620, 0.0
    %v3749 = vmax.f32 %v3621, 0.0
    %v3750 = vmax.f32 %v3622, 0.0
    %v3751 = vmax.f32 %v3623, 0.0
    %v3752 = vmax.f32 %v3624, 0.0
    %v3753 = vmax.f32 %v3625, 0.0
    %v3754 = vmax.f32 %v3626, 0.0
    %v3755 = vmax.f32 %v3627, 0.0
    %v3756 = vmax.f32 %v3628, 0.0
    %v3757 = vmax.f32 %v3629, 0.0
    %v3758 = vmax.f32 %v3630, 0.0
    %v3759 = vmax.f32 %v3631, 0.0
    %v3760 = vmax.f32 %v3632, 0.0
    %v3761 = vmax.f32 %v3633, 0.0
    %v3762 = vmax.f32 %v3634, 0.0
    %v3763 = vmax.f32 %v3635, 0.0
    %v3764 = vmax.f32 %v3636, 0.0
    %v3765 = vmax.f32 %v3637, 0.0
    %v3766 = vmax.f32 %v3638, 0.0
    %v3767 = vmax.f32 %v3639, 0.0
    %v3768 = vmax.f32 %v3640, 0.0
    %v3769 = vmax.f32 %v3641, 0.0
    %v3770 = vmax.f32 %v3642, 0.0
    %v3771 = vmax.f32 %v3643, 0.0
    %v3772 = vmax.f32 %v3644, 0.0
    %v3773 = vmax.f32 %v3645, 0.0
    %v3774 = vmax.f32 %v3646, 0.0
    %v3775 = vmax.f32 %v3647, 0.0
    %v3776 = vmax.f32 %v3648, 0.0
    %v3777 = vmax.f32 %v3649, 0.0
    %v3778 = vmax.f32 %v3650, 0.0
    %v3779 = vmax.f32 %v3651, 0.0
    %v3780 = vmax.f32 %v3652, 0.0
    %v3781 = vmax.f32 %v3653, 0.0
    %v3782 = vmax.f32 %v3654, 0.0
    %v3783 = vmax.f32 %v3655, 0.0
    %v3784 = vmax.f32 %v3656, 0.0
    %v3785 = vmax.f32 %v3657, 0.0
    %v3786 = vmax.f32 %v3658, 0.0
    %v3787 = vmax.f32 %v3659, 0.0
    %v3788 = vmax.f32 %v3660, 0.0
    %v3789 = vmax.f32 %v3661, 0.0
    %v3790 = vmax.f32 %v3662, 0.0
    %v3791 = vmax.f32 %v3663, 0.0
    %v3792 = vmax.f32 %v3664, 0.0
    %v3793 = vmax.f32 %v3665, 0.0
    %v3794 = vmax.f32 %v3666, 0.0
    %v3795 = vmax.f32 %v3667, 0.0
    %v3796 = vmax.f32 %v3668, 0.0
    %v3797 = vmax.f32 %v3669, 0.0
    %v3798 = vmax.f32 %v3670, 0.0
    %v3799 = vmax.f32 %v3671, 0.0
    %v3800 = vmax.f32 %v3672, 0.0
    %v3801 = vmax.f32 %v3673, 0.0
    %v3802 = vpack.c.bf16 %v3676, %v3674
    %v3803 = vpack.c.bf16 %v3677, %v3675
    %v3804 = vpack.c.bf16 %v3680, %v3678
    %v3805 = vpack.c.bf16 %v3681, %v3679
    %v3806 = vpack.c.bf16 %v3684, %v3682
    %v3807 = vpack.c.bf16 %v3685, %v3683
    %v3808 = vpack.c.bf16 %v3688, %v3686
    %v3809 = vpack.c.bf16 %v3689, %v3687
    %v3810 = vpack.c.bf16 %v3692, %v3690
    %v3811 = vpack.c.bf16 %v3693, %v3691
    %v3812 = vpack.c.bf16 %v3696, %v3694
    %v3813 = vpack.c.bf16 %v3697, %v3695
    %v3814 = vpack.c.bf16 %v3700, %v3698
    %v3815 = vpack.c.bf16 %v3701, %v3699
    %v3816 = vpack.c.bf16 %v3704, %v3702
    %v3817 = vpack.c.bf16 %v3705, %v3703
    %v3818 = vpack.c.bf16 %v3708, %v3706
    %v3819 = vpack.c.bf16 %v3709, %v3707
    %v3820 = vpack.c.bf16 %v3712, %v3710
    %v3821 = vpack.c.bf16 %v3713, %v3711
    %v3822 = vpack.c.bf16 %v3716, %v3714
    %v3823 = vpack.c.bf16 %v3717, %v3715
    %v3824 = vpack.c.bf16 %v3720, %v3718
    %v3825 = vpack.c.bf16 %v3721, %v3719
    %v3826 = vpack.c.bf16 %v3724, %v3722
    %v3827 = vpack.c.bf16 %v3725, %v3723
    %v3828 = vpack.c.bf16 %v3728, %v3726
    %v3829 = vpack.c.bf16 %v3729, %v3727
    %v3830 = vpack.c.bf16 %v3732, %v3730
    %v3831 = vpack.c.bf16 %v3733, %v3731
    %v3832 = vpack.c.bf16 %v3736, %v3734
    %v3833 = vpack.c.bf16 %v3737, %v3735
    %v3834 = vpack.c.bf16 %v3740, %v3738
    %v3835 = vpack.c.bf16 %v3741, %v3739
    %v3836 = vpack.c.bf16 %v3744, %v3742
    %v3837 = vpack.c.bf16 %v3745, %v3743
    %v3838 = vpack.c.bf16 %v3748, %v3746
    %v3839 = vpack.c.bf16 %v3749, %v3747
    %v3840 = vpack.c.bf16 %v3752, %v3750
    %v3841 = vpack.c.bf16 %v3753, %v3751
    %v3842 = vpack.c.bf16 %v3756, %v3754
    %v3843 = vpack.c.bf16 %v3757, %v3755
    %v3844 = vpack.c.bf16 %v3760, %v3758
    %v3845 = vpack.c.bf16 %v3761, %v3759
    %v3846 = vpack.c.bf16 %v3764, %v3762
    %v3847 = vpack.c.bf16 %v3765, %v3763
    %v3848 = vpack.c.bf16 %v3768, %v3766
    %v3849 = vpack.c.bf16 %v3769, %v3767
    %v3850 = vpack.c.bf16 %v3772, %v3770
    %v3851 = vpack.c.bf16 %v3773, %v3771
    %v3852 = vpack.c.bf16 %v3776, %v3774
    %v3853 = vpack.c.bf16 %v3777, %v3775
    %v3854 = vpack.c.bf16 %v3780, %v3778
    %v3855 = vpack.c.bf16 %v3781, %v3779
    %v3856 = vpack.c.bf16 %v3784, %v3782
    %v3857 = vpack.c.bf16 %v3785, %v3783
    %v3858 = vpack.c.bf16 %v3788, %v3786
    %v3859 = vpack.c.bf16 %v3789, %v3787
    %v3860 = vpack.c.bf16 %v3792, %v3790
    %v3861 = vpack.c.bf16 %v3793, %v3791
    %v3862 = vpack.c.bf16 %v3796, %v3794
    %v3863 = vpack.c.bf16 %v3797, %v3795
    %v3864 = vpack.c.bf16 %v3800, %v3798
    %v3865 = vpack.c.bf16 %v3801, %v3799
    %v3866 = vld [vmem:[#allocation25] sm:$0xf]
    %v3867 = vld [vmem:[#allocation25 + $0x4] sm:$0xf]
    %v3868 = vld [vmem:[#allocation25 + $0x8] sm:$0xf]
    %v3869 = vld [vmem:[#allocation25 + $0xc] sm:$0xf]
    %v3870 = vld [vmem:[#allocation25 + $0x10] sm:$0xf]
    %v3871 = vld [vmem:[#allocation25 + $0x14] sm:$0xf]
    %v3872 = vld [vmem:[#allocation25 + $0x18] sm:$0xf]
    %v3873 = vld [vmem:[#allocation25 + $0x1c] sm:$0xf]
    %v3874 = vld [vmem:[#allocation25 + $0x20] sm:$0xf]
    %v3875 = vld [vmem:[#allocation25 + $0x24] sm:$0xf]
    %v3876 = vld [vmem:[#allocation25 + $0x28] sm:$0xf]
    %v3877 = vld [vmem:[#allocation25 + $0x2c] sm:$0xf]
    %v3878 = vld [vmem:[#allocation25 + $0x30] sm:$0xf]
    %v3879 = vld [vmem:[#allocation25 + $0x34] sm:$0xf]
    %v3880 = vld [vmem:[#allocation25 + $0x38] sm:$0xf]
    %v3881 = vld [vmem:[#allocation25 + $0x3c] sm:$0xf]
    %v3882 = vld [vmem:[#allocation25 + $0x40] sm:$0xf]
    %v3883 = vld [vmem:[#allocation25 + $0x44] sm:$0xf]
    %v3884 = vld [vmem:[#allocation25 + $0x48] sm:$0xf]
    %v3885 = vld [vmem:[#allocation25 + $0x4c] sm:$0xf]
    %v3886 = vld [vmem:[#allocation25 + $0x50] sm:$0xf]
    %v3887 = vld [vmem:[#allocation25 + $0x54] sm:$0xf]
    %v3888 = vld [vmem:[#allocation25 + $0x58] sm:$0xf]
    %v3889 = vld [vmem:[#allocation25 + $0x5c] sm:$0xf]
    %v3890 = vld [vmem:[#allocation25 + $0x60] sm:$0xf]
    %v3891 = vld [vmem:[#allocation25 + $0x64] sm:$0xf]
    %v3892 = vld [vmem:[#allocation25 + $0x68] sm:$0xf]
    %v3893 = vld [vmem:[#allocation25 + $0x6c] sm:$0xf]
    %v3894 = vld [vmem:[#allocation25 + $0x70] sm:$0xf]
    %v3895 = vld [vmem:[#allocation25 + $0x74] sm:$0xf]
    %v3896 = vld [vmem:[#allocation25 + $0x78] sm:$0xf]
    %v3897 = vld [vmem:[#allocation25 + $0x7c] sm:$0xf]
    %v3930 = vunpack.c.l.b16 %v3866
    %v3931 = vunpack.c.l.b16 %v3867
    %v3932 = vunpack.c.l.b16 %v3868
    %v3933 = vunpack.c.l.b16 %v3869
    %v3934 = vunpack.c.l.b16 %v3870
    %v3935 = vunpack.c.l.b16 %v3871
    %v3936 = vunpack.c.l.b16 %v3872
    %v3937 = vunpack.c.l.b16 %v3873
    %v3938 = vunpack.c.l.b16 %v3874
    %v3939 = vunpack.c.l.b16 %v3875
    %v3940 = vunpack.c.l.b16 %v3876
    %v3941 = vunpack.c.l.b16 %v3877
    %v3942 = vunpack.c.l.b16 %v3878
    %v3943 = vunpack.c.l.b16 %v3879
    %v3944 = vunpack.c.l.b16 %v3880
    %v3945 = vunpack.c.l.b16 %v3881
    %v3946 = vunpack.c.l.b16 %v3882
    %v3947 = vunpack.c.l.b16 %v3883
    %v3948 = vunpack.c.l.b16 %v3884
    %v3949 = vunpack.c.l.b16 %v3885
    %v3950 = vunpack.c.l.b16 %v3886
    %v3951 = vunpack.c.l.b16 %v3887
    %v3952 = vunpack.c.l.b16 %v3888
    %v3953 = vunpack.c.l.b16 %v3889
    %v3954 = vunpack.c.l.b16 %v3890
    %v3955 = vunpack.c.l.b16 %v3891
    %v3956 = vunpack.c.l.b16 %v3892
    %v3957 = vunpack.c.l.b16 %v3893
    %v3958 = vunpack.c.l.b16 %v3894
    %v3959 = vunpack.c.l.b16 %v3895
    %v3960 = vunpack.c.l.b16 %v3896
    %v3961 = vunpack.c.l.b16 %v3897
    %v3962 = vpack.c.b16 %v3931, %v3930
    %v3963 = vpack.c.b16 %v3933, %v3932
    %v3964 = vpack.c.b16 %v3935, %v3934
    %v3965 = vpack.c.b16 %v3937, %v3936
    %v3966 = vpack.c.b16 %v3939, %v3938
    %v3967 = vpack.c.b16 %v3941, %v3940
    %v3968 = vpack.c.b16 %v3943, %v3942
    %v3969 = vpack.c.b16 %v3945, %v3944
    %v3970 = vpack.c.b16 %v3947, %v3946
    %v3971 = vpack.c.b16 %v3949, %v3948
    %v3972 = vpack.c.b16 %v3951, %v3950
    %v3973 = vpack.c.b16 %v3953, %v3952
    %v3974 = vpack.c.b16 %v3955, %v3954
    %v3975 = vpack.c.b16 %v3957, %v3956
    %v3976 = vpack.c.b16 %v3959, %v3958
    %v3977 = vpack.c.b16 %v3961, %v3960
    %3994 = vmatprep.subr.bf16.mxu0 0
    %3995 = vmatpush1.bf16.msra.mxu0 %v3969
    %3996 = vmatprep.subr.bf16.mxu0 0
    %3997 = vmatpush1.bf16.msra.mxu0 %v3968
    %3998 = vmatprep.subr.bf16.mxu0 0
    %3999 = vmatpush1.bf16.msra.mxu0 %v3967
    %4000 = vmatprep.subr.bf16.mxu0 0
    %4001 = vmatpush1.bf16.msra.mxu0 %v3966
    %4002 = vmatprep.subr.bf16.mxu0 0
    %4003 = vmatpush1.bf16.msra.mxu0 %v3965
    %4004 = vmatprep.subr.bf16.mxu0 0
    %4005 = vmatpush1.bf16.msra.mxu0 %v3964
    %4006 = vmatprep.subr.bf16.mxu0 0
    %4007 = vmatpush1.bf16.msra.mxu0 %v3963
    %4008 = vmatprep.subr.bf16.mxu0 0
    %4009 = vmatpush1.bf16.msra.mxu0 %v3962
    %4010 = vmatprep.subr.bf16.mxu0 0
    %4011 = vmatpush2.bf16.msra.mxu0 %v3977
    %4012 = vmatprep.subr.bf16.mxu0 0
    %4013 = vmatpush2.bf16.msra.mxu0 %v3976
    %4014 = vmatprep.subr.bf16.mxu0 0
    %4015 = vmatpush2.bf16.msra.mxu0 %v3975
    %4016 = vmatprep.subr.bf16.mxu0 0
    %4017 = vmatpush2.bf16.msra.mxu0 %v3974
    %4018 = vmatprep.subr.bf16.mxu0 0
    %4019 = vmatpush2.bf16.msra.mxu0 %v3973
    %4020 = vmatprep.subr.bf16.mxu0 0
    %4021 = vmatpush2.bf16.msra.mxu0 %v3972
    %4022 = vmatprep.subr.bf16.mxu0 0
    %4023 = vmatpush2.bf16.msra.mxu0 %v3971
    %4024 = vmatprep.subr.bf16.mxu0 0
    %4025 = vmatpush2.bf16.msra.mxu0 %v3970
    %4026 = vmatprep.mubr.bf16.mxu0 %v3803
    %4027 = vmatmul.mubr.bf16.gmra.mxu0 %v3802
    %v4028 = vpop.f32.mrf.mxu0
    %v4029 = vadd.f32 0.0, %v4028
    %v4030 = vpop.f32.mrf.mxu0
    %v4031 = vpop.f32.mrf.mxu0
    %v4032 = vadd.f32 0.0, %v4031
    %v4033 = vpop.f32.mrf.mxu0
    %4034 = vmatprep.mubr.bf16.mxu0 %v3805
    %4035 = vmatmul.mubr.bf16.gmra.mxu0 %v3804
    %v4036 = vpop.f32.mrf.mxu0
    %v4037 = vadd.f32 0.0, %v4036
    %v4038 = vpop.f32.mrf.mxu0
    %v4039 = vpop.f32.mrf.mxu0
    %v4040 = vadd.f32 0.0, %v4039
    %v4041 = vpop.f32.mrf.mxu0
    %4042 = vmatprep.mubr.bf16.mxu0 %v3807
    %4043 = vmatmul.mubr.bf16.gmra.mxu0 %v3806
    %v4044 = vpop.f32.mrf.mxu0
    %v4045 = vadd.f32 0.0, %v4044
    %v4046 = vpop.f32.mrf.mxu0
    %v4047 = vpop.f32.mrf.mxu0
    %v4048 = vadd.f32 0.0, %v4047
    %v4049 = vpop.f32.mrf.mxu0
    %4050 = vmatprep.mubr.bf16.mxu0 %v3809
    %4051 = vmatmul.mubr.bf16.gmra.mxu0 %v3808
    %v4052 = vpop.f32.mrf.mxu0
    %v4053 = vadd.f32 0.0, %v4052
    %v4054 = vpop.f32.mrf.mxu0
    %v4055 = vpop.f32.mrf.mxu0
    %v4056 = vadd.f32 0.0, %v4055
    %v4057 = vpop.f32.mrf.mxu0
    %4058 = vmatprep.mubr.bf16.mxu0 %v3811
    %4059 = vmatmul.mubr.bf16.gmra.mxu0 %v3810
    %v4060 = vpop.f32.mrf.mxu0
    %v4061 = vadd.f32 0.0, %v4060
    %v4062 = vpop.f32.mrf.mxu0
    %v4063 = vpop.f32.mrf.mxu0
    %v4064 = vadd.f32 0.0, %v4063
    %v4065 = vpop.f32.mrf.mxu0
    %4066 = vmatprep.mubr.bf16.mxu0 %v3813
    %4067 = vmatmul.mubr.bf16.gmra.mxu0 %v3812
    %v4068 = vpop.f32.mrf.mxu0
    %v4069 = vadd.f32 0.0, %v4068
    %v4070 = vpop.f32.mrf.mxu0
    %v4071 = vpop.f32.mrf.mxu0
    %v4072 = vadd.f32 0.0, %v4071
    %v4073 = vpop.f32.mrf.mxu0
    %4074 = vmatprep.mubr.bf16.mxu0 %v3815
    %4075 = vmatmul.mubr.bf16.gmra.mxu0 %v3814
    %v4076 = vpop.f32.mrf.mxu0
    %v4077 = vadd.f32 0.0, %v4076
    %v4078 = vpop.f32.mrf.mxu0
    %v4079 = vpop.f32.mrf.mxu0
    %v4080 = vadd.f32 0.0, %v4079
    %v4081 = vpop.f32.mrf.mxu0
    %4082 = vmatprep.mubr.bf16.mxu0 %v3817
    %4083 = vmatmul.mubr.bf16.gmra.mxu0 %v3816
    %v4084 = vpop.f32.mrf.mxu0
    %v4085 = vadd.f32 0.0, %v4084
    %v4086 = vpop.f32.mrf.mxu0
    %v4087 = vpop.f32.mrf.mxu0
    %v4088 = vadd.f32 0.0, %v4087
    %v4089 = vpop.f32.mrf.mxu0
    %4090 = vmatprep.mubr.bf16.mxu0 %v3819
    %4091 = vmatmul.mubr.bf16.gmra.mxu0 %v3818
    %v4092 = vpop.f32.mrf.mxu0
    %v4093 = vadd.f32 0.0, %v4092
    %v4094 = vpop.f32.mrf.mxu0
    %v4095 = vpop.f32.mrf.mxu0
    %v4096 = vadd.f32 0.0, %v4095
    %v4097 = vpop.f32.mrf.mxu0
    %4098 = vmatprep.mubr.bf16.mxu0 %v3821
    %4099 = vmatmul.mubr.bf16.gmra.mxu0 %v3820
    %v4100 = vpop.f32.mrf.mxu0
    %v4101 = vadd.f32 0.0, %v4100
    %v4102 = vpop.f32.mrf.mxu0
    %v4103 = vpop.f32.mrf.mxu0
    %v4104 = vadd.f32 0.0, %v4103
    %v4105 = vpop.f32.mrf.mxu0
    %4106 = vmatprep.mubr.bf16.mxu0 %v3823
    %4107 = vmatmul.mubr.bf16.gmra.mxu0 %v3822
    %v4108 = vpop.f32.mrf.mxu0
    %v4109 = vadd.f32 0.0, %v4108
    %v4110 = vpop.f32.mrf.mxu0
    %v4111 = vpop.f32.mrf.mxu0
    %v4112 = vadd.f32 0.0, %v4111
    %v4113 = vpop.f32.mrf.mxu0
    %4114 = vmatprep.mubr.bf16.mxu0 %v3825
    %4115 = vmatmul.mubr.bf16.gmra.mxu0 %v3824
    %v4116 = vpop.f32.mrf.mxu0
    %v4117 = vadd.f32 0.0, %v4116
    %v4118 = vpop.f32.mrf.mxu0
    %v4119 = vpop.f32.mrf.mxu0
    %v4120 = vadd.f32 0.0, %v4119
    %v4121 = vpop.f32.mrf.mxu0
    %4122 = vmatprep.mubr.bf16.mxu0 %v3827
    %4123 = vmatmul.mubr.bf16.gmra.mxu0 %v3826
    %v4124 = vpop.f32.mrf.mxu0
    %v4125 = vadd.f32 0.0, %v4124
    %v4126 = vpop.f32.mrf.mxu0
    %v4127 = vpop.f32.mrf.mxu0
    %v4128 = vadd.f32 0.0, %v4127
    %v4129 = vpop.f32.mrf.mxu0
    %4130 = vmatprep.mubr.bf16.mxu0 %v3829
    %4131 = vmatmul.mubr.bf16.gmra.mxu0 %v3828
    %v4132 = vpop.f32.mrf.mxu0
    %v4133 = vadd.f32 0.0, %v4132
    %v4134 = vpop.f32.mrf.mxu0
    %v4135 = vpop.f32.mrf.mxu0
    %v4136 = vadd.f32 0.0, %v4135
    %v4137 = vpop.f32.mrf.mxu0
    %4138 = vmatprep.mubr.bf16.mxu0 %v3831
    %4139 = vmatmul.mubr.bf16.gmra.mxu0 %v3830
    %v4140 = vpop.f32.mrf.mxu0
    %v4141 = vadd.f32 0.0, %v4140
    %v4142 = vpop.f32.mrf.mxu0
    %v4143 = vpop.f32.mrf.mxu0
    %v4144 = vadd.f32 0.0, %v4143
    %v4145 = vpop.f32.mrf.mxu0
    %4146 = vmatprep.mubr.bf16.mxu0 %v3833
    %4147 = vmatmul.mubr.bf16.gmra.mxu0 %v3832
    %v4148 = vpop.f32.mrf.mxu0
    %v4149 = vadd.f32 0.0, %v4148
    %v4150 = vpop.f32.mrf.mxu0
    %v4151 = vpop.f32.mrf.mxu0
    %v4152 = vadd.f32 0.0, %v4151
    %v4153 = vpop.f32.mrf.mxu0
    %4154 = vmatprep.mubr.bf16.mxu0 %v3835
    %4155 = vmatmul.mubr.bf16.gmra.mxu0 %v3834
    %v4156 = vpop.f32.mrf.mxu0
    %v4157 = vadd.f32 0.0, %v4156
    %v4158 = vpop.f32.mrf.mxu0
    %v4159 = vpop.f32.mrf.mxu0
    %v4160 = vadd.f32 0.0, %v4159
    %v4161 = vpop.f32.mrf.mxu0
    %4162 = vmatprep.mubr.bf16.mxu0 %v3837
    %4163 = vmatmul.mubr.bf16.gmra.mxu0 %v3836
    %v4164 = vpop.f32.mrf.mxu0
    %v4165 = vadd.f32 0.0, %v4164
    %v4166 = vpop.f32.mrf.mxu0
    %v4167 = vpop.f32.mrf.mxu0
    %v4168 = vadd.f32 0.0, %v4167
    %v4169 = vpop.f32.mrf.mxu0
    %4170 = vmatprep.mubr.bf16.mxu0 %v3839
    %4171 = vmatmul.mubr.bf16.gmra.mxu0 %v3838
    %v4172 = vpop.f32.mrf.mxu0
    %v4173 = vadd.f32 0.0, %v4172
    %v4174 = vpop.f32.mrf.mxu0
    %v4175 = vpop.f32.mrf.mxu0
    %v4176 = vadd.f32 0.0, %v4175
    %v4177 = vpop.f32.mrf.mxu0
    %4178 = vmatprep.mubr.bf16.mxu0 %v3841
    %4179 = vmatmul.mubr.bf16.gmra.mxu0 %v3840
    %v4180 = vpop.f32.mrf.mxu0
    %v4181 = vadd.f32 0.0, %v4180
    %v4182 = vpop.f32.mrf.mxu0
    %v4183 = vpop.f32.mrf.mxu0
    %v4184 = vadd.f32 0.0, %v4183
    %v4185 = vpop.f32.mrf.mxu0
    %4186 = vmatprep.mubr.bf16.mxu0 %v3843
    %4187 = vmatmul.mubr.bf16.gmra.mxu0 %v3842
    %v4188 = vpop.f32.mrf.mxu0
    %v4189 = vadd.f32 0.0, %v4188
    %v4190 = vpop.f32.mrf.mxu0
    %v4191 = vpop.f32.mrf.mxu0
    %v4192 = vadd.f32 0.0, %v4191
    %v4193 = vpop.f32.mrf.mxu0
    %4194 = vmatprep.mubr.bf16.mxu0 %v3845
    %4195 = vmatmul.mubr.bf16.gmra.mxu0 %v3844
    %v4196 = vpop.f32.mrf.mxu0
    %v4197 = vadd.f32 0.0, %v4196
    %v4198 = vpop.f32.mrf.mxu0
    %v4199 = vpop.f32.mrf.mxu0
    %v4200 = vadd.f32 0.0, %v4199
    %v4201 = vpop.f32.mrf.mxu0
    %4202 = vmatprep.mubr.bf16.mxu0 %v3847
    %4203 = vmatmul.mubr.bf16.gmra.mxu0 %v3846
    %v4204 = vpop.f32.mrf.mxu0
    %v4205 = vadd.f32 0.0, %v4204
    %v4206 = vpop.f32.mrf.mxu0
    %v4207 = vpop.f32.mrf.mxu0
    %v4208 = vadd.f32 0.0, %v4207
    %v4209 = vpop.f32.mrf.mxu0
    %4210 = vmatprep.mubr.bf16.mxu0 %v3849
    %4211 = vmatmul.mubr.bf16.gmra.mxu0 %v3848
    %v4212 = vpop.f32.mrf.mxu0
    %v4213 = vadd.f32 0.0, %v4212
    %v4214 = vpop.f32.mrf.mxu0
    %v4215 = vpop.f32.mrf.mxu0
    %v4216 = vadd.f32 0.0, %v4215
    %v4217 = vpop.f32.mrf.mxu0
    %4218 = vmatprep.mubr.bf16.mxu0 %v3851
    %4219 = vmatmul.mubr.bf16.gmra.mxu0 %v3850
    %v4220 = vpop.f32.mrf.mxu0
    %v4221 = vadd.f32 0.0, %v4220
    %v4222 = vpop.f32.mrf.mxu0
    %v4223 = vpop.f32.mrf.mxu0
    %v4224 = vadd.f32 0.0, %v4223
    %v4225 = vpop.f32.mrf.mxu0
    %4226 = vmatprep.mubr.bf16.mxu0 %v3853
    %4227 = vmatmul.mubr.bf16.gmra.mxu0 %v3852
    %v4228 = vpop.f32.mrf.mxu0
    %v4229 = vadd.f32 0.0, %v4228
    %v4230 = vpop.f32.mrf.mxu0
    %v4231 = vpop.f32.mrf.mxu0
    %v4232 = vadd.f32 0.0, %v4231
    %v4233 = vpop.f32.mrf.mxu0
    %4234 = vmatprep.mubr.bf16.mxu0 %v3855
    %4235 = vmatmul.mubr.bf16.gmra.mxu0 %v3854
    %v4236 = vpop.f32.mrf.mxu0
    %v4237 = vadd.f32 0.0, %v4236
    %v4238 = vpop.f32.mrf.mxu0
    %v4239 = vpop.f32.mrf.mxu0
    %v4240 = vadd.f32 0.0, %v4239
    %v4241 = vpop.f32.mrf.mxu0
    %4242 = vmatprep.mubr.bf16.mxu0 %v3857
    %4243 = vmatmul.mubr.bf16.gmra.mxu0 %v3856
    %v4244 = vpop.f32.mrf.mxu0
    %v4245 = vadd.f32 0.0, %v4244
    %v4246 = vpop.f32.mrf.mxu0
    %v4247 = vpop.f32.mrf.mxu0
    %v4248 = vadd.f32 0.0, %v4247
    %v4249 = vpop.f32.mrf.mxu0
    %4250 = vmatprep.mubr.bf16.mxu0 %v3859
    %4251 = vmatmul.mubr.bf16.gmra.mxu0 %v3858
    %v4252 = vpop.f32.mrf.mxu0
    %v4253 = vadd.f32 0.0, %v4252
    %v4254 = vpop.f32.mrf.mxu0
    %v4255 = vpop.f32.mrf.mxu0
    %v4256 = vadd.f32 0.0, %v4255
    %v4257 = vpop.f32.mrf.mxu0
    %4258 = vmatprep.mubr.bf16.mxu0 %v3861
    %4259 = vmatmul.mubr.bf16.gmra.mxu0 %v3860
    %v4260 = vpop.f32.mrf.mxu0
    %v4261 = vadd.f32 0.0, %v4260
    %v4262 = vpop.f32.mrf.mxu0
    %v4263 = vpop.f32.mrf.mxu0
    %v4264 = vadd.f32 0.0, %v4263
    %v4265 = vpop.f32.mrf.mxu0
    %4266 = vmatprep.mubr.bf16.mxu0 %v3863
    %4267 = vmatmul.mubr.bf16.gmra.mxu0 %v3862
    %v4268 = vpop.f32.mrf.mxu0
    %v4269 = vadd.f32 0.0, %v4268
    %v4270 = vpop.f32.mrf.mxu0
    %v4271 = vpop.f32.mrf.mxu0
    %v4272 = vadd.f32 0.0, %v4271
    %v4273 = vpop.f32.mrf.mxu0
    %4274 = vmatprep.mubr.bf16.mxu0 %v3865
    %4275 = vmatmul.mubr.bf16.gmra.mxu0 %v3864
    %v4276 = vpop.f32.mrf.mxu0
    %v4277 = vadd.f32 0.0, %v4276
    %v4278 = vpop.f32.mrf.mxu0
    %v4279 = vpop.f32.mrf.mxu0
    %v4280 = vadd.f32 0.0, %v4279
    %v4281 = vpop.f32.mrf.mxu0
    %4282 = vdwg.mxu0
    %v4283 = vld [vmem:[#allocation26] sm:$0x1]
    %v4285 = vlaneseq
    %v4286 = vshrl.u32 %v4285, 7
    %v4287 = vsub.s32 0, %v4286
    %v4288 = vrot.slane %v4283, %v4287
    %v4290 = vmul.f32 %v4029, %v4288
    %v4291 = vmul.f32 %v4032, %v4288
    %v4292 = vmul.f32 %v4037, %v4288
    %v4293 = vmul.f32 %v4040, %v4288
    %v4294 = vmul.f32 %v4045, %v4288
    %v4295 = vmul.f32 %v4048, %v4288
    %v4296 = vmul.f32 %v4053, %v4288
    %v4297 = vmul.f32 %v4056, %v4288
    %v4298 = vmul.f32 %v4061, %v4288
    %v4299 = vmul.f32 %v4064, %v4288
    %v4300 = vmul.f32 %v4069, %v4288
    %v4301 = vmul.f32 %v4072, %v4288
    %v4302 = vmul.f32 %v4077, %v4288
    %v4303 = vmul.f32 %v4080, %v4288
    %v4304 = vmul.f32 %v4085, %v4288
    %v4305 = vmul.f32 %v4088, %v4288
    %v4306 = vmul.f32 %v4093, %v4288
    %v4307 = vmul.f32 %v4096, %v4288
    %v4308 = vmul.f32 %v4101, %v4288
    %v4309 = vmul.f32 %v4104, %v4288
    %v4310 = vmul.f32 %v4109, %v4288
    %v4311 = vmul.f32 %v4112, %v4288
    %v4312 = vmul.f32 %v4117, %v4288
    %v4313 = vmul.f32 %v4120, %v4288
    %v4314 = vmul.f32 %v4125, %v4288
    %v4315 = vmul.f32 %v4128, %v4288
    %v4316 = vmul.f32 %v4133, %v4288
    %v4317 = vmul.f32 %v4136, %v4288
    %v4318 = vmul.f32 %v4141, %v4288
    %v4319 = vmul.f32 %v4144, %v4288
    %v4320 = vmul.f32 %v4149, %v4288
    %v4321 = vmul.f32 %v4152, %v4288
    %v4322 = vmul.f32 %v4157, %v4288
    %v4323 = vmul.f32 %v4160, %v4288
    %v4324 = vmul.f32 %v4165, %v4288
    %v4325 = vmul.f32 %v4168, %v4288
    %v4326 = vmul.f32 %v4173, %v4288
    %v4327 = vmul.f32 %v4176, %v4288
    %v4328 = vmul.f32 %v4181, %v4288
    %v4329 = vmul.f32 %v4184, %v4288
    %v4330 = vmul.f32 %v4189, %v4288
    %v4331 = vmul.f32 %v4192, %v4288
    %v4332 = vmul.f32 %v4197, %v4288
    %v4333 = vmul.f32 %v4200, %v4288
    %v4334 = vmul.f32 %v4205, %v4288
    %v4335 = vmul.f32 %v4208, %v4288
    %v4336 = vmul.f32 %v4213, %v4288
    %v4337 = vmul.f32 %v4216, %v4288
    %v4338 = vmul.f32 %v4221, %v4288
    %v4339 = vmul.f32 %v4224, %v4288
    %v4340 = vmul.f32 %v4229, %v4288
    %v4341 = vmul.f32 %v4232, %v4288
    %v4342 = vmul.f32 %v4237, %v4288
    %v4343 = vmul.f32 %v4240, %v4288
    %v4344 = vmul.f32 %v4245, %v4288
    %v4345 = vmul.f32 %v4248, %v4288
    %v4346 = vmul.f32 %v4253, %v4288
    %v4347 = vmul.f32 %v4256, %v4288
    %v4348 = vmul.f32 %v4261, %v4288
    %v4349 = vmul.f32 %v4264, %v4288
    %v4350 = vmul.f32 %v4269, %v4288
    %v4351 = vmul.f32 %v4272, %v4288
    %v4352 = vmul.f32 %v4277, %v4288
    %v4353 = vmul.f32 %v4280, %v4288
    %v4354 = vld [vmem:[#allocation28] sm:$0x1]
    %v4356 = vlaneseq
    %v4357 = vshrl.u32 %v4356, 7
    %v4358 = vsub.s32 0, %v4357
    %v4359 = vrot.slane %v4354, %v4358
    %v4361 = vadd.f32 %v4290, %v4359
    %v4362 = vadd.f32 %v4291, %v4359
    %v4363 = vadd.f32 %v4292, %v4359
    %v4364 = vadd.f32 %v4293, %v4359
    %v4365 = vadd.f32 %v4294, %v4359
    %v4366 = vadd.f32 %v4295, %v4359
    %v4367 = vadd.f32 %v4296, %v4359
    %v4368 = vadd.f32 %v4297, %v4359
    %v4369 = vadd.f32 %v4298, %v4359
    %v4370 = vadd.f32 %v4299, %v4359
    %v4371 = vadd.f32 %v4300, %v4359
    %v4372 = vadd.f32 %v4301, %v4359
    %v4373 = vadd.f32 %v4302, %v4359
    %v4374 = vadd.f32 %v4303, %v4359
    %v4375 = vadd.f32 %v4304, %v4359
    %v4376 = vadd.f32 %v4305, %v4359
    %v4377 = vadd.f32 %v4306, %v4359
    %v4378 = vadd.f32 %v4307, %v4359
    %v4379 = vadd.f32 %v4308, %v4359
    %v4380 = vadd.f32 %v4309, %v4359
    %v4381 = vadd.f32 %v4310, %v4359
    %v4382 = vadd.f32 %v4311, %v4359
    %v4383 = vadd.f32 %v4312, %v4359
    %v4384 = vadd.f32 %v4313, %v4359
    %v4385 = vadd.f32 %v4314, %v4359
    %v4386 = vadd.f32 %v4315, %v4359
    %v4387 = vadd.f32 %v4316, %v4359
    %v4388 = vadd.f32 %v4317, %v4359
    %v4389 = vadd.f32 %v4318, %v4359
    %v4390 = vadd.f32 %v4319, %v4359
    %v4391 = vadd.f32 %v4320, %v4359
    %v4392 = vadd.f32 %v4321, %v4359
    %v4393 = vadd.f32 %v4322, %v4359
    %v4394 = vadd.f32 %v4323, %v4359
    %v4395 = vadd.f32 %v4324, %v4359
    %v4396 = vadd.f32 %v4325, %v4359
    %v4397 = vadd.f32 %v4326, %v4359
    %v4398 = vadd.f32 %v4327, %v4359
    %v4399 = vadd.f32 %v4328, %v4359
    %v4400 = vadd.f32 %v4329, %v4359
    %v4401 = vadd.f32 %v4330, %v4359
    %v4402 = vadd.f32 %v4331, %v4359
    %v4403 = vadd.f32 %v4332, %v4359
    %v4404 = vadd.f32 %v4333, %v4359
    %v4405 = vadd.f32 %v4334, %v4359
    %v4406 = vadd.f32 %v4335, %v4359
    %v4407 = vadd.f32 %v4336, %v4359
    %v4408 = vadd.f32 %v4337, %v4359
    %v4409 = vadd.f32 %v4338, %v4359
    %v4410 = vadd.f32 %v4339, %v4359
    %v4411 = vadd.f32 %v4340, %v4359
    %v4412 = vadd.f32 %v4341, %v4359
    %v4413 = vadd.f32 %v4342, %v4359
    %v4414 = vadd.f32 %v4343, %v4359
    %v4415 = vadd.f32 %v4344, %v4359
    %v4416 = vadd.f32 %v4345, %v4359
    %v4417 = vadd.f32 %v4346, %v4359
    %v4418 = vadd.f32 %v4347, %v4359
    %v4419 = vadd.f32 %v4348, %v4359
    %v4420 = vadd.f32 %v4349, %v4359
    %v4421 = vadd.f32 %v4350, %v4359
    %v4422 = vadd.f32 %v4351, %v4359
    %v4423 = vadd.f32 %v4352, %v4359
    %v4424 = vadd.f32 %v4353, %v4359
    %v4425 = vmax.f32 %v4361, 0.0
    %v4426 = vmax.f32 %v4362, 0.0
    %v4427 = vmax.f32 %v4363, 0.0
    %v4428 = vmax.f32 %v4364, 0.0
    %v4429 = vmax.f32 %v4365, 0.0
    %v4430 = vmax.f32 %v4366, 0.0
    %v4431 = vmax.f32 %v4367, 0.0
    %v4432 = vmax.f32 %v4368, 0.0
    %v4433 = vmax.f32 %v4369, 0.0
    %v4434 = vmax.f32 %v4370, 0.0
    %v4435 = vmax.f32 %v4371, 0.0
    %v4436 = vmax.f32 %v4372, 0.0
    %v4437 = vmax.f32 %v4373, 0.0
    %v4438 = vmax.f32 %v4374, 0.0
    %v4439 = vmax.f32 %v4375, 0.0
    %v4440 = vmax.f32 %v4376, 0.0
    %v4441 = vmax.f32 %v4377, 0.0
    %v4442 = vmax.f32 %v4378, 0.0
    %v4443 = vmax.f32 %v4379, 0.0
    %v4444 = vmax.f32 %v4380, 0.0
    %v4445 = vmax.f32 %v4381, 0.0
    %v4446 = vmax.f32 %v4382, 0.0
    %v4447 = vmax.f32 %v4383, 0.0
    %v4448 = vmax.f32 %v4384, 0.0
    %v4449 = vmax.f32 %v4385, 0.0
    %v4450 = vmax.f32 %v4386, 0.0
    %v4451 = vmax.f32 %v4387, 0.0
    %v4452 = vmax.f32 %v4388, 0.0
    %v4453 = vmax.f32 %v4389, 0.0
    %v4454 = vmax.f32 %v4390, 0.0
    %v4455 = vmax.f32 %v4391, 0.0
    %v4456 = vmax.f32 %v4392, 0.0
    %v4457 = vmax.f32 %v4393, 0.0
    %v4458 = vmax.f32 %v4394, 0.0
    %v4459 = vmax.f32 %v4395, 0.0
    %v4460 = vmax.f32 %v4396, 0.0
    %v4461 = vmax.f32 %v4397, 0.0
    %v4462 = vmax.f32 %v4398, 0.0
    %v4463 = vmax.f32 %v4399, 0.0
    %v4464 = vmax.f32 %v4400, 0.0
    %v4465 = vmax.f32 %v4401, 0.0
    %v4466 = vmax.f32 %v4402, 0.0
    %v4467 = vmax.f32 %v4403, 0.0
    %v4468 = vmax.f32 %v4404, 0.0
    %v4469 = vmax.f32 %v4405, 0.0
    %v4470 = vmax.f32 %v4406, 0.0
    %v4471 = vmax.f32 %v4407, 0.0
    %v4472 = vmax.f32 %v4408, 0.0
    %v4473 = vmax.f32 %v4409, 0.0
    %v4474 = vmax.f32 %v4410, 0.0
    %v4475 = vmax.f32 %v4411, 0.0
    %v4476 = vmax.f32 %v4412, 0.0
    %v4477 = vmax.f32 %v4413, 0.0
    %v4478 = vmax.f32 %v4414, 0.0
    %v4479 = vmax.f32 %v4415, 0.0
    %v4480 = vmax.f32 %v4416, 0.0
    %v4481 = vmax.f32 %v4417, 0.0
    %v4482 = vmax.f32 %v4418, 0.0
    %v4483 = vmax.f32 %v4419, 0.0
    %v4484 = vmax.f32 %v4420, 0.0
    %v4485 = vmax.f32 %v4421, 0.0
    %v4486 = vmax.f32 %v4422, 0.0
    %v4487 = vmax.f32 %v4423, 0.0
    %v4488 = vmax.f32 %v4424, 0.0
    %v4489 = vmax.f32 %v4425, %v4441
    %v4490 = vmax.f32 %v4426, %v4442
    %v4491 = vmax.f32 %v4427, %v4443
    %v4492 = vmax.f32 %v4428, %v4444
    %v4493 = vmax.f32 %v4429, %v4445
    %v4494 = vmax.f32 %v4430, %v4446
    %v4495 = vmax.f32 %v4431, %v4447
    %v4496 = vmax.f32 %v4432, %v4448
    %v4497 = vmax.f32 %v4433, %v4449
    %v4498 = vmax.f32 %v4434, %v4450
    %v4499 = vmax.f32 %v4435, %v4451
    %v4500 = vmax.f32 %v4436, %v4452
    %v4501 = vmax.f32 %v4437, %v4453
    %v4502 = vmax.f32 %v4438, %v4454
    %v4503 = vmax.f32 %v4439, %v4455
    %v4504 = vmax.f32 %v4440, %v4456
    %v4505 = vmax.f32 %v4457, %v4473
    %v4506 = vmax.f32 %v4458, %v4474
    %v4507 = vmax.f32 %v4459, %v4475
    %v4508 = vmax.f32 %v4460, %v4476
    %v4509 = vmax.f32 %v4461, %v4477
    %v4510 = vmax.f32 %v4462, %v4478
    %v4511 = vmax.f32 %v4463, %v4479
    %v4512 = vmax.f32 %v4464, %v4480
    %v4513 = vmax.f32 %v4465, %v4481
    %v4514 = vmax.f32 %v4466, %v4482
    %v4515 = vmax.f32 %v4467, %v4483
    %v4516 = vmax.f32 %v4468, %v4484
    %v4517 = vmax.f32 %v4469, %v4485
    %v4518 = vmax.f32 %v4470, %v4486
    %v4519 = vmax.f32 %v4471, %v4487
    %v4520 = vmax.f32 %v4472, %v4488
    %v4521 = vmax.f32 %v4489, %v4505
    %v4522 = vmax.f32 %v4490, %v4506
    %v4523 = vmax.f32 %v4491, %v4507
    %v4524 = vmax.f32 %v4492, %v4508
    %v4525 = vmax.f32 %v4493, %v4509
    %v4526 = vmax.f32 %v4494, %v4510
    %v4527 = vmax.f32 %v4495, %v4511
    %v4528 = vmax.f32 %v4496, %v4512
    %v4529 = vmax.f32 %v4497, %v4513
    %v4530 = vmax.f32 %v4498, %v4514
    %v4531 = vmax.f32 %v4499, %v4515
    %v4532 = vmax.f32 %v4500, %v4516
    %v4533 = vmax.f32 %v4501, %v4517
    %v4534 = vmax.f32 %v4502, %v4518
    %v4535 = vmax.f32 %v4503, %v4519
    %v4536 = vmax.f32 %v4504, %v4520
    %4553 = vrot.lane.b32.xlu0 %v4521, 96
    %v4554 = vpop.permute.xlu0 %4553
    %4555 = vrot.lane.b32.xlu0 %v4522, 96
    %v4556 = vpop.permute.xlu0 %4555
    %4557 = vrot.lane.b32.xlu0 %v4523, 96
    %v4558 = vpop.permute.xlu0 %4557
    %4559 = vrot.lane.b32.xlu0 %v4524, 96
    %v4560 = vpop.permute.xlu0 %4559
    %4561 = vrot.lane.b32.xlu0 %v4525, 96
    %v4562 = vpop.permute.xlu0 %4561
    %4563 = vrot.lane.b32.xlu0 %v4526, 96
    %v4564 = vpop.permute.xlu0 %4563
    %4565 = vrot.lane.b32.xlu0 %v4527, 96
    %v4566 = vpop.permute.xlu0 %4565
    %4567 = vrot.lane.b32.xlu0 %v4528, 96
    %v4568 = vpop.permute.xlu0 %4567
    %4569 = vrot.lane.b32.xlu0 %v4529, 96
    %v4570 = vpop.permute.xlu0 %4569
    %4571 = vrot.lane.b32.xlu0 %v4530, 96
    %v4572 = vpop.permute.xlu0 %4571
    %4573 = vrot.lane.b32.xlu0 %v4531, 96
    %v4574 = vpop.permute.xlu0 %4573
    %4575 = vrot.lane.b32.xlu0 %v4532, 96
    %v4576 = vpop.permute.xlu0 %4575
    %4577 = vrot.lane.b32.xlu0 %v4533, 96
    %v4578 = vpop.permute.xlu0 %4577
    %4579 = vrot.lane.b32.xlu0 %v4534, 96
    %v4580 = vpop.permute.xlu0 %4579
    %4581 = vrot.lane.b32.xlu0 %v4535, 96
    %v4582 = vpop.permute.xlu0 %4581
    %4583 = vrot.lane.b32.xlu0 %v4536, 96
    %v4584 = vpop.permute.xlu0 %4583
    %v4601 = vmax.f32 %v4521, %v4554
    %v4602 = vmax.f32 %v4522, %v4556
    %v4603 = vmax.f32 %v4523, %v4558
    %v4604 = vmax.f32 %v4524, %v4560
    %v4605 = vmax.f32 %v4525, %v4562
    %v4606 = vmax.f32 %v4526, %v4564
    %v4607 = vmax.f32 %v4527, %v4566
    %v4608 = vmax.f32 %v4528, %v4568
    %v4609 = vmax.f32 %v4529, %v4570
    %v4610 = vmax.f32 %v4530, %v4572
    %v4611 = vmax.f32 %v4531, %v4574
    %v4612 = vmax.f32 %v4532, %v4576
    %v4613 = vmax.f32 %v4533, %v4578
    %v4614 = vmax.f32 %v4534, %v4580
    %v4615 = vmax.f32 %v4535, %v4582
    %v4616 = vmax.f32 %v4536, %v4584
    %4633 = vrot.lane.b32.xlu0 %v4601, 64
    %v4634 = vpop.permute.xlu0 %4633
    %4635 = vrot.lane.b32.xlu0 %v4602, 64
    %v4636 = vpop.permute.xlu0 %4635
    %4637 = vrot.lane.b32.xlu0 %v4603, 64
    %v4638 = vpop.permute.xlu0 %4637
    %4639 = vrot.lane.b32.xlu0 %v4604, 64
    %v4640 = vpop.permute.xlu0 %4639
    %4641 = vrot.lane.b32.xlu0 %v4605, 64
    %v4642 = vpop.permute.xlu0 %4641
    %4643 = vrot.lane.b32.xlu0 %v4606, 64
    %v4644 = vpop.permute.xlu0 %4643
    %4645 = vrot.lane.b32.xlu0 %v4607, 64
    %v4646 = vpop.permute.xlu0 %4645
    %4647 = vrot.lane.b32.xlu0 %v4608, 64
    %v4648 = vpop.permute.xlu0 %4647
    %4649 = vrot.lane.b32.xlu0 %v4609, 64
    %v4650 = vpop.permute.xlu0 %4649
    %4651 = vrot.lane.b32.xlu0 %v4610, 64
    %v4652 = vpop.permute.xlu0 %4651
    %4653 = vrot.lane.b32.xlu0 %v4611, 64
    %v4654 = vpop.permute.xlu0 %4653
    %4655 = vrot.lane.b32.xlu0 %v4612, 64
    %v4656 = vpop.permute.xlu0 %4655
    %4657 = vrot.lane.b32.xlu0 %v4613, 64
    %v4658 = vpop.permute.xlu0 %4657
    %4659 = vrot.lane.b32.xlu0 %v4614, 64
    %v4660 = vpop.permute.xlu0 %4659
    %4661 = vrot.lane.b32.xlu0 %v4615, 64
    %v4662 = vpop.permute.xlu0 %4661
    %4663 = vrot.lane.b32.xlu0 %v4616, 64
    %v4664 = vpop.permute.xlu0 %4663
    %v4681 = vmax.f32 %v4601, %v4634
    %v4682 = vmax.f32 %v4602, %v4636
    %v4683 = vmax.f32 %v4603, %v4638
    %v4684 = vmax.f32 %v4604, %v4640
    %v4685 = vmax.f32 %v4605, %v4642
    %v4686 = vmax.f32 %v4606, %v4644
    %v4687 = vmax.f32 %v4607, %v4646
    %v4688 = vmax.f32 %v4608, %v4648
    %v4689 = vmax.f32 %v4609, %v4650
    %v4690 = vmax.f32 %v4610, %v4652
    %v4691 = vmax.f32 %v4611, %v4654
    %v4692 = vmax.f32 %v4612, %v4656
    %v4693 = vmax.f32 %v4613, %v4658
    %v4694 = vmax.f32 %v4614, %v4660
    %v4695 = vmax.f32 %v4615, %v4662
    %v4696 = vmax.f32 %v4616, %v4664
    %v4697 = vld [vmem:[#allocation29] sm:$0x1]
    %v4698 = vld [vmem:[#allocation2] sm:$0x1]
    %4700 = vset.pattern.permute.xlu0 0
    %4701 = vperm.xlu0 %4700, %v4698
    %v4702 = vpop.permute.xlu0 %4701
    %v4704 = vlaneseq
    %v4705 = vshrl.u32 %v4704, 7
    %v4706 = vsub.s32 0, %v4705
    %v4707 = vrot.slane %v4702, %v4706
    %v4709 = vsel %vm761, %v4697, 0
    %v4712 = vsel %vm761, %v4681, 0
    %v4715 = vsel %vm761, %v4682, 0
    %v4718 = vsel %vm761, %v4683, 0
    %v4721 = vsel %vm761, %v4684, 0
    %v4724 = vsel %vm761, %v4685, 0
    %v4727 = vsel %vm761, %v4686, 0
    %v4730 = vsel %vm761, %v4687, 0
    %v4733 = vsel %vm761, %v4688, 0
    %v4736 = vsel %vm761, %v4689, 0
    %v4739 = vsel %vm761, %v4690, 0
    %v4742 = vsel %vm761, %v4691, 0
    %v4745 = vsel %vm761, %v4692, 0
    %v4748 = vsel %vm761, %v4693, 0
    %v4751 = vsel %vm761, %v4694, 0
    %v4754 = vsel %vm761, %v4695, 0
    %v4757 = vsel %vm761, %v4696, 0
    %4759 = vmatprep.subr.mxu0 0.0
    %4760 = vmatpush1.xpose.msra.mxu0 %v4757
    %4761 = vmatprep.subr.mxu0 0.0
    %4762 = vmatpush1.xpose.msra.mxu0 %v4754
    %4763 = vmatprep.subr.mxu0 0.0
    %4764 = vmatpush1.xpose.msra.mxu0 %v4751
    %4765 = vmatprep.subr.mxu0 0.0
    %4766 = vmatpush1.xpose.msra.mxu0 %v4748
    %4767 = vmatprep.subr.mxu0 0.0
    %4768 = vmatpush1.xpose.msra.mxu0 %v4745
    %4769 = vmatprep.subr.mxu0 0.0
    %4770 = vmatpush1.xpose.msra.mxu0 %v4742
    %4771 = vmatprep.subr.mxu0 0.0
    %4772 = vmatpush1.xpose.msra.mxu0 %v4739
    %4773 = vmatprep.subr.mxu0 0.0
    %4774 = vmatpush1.xpose.msra.mxu0 %v4736
    %4775 = vmatprep.subr.mxu0 0.0
    %4776 = vmatpush1.xpose.msra.mxu0 %v4733
    %4777 = vmatprep.subr.mxu0 0.0
    %4778 = vmatpush1.xpose.msra.mxu0 %v4730
    %4779 = vmatprep.subr.mxu0 0.0
    %4780 = vmatpush1.xpose.msra.mxu0 %v4727
    %4781 = vmatprep.subr.mxu0 0.0
    %4782 = vmatpush1.xpose.msra.mxu0 %v4724
    %4783 = vmatprep.subr.mxu0 0.0
    %4784 = vmatpush1.xpose.msra.mxu0 %v4721
    %4785 = vmatprep.subr.mxu0 0.0
    %4786 = vmatpush1.xpose.msra.mxu0 %v4718
    %4787 = vmatprep.subr.mxu0 0.0
    %4788 = vmatpush1.xpose.msra.mxu0 %v4715
    %4789 = vmatprep.subr.mxu0 0.0
    %4790 = vmatpush1.xpose.msra.mxu0 %v4712
    %4791 = vmatprep.subr.mxu0 0.0
    %4792 = vmatpush2.xpose.msra.mxu0 0.0
    %4793 = vmatprep.subr.mxu0 0.0
    %4794 = vmatpush2.xpose.msra.mxu0 0.0
    %4795 = vmatprep.subr.mxu0 0.0
    %4796 = vmatpush2.xpose.msra.mxu0 0.0
    %4797 = vmatprep.subr.mxu0 0.0
    %4798 = vmatpush2.xpose.msra.mxu0 0.0
    %4799 = vmatprep.subr.mxu0 0.0
    %4800 = vmatpush2.xpose.msra.mxu0 0.0
    %4801 = vmatprep.subr.mxu0 0.0
    %4802 = vmatpush2.xpose.msra.mxu0 0.0
    %4803 = vmatprep.subr.mxu0 0.0
    %4804 = vmatpush2.xpose.msra.mxu0 0.0
    %4805 = vmatprep.subr.mxu0 0.0
    %4806 = vmatpush2.xpose.msra.mxu0 0.0
    %4807 = vmatprep.subr.mxu0 0.0
    %4808 = vmatpush2.xpose.msra.mxu0 0.0
    %4809 = vmatprep.subr.mxu0 0.0
    %4810 = vmatpush2.xpose.msra.mxu0 0.0
    %4811 = vmatprep.subr.mxu0 0.0
    %4812 = vmatpush2.xpose.msra.mxu0 0.0
    %4813 = vmatprep.subr.mxu0 0.0
    %4814 = vmatpush2.xpose.msra.mxu0 0.0
    %4815 = vmatprep.subr.mxu0 0.0
    %4816 = vmatpush2.xpose.msra.mxu0 0.0
    %4817 = vmatprep.subr.mxu0 0.0
    %4818 = vmatpush2.xpose.msra.mxu0 0.0
    %4819 = vmatprep.subr.mxu0 0.0
    %4820 = vmatpush2.xpose.msra.mxu0 0.0
    %4821 = vmatprep.subr.mxu0 0.0
    %4822 = vmatpush2.xpose.msra.mxu0 0.0
    %4823 = vmatprep.mubr.f32.mxu0 0.0
    %4824 = vmatmul.mubr.f32.gmra.mxu0 %v4709
    %v4825 = vpop.f32.mrf.mxu0
    %v4826 = vadd.f32 %v4707, %v4825
    %v4827 = vpop.f32.mrf.mxu0
    %4828 = vdwg.mxu0
    %v4829 = vxor.u32 %v4826, 2147483648
    %v4830 = vmul.f32 %v4829, 1.442695
    %v4831 = vpow.pop %v4830
    %v4832 = vadd.f32 %v4831, 1.0
    %v4833 = vrcp.pop %v4832
    %v4834 = vmul.f32 1.0, %v4833
    %4835 = vst [vmem:[%s27] sm:$0x1] %v4834
    // Predicated region
    $region182: #{teim_forward.1} parent=1 // pred_check
      _
    $region183: #{teim_forward.1} parent=1 // pred_check_branch
      %4837 = sbr.rel (0) target = $region185
    $region184: #{teim_forward.1} parent=1 // pred_region
      _
    $region185: #{teim_forward.1} parent=1 // pred_fallthru
      _
    // Predicated region
    $region186: #{teim_forward.1} parent=1 // pred_check
      _
    $region187: #{teim_forward.1} parent=1 // pred_check_branch
      %4839 = sbr.rel (0) target = $region189
    $region188: #{teim_forward.1} parent=1 // pred_region
      _
    $region189: #{teim_forward.1} parent=1 // pred_fallthru
      _
    %4840 = vsyncpa [#allocation4], 1
    %4841 = vsyncpa [#allocation6], 1
    %4842 = vsyncpa [#allocation9], 1
    %4843 = vsyncpa [#allocation12], 1
    %4844 = vsyncpa [#allocation15], 1
    %4845 = vsyncpa [#allocation18], 1
    %4846 = vsyncpa [#allocation21], 1
    %4847 = vsyncpa [#allocation24], 1
    %4848 = vsyncpa [#allocation27], 1
    %4849 = vsyncpa [#allocation30], 1

</llo_original>
